<compile_context>
chip_gen: v5e
topology: v5e:2x2
jax: 0.10.0
libtpu: 0.0.40
codegen_flags: <defaults>
</compile_context>

<pallas_src>
import math
import functools

import jax
import jax.numpy as jnp
from jax.experimental import pallas as pl
from jax.experimental.pallas import tpu as pltpu

HID = 768                # lxrt_encoder.dim (BERT hidden size)
NUM_ANSWERS = 128        # num_answers (lane-aligned)
NUM_QTYPES = 5           # cls_fc output width (hard-coded Linear(768, 5))
CLS_PAD = 128            # lane-dense padded width for the cls head
MAX_VQA_LENGTH = 20


def _round_up(n, m):
    return -(-n // m) * m


# ----------------------------------------------------------------------------
# Pallas kernel: fused VQA head (one batch tile per grid step)
# ----------------------------------------------------------------------------
def vqa_head_kernel(x_ref, cls_ref,
                    w1_ref, b1_ref,
                    w2_ref, b2_ref,
                    w3_ref, b3_ref,
                    logit_ref, cls_logit_ref):
    x = x_ref[...].astype(jnp.float32)          # (TB, H)  lxrt encoder output tile
    c = cls_ref[...].astype(jnp.float32)        # (TB, H)  lstm-cnn classifier tile

    # z = x * cls_out
    z = x * c

    # logit_fc[0]: Linear(H, 2H)  -- bf16 weights, f32 accumulation on the MXU
    h = jnp.dot(z.astype(jnp.bfloat16), w1_ref[...],
                preferred_element_type=jnp.float32) + b1_ref[...]

    # logit_fc[1]: GeLU (BERT exact erf form)
    inv_sqrt2 = jnp.float32(1.0 / math.sqrt(2.0))
    h = h * 0.5 * (1.0 + jax.lax.erf(h * inv_sqrt2))

    # logit_fc[2]: BertLayerNorm(2H, eps=1e-12).
    # gamma/beta are folded into w2/b2 offline, so only normalize here.
    mu = jnp.mean(h, axis=-1, keepdims=True)
    var = jnp.mean(jnp.square(h - mu), axis=-1, keepdims=True)
    hn = (h - mu) * jax.lax.rsqrt(var + jnp.float32(1e-12))

    # logit_fc[3]: Linear(2H, num_answers) with folded LN affine
    logit_ref[...] = (jnp.dot(hn.astype(jnp.bfloat16), w2_ref[...],
                              preferred_element_type=jnp.float32)
                      + b2_ref[...])

    # cls_fc: ReLU -> Linear(768, 5) (lane-padded to 128; sliced in wrapper)
    cr = jnp.maximum(c, 0.0)
    cls_logit_ref[...] = (jnp.dot(cr, w3_ref[...],
                                  preferred_element_type=jnp.float32)
                          + b3_ref[...])


def vqa_head(x, cls_out, hp):
    """Fused head.  x, cls_out: (B, HID) f32.  hp: prepared params (see below)."""
    B = x.shape[0]

    # MXU-matched batch tile: 256 for large batches (v6e/v7x 2x256 MXU),
    # 128 mid-size, sublane-rounded for tiny batches.
    if B >= 256:
        tb = 256
    elif B >= 128:
        tb = 128
    else:
        tb = max(8, _round_up(B, 8))
    Bp = _round_up(B, tb)

    if Bp != B:
        pad = ((0, Bp - B), (0, 0))
        x = jnp.pad(x, pad)
        cls_out = jnp.pad(cls_out, pad)

    grid = (Bp // tb,)

    act_spec = lambda cols: pl.BlockSpec((tb, cols), lambda i: (i, 0))
    res_spec = lambda shape: pl.BlockSpec(shape, lambda i: (0, 0))   # resident

    in_arrays = (x, cls_out,
                 hp["w1"], hp["b1"], hp["w2"], hp["b2"], hp["w3"], hp["b3"])
    in_specs = [
        act_spec(HID), act_spec(HID),
        res_spec(hp["w1"].shape), res_spec(hp["b1"].shape),
        res_spec(hp["w2"].shape), res_spec(hp["b2"].shape),
        res_spec(hp["w3"].shape), res_spec(hp["b3"].shape),
    ]
    out_specs = (act_spec(NUM_ANSWERS), act_spec(CLS_PAD))
    out_shape = (jax.ShapeDtypeStruct((Bp, NUM_ANSWERS), jnp.float32),
                 jax.ShapeDtypeStruct((Bp, CLS_PAD), jnp.float32))

    logit, cls_logits = pl.pallas_call(
        vqa_head_kernel,
        out_shape=out_shape,
        grid=grid,
        in_specs=in_specs,
        out_specs=out_specs,
        compiler_params=pltpu.CompilerParams(
            dimension_semantics=("parallel",),
            # Well below v7x's 64 MiB physical VMEM; fits resident bf16 weights
            # (~2.6 MiB) + double-buffered TB<=256 activation tiles + temps.
            vmem_limit_bytes=32 << 20,
        ),
    )(*in_arrays)

    return logit[:B], cls_logits[:B, :NUM_QTYPES]


# ----------------------------------------------------------------------------
# Offline parameter prep for the fused head:
#   * fold LayerNorm gamma/beta into w2/b2 (exact),
#   * cast the two big matrices to bf16,
#   * zero-pad the 5-wide cls head to 128 lanes.
# ----------------------------------------------------------------------------
def prepare_head_params(p):
    g = p["ln_g"][0]                              # (2H,)
    beta = p["ln_b"][0]                           # (2H,)
    w2_f = p["w2"] * g[:, None]                   # fold gamma
    b2_f = p["b2"] + beta[None, :] @ p["w2"]      # fold beta

    w3_p = jnp.zeros((HID, CLS_PAD), jnp.float32).at[:, :NUM_QTYPES].set(p["w3"])
    b3_p = jnp.zeros((1, CLS_PAD), jnp.float32).at[:, :NUM_QTYPES].set(p["b3"])

    return {
        "w1": p["w1"].astype(jnp.bfloat16),
        "b1": p["b1"].astype(jnp.float32),
        "w2": w2_f.astype(jnp.bfloat16),
        "b2": b2_f.astype(jnp.float32),
        "w3": w3_p,
        "b3": b3_p,
    }


# ----------------------------------------------------------------------------
# Stand-in submodules (their source is not part of this module).
# ----------------------------------------------------------------------------
# TODO(synk): LXRTEncoder is an external cross-modal BERT; stand-in produces a
# deterministic (B, 768) feature from (feat, pos, sent-token-ids) in plain JAX.
def lxrt_encoder_standin(sent_ids, feat, pos, enc_params):
    emb = enc_params["tok_emb"][sent_ids]                    # (B, L, H)
    sent_vec = jnp.mean(emb, axis=1)                         # (B, H)
    vis = jnp.concatenate([feat, pos], axis=-1)              # (B, O, F+4)
    vis_vec = jnp.mean(vis, axis=1) @ enc_params["w_vis"]    # (B, H)
    return jnp.tanh(sent_vec + vis_vec)


# TODO(synk): LSTMCNNModel (config, 3892) is external; stand-in produces a
# deterministic (B, 768) feature from (visual NCHW, question ids, q_length).
def lstmcnn_standin(v, q, q_length, cls_params):
    B = v.shape[0]
    v_vec = jnp.mean(v.reshape(B, -1), axis=-1, keepdims=True)          # (B, 1)
    q_emb = cls_params["q_emb"][q]                                      # (B, Lq, H)
    mask = (jnp.arange(q.shape[1])[None, :] < q_length[:, None]).astype(jnp.float32)
    q_vec = jnp.sum(q_emb * mask[..., None], axis=1) / jnp.maximum(
        q_length[:, None].astype(jnp.float32), 1.0)                     # (B, H)
    return jnp.tanh(q_vec + v_vec * cls_params["w_v"])                  # (B, H)


# ----------------------------------------------------------------------------
# Parameter init (deterministic, init_bert_weights style: N(0, 0.02))
# ----------------------------------------------------------------------------
def init_params(key):
    ks = jax.random.split(key, 8)
    s = 0.02
    params = {
        "w1": (jax.random.normal(ks[0], (HID, 2 * HID)) * s).astype(jnp.float32),
        "b1": jnp.zeros((1, 2 * HID), jnp.float32),
        "ln_g": jnp.ones((1, 2 * HID), jnp.float32),
        "ln_b": jnp.zeros((1, 2 * HID), jnp.float32),
        "w2": (jax.random.normal(ks[1], (2 * HID, NUM_ANSWERS)) * s).astype(jnp.float32),
        "b2": jnp.zeros((1, NUM_ANSWERS), jnp.float32),
        "w3": (jax.random.normal(ks[2], (HID, NUM_QTYPES)) * s).astype(jnp.float32),
        "b3": jnp.zeros((1, NUM_QTYPES), jnp.float32),
    }
    enc_params = {
        "tok_emb": (jax.random.normal(ks[3], (100, HID)) * s).astype(jnp.float32),
        "w_vis": (jax.random.normal(ks[4], (2048 + 4, HID)) * s).astype(jnp.float32),
    }
    cls_params = {
        "q_emb": (jax.random.normal(ks[5], (100, HID)) * s).astype(jnp.float32),
        "w_v": (jax.random.normal(ks[6], (1, HID)) * s).astype(jnp.float32),
    }
    return params, enc_params, cls_params


# ----------------------------------------------------------------------------
# Full forward (mirrors LSTMCNNCrossVQAModel.forward)
# ----------------------------------------------------------------------------
@jax.jit
def forward(item, feat, pos, sent_ids, head_params, enc_params, cls_params):
    x = lxrt_encoder_standin(sent_ids, feat, pos, enc_params)        # (B, 768)
    cls_out = lstmcnn_standin(item["visual"], item["question"],
                              item["q_length"], cls_params)          # (B, 768)
    logit, cls_logits = vqa_head(x, cls_out, head_params)            # Pallas kernel
    return logit, cls_logits, x, cls_out


# Pure-JAX f32 reference of the fused head (original, unfolded params).
def head_reference(x, c, p):
    z = x * c
    h = z @ p["w1"] + p["b1"]
    h = h * 0.5 * (1.0 + jax.lax.erf(h / jnp.sqrt(2.0)))
    mu = jnp.mean(h, axis=-1, keepdims=True)
    var = jnp.mean(jnp.square(h - mu), axis=-1, keepdims=True)
    hn = (h - mu) * jax.lax.rsqrt(var + 1e-12) * p["ln_g"] + p["ln_b"]
    logit = hn @ p["w2"] + p["b2"]
    cls_logits = jnp.maximum(c, 0.0) @ p["w3"] + p["b3"]
    return logit, cls_logits


if __name__ == "__main__":
    key = jax.random.PRNGKey(0)
    k_in, k_par = jax.random.split(key)
    params, enc_params, cls_params = init_params(k_par)
    head_params = prepare_head_params(params)

    B, O, F = 2, 8, 2048
    ks = jax.random.split(k_in, 5)
    feat = jax.random.normal(ks[0], (B, O, F), jnp.float32)           # (b, o, f)
    pos = jax.random.uniform(ks[1], (B, O, 4), jnp.float32)           # (b, o, 4)
    sent_ids = jax.random.randint(ks[2], (B, MAX_VQA_LENGTH), 0, 100) # tokenized sent
    item = {
        "visual": jax.random.normal(ks[3], (B, 3, 16, 16), jnp.float32),  # NCHW
        "question": jax.random.randint(ks[4], (B, 14), 0, 100),
        "answer": jnp.zeros((B, NUM_ANSWERS), jnp.float32),
        "q_length": jnp.array([10, 7], jnp.int32),
    }

    logit, cls_logits, x, cls_out = forward(item, feat, pos, sent_ids,
                                            head_params, enc_params, cls_params)
    jax.block_until_ready((logit, cls_logits))

    assert logit.shape == (B, NUM_ANSWERS) and cls_logits.shape == (B, NUM_QTYPES)
    ref_logit, ref_cls = head_reference(x, cls_out, params)
    # logit path uses bf16 weights/activations on the MXU -> relaxed tolerance.
    assert jnp.allclose(logit, ref_logit, atol=3e-2, rtol=3e-2), (
        float(jnp.max(jnp.abs(logit - ref_logit))))
    # cls path stays in f32 (tiny, lane-padded) -> tight tolerance.
    assert jnp.allclose(cls_logits, ref_cls, atol=1e-4, rtol=1e-4), (
        float(jnp.max(jnp.abs(cls_logits - ref_cls))))

    print("KERNEL_OK")
</pallas_src>

<mosaic_0001>
module attributes {stable_mosaic.version = 11 : i64} {
  func.func @vqa_head_kernel(%arg0: i32, %arg1: memref<8x768xf32, #tpu.memory_space<vmem>>, %arg2: memref<8x768xf32, #tpu.memory_space<vmem>>, %arg3: memref<768x1536xbf16, #tpu.memory_space<vmem>>, %arg4: memref<1x1536xf32, #tpu.memory_space<vmem>>, %arg5: memref<1536x128xbf16, #tpu.memory_space<vmem>>, %arg6: memref<1x128xf32, #tpu.memory_space<vmem>>, %arg7: memref<768x128xf32, #tpu.memory_space<vmem>>, %arg8: memref<1x128xf32, #tpu.memory_space<vmem>>, %arg9: memref<8x128xf32, #tpu.memory_space<vmem>>, %arg10: memref<8x128xf32, #tpu.memory_space<vmem>>) attributes {dimension_semantics = [#tpu.dimension_semantics<parallel>], iteration_bounds = array<i64: 1>, scalar_prefetch = 0 : i64, scratch_operands = 0 : i64, tpu.core_type = #tpu.core_type<tc>, window_params = [{transform_indices = @transform_0, window_bounds = array<i64: 8, 768>}, {transform_indices = @transform_1, window_bounds = array<i64: 8, 768>}, {pipeline_mode = #tpu.pipeline_mode<synchronous>, transform_indices = @transform_2, window_bounds = array<i64: 768, 1536>}, {pipeline_mode = #tpu.pipeline_mode<synchronous>, transform_indices = @transform_3, window_bounds = array<i64: 1, 1536>}, {pipeline_mode = #tpu.pipeline_mode<synchronous>, transform_indices = @transform_4, window_bounds = array<i64: 1536, 128>}, {pipeline_mode = #tpu.pipeline_mode<synchronous>, transform_indices = @transform_5, window_bounds = array<i64: 1, 128>}, {pipeline_mode = #tpu.pipeline_mode<synchronous>, transform_indices = @transform_6, window_bounds = array<i64: 768, 128>}, {pipeline_mode = #tpu.pipeline_mode<synchronous>, transform_indices = @transform_7, window_bounds = array<i64: 1, 128>}, {transform_indices = @transform_8, window_bounds = array<i64: 8, 128>}, {transform_indices = @transform_9, window_bounds = array<i64: 8, 128>}]} {
    %c0 = arith.constant 0 : index
    %c0_0 = arith.constant 0 : index
    %0 = vector.load %arg1[%c0, %c0_0] : memref<8x768xf32, #tpu.memory_space<vmem>>, vector<8x768xf32>
    %c0_1 = arith.constant 0 : index
    %c0_2 = arith.constant 0 : index
    %1 = vector.load %arg2[%c0_1, %c0_2] : memref<8x768xf32, #tpu.memory_space<vmem>>, vector<8x768xf32>
    %2 = arith.mulf %0, %1 : vector<8x768xf32>
    %3 = arith.truncf %2 : vector<8x768xf32> to vector<8x768xbf16>
    %c0_3 = arith.constant 0 : index
    %c0_4 = arith.constant 0 : index
    %4 = vector.load %arg3[%c0_3, %c0_4] : memref<768x1536xbf16, #tpu.memory_space<vmem>>, vector<768x1536xbf16>
    %cst = arith.constant dense<0.000000e+00> : vector<8x1536xf32>
    %5 = tpu.matmul %3, %4, %cst {dimension_numbers = #tpu.dot_dimension_numbers<[1], [0], [0], [1], [0, 0, 1, 1], [], []>} : vector<8x768xbf16>, vector<768x1536xbf16>, vector<8x1536xf32> -> vector<8x1536xf32>
    %c0_5 = arith.constant 0 : index
    %c0_6 = arith.constant 0 : index
    %6 = vector.load %arg4[%c0_5, %c0_6] : memref<1x1536xf32, #tpu.memory_space<vmem>>, vector<1x1536xf32>
    %7 = vector.broadcast %6 : vector<1x1536xf32> to vector<8x1536xf32>
    %8 = arith.addf %5, %7 : vector<8x1536xf32>
    %cst_7 = arith.constant 5.000000e-01 : f32
    %9 = vector.broadcast %cst_7 : f32 to vector<8x1536xf32>
    %10 = arith.mulf %8, %9 : vector<8x1536xf32>
    %cst_8 = arith.constant 0.707106769 : f32
    %11 = vector.broadcast %cst_8 : f32 to vector<8x1536xf32>
    %12 = arith.mulf %8, %11 : vector<8x1536xf32>
    %13 = math.erf %12 : vector<8x1536xf32>
    %cst_9 = arith.constant 1.000000e+00 : f32
    %14 = vector.broadcast %cst_9 : f32 to vector<8x1536xf32>
    %15 = arith.addf %14, %13 : vector<8x1536xf32>
    %16 = arith.mulf %10, %15 : vector<8x1536xf32>
    %cst_10 = arith.constant dense<0.000000e+00> : vector<8xf32>
    %17 = vector.multi_reduction <add>, %16, %cst_10 [1] : vector<8x1536xf32> to vector<8xf32>
    %18 = vector.shape_cast %17 : vector<8xf32> to vector<8x1xf32>
    %cst_11 = arith.constant 1.536000e+03 : f32
    %19 = vector.broadcast %cst_11 : f32 to vector<8x1xf32>
    %20 = arith.divf %18, %19 : vector<8x1xf32>
    %21 = vector.broadcast %20 : vector<8x1xf32> to vector<8x1536xf32>
    %22 = arith.subf %16, %21 : vector<8x1536xf32>
    %23 = arith.mulf %22, %22 : vector<8x1536xf32>
    %cst_12 = arith.constant dense<0.000000e+00> : vector<8xf32>
    %24 = vector.multi_reduction <add>, %23, %cst_12 [1] : vector<8x1536xf32> to vector<8xf32>
    %25 = vector.shape_cast %24 : vector<8xf32> to vector<8x1xf32>
    %cst_13 = arith.constant 1.536000e+03 : f32
    %26 = vector.broadcast %cst_13 : f32 to vector<8x1xf32>
    %27 = arith.divf %25, %26 : vector<8x1xf32>
    %28 = vector.broadcast %20 : vector<8x1xf32> to vector<8x1536xf32>
    %29 = arith.subf %16, %28 : vector<8x1536xf32>
    %cst_14 = arith.constant 9.99999996E-13 : f32
    %30 = vector.broadcast %cst_14 : f32 to vector<8x1xf32>
    %31 = arith.addf %27, %30 : vector<8x1xf32>
    %32 = math.rsqrt %31 : vector<8x1xf32>
    %33 = vector.broadcast %32 : vector<8x1xf32> to vector<8x1536xf32>
    %34 = arith.mulf %29, %33 : vector<8x1536xf32>
    %35 = arith.truncf %34 : vector<8x1536xf32> to vector<8x1536xbf16>
    %c0_15 = arith.constant 0 : index
    %c0_16 = arith.constant 0 : index
    %36 = vector.load %arg5[%c0_15, %c0_16] : memref<1536x128xbf16, #tpu.memory_space<vmem>>, vector<1536x128xbf16>
    %cst_17 = arith.constant dense<0.000000e+00> : vector<8x128xf32>
    %37 = tpu.matmul %35, %36, %cst_17 {dimension_numbers = #tpu.dot_dimension_numbers<[1], [0], [0], [1], [0, 0, 1, 1], [], []>} : vector<8x1536xbf16>, vector<1536x128xbf16>, vector<8x128xf32> -> vector<8x128xf32>
    %c0_18 = arith.constant 0 : index
    %c0_19 = arith.constant 0 : index
    %38 = vector.load %arg6[%c0_18, %c0_19] : memref<1x128xf32, #tpu.memory_space<vmem>>, vector<1x128xf32>
    %39 = vector.broadcast %38 : vector<1x128xf32> to vector<8x128xf32>
    %40 = arith.addf %37, %39 : vector<8x128xf32>
    %c0_20 = arith.constant 0 : index
    %c0_21 = arith.constant 0 : index
    %41 = vector.load %arg9[%c0_20, %c0_21] : memref<8x128xf32, #tpu.memory_space<vmem>>, vector<8x128xf32>
    tpu.vector_store %arg9[%c0_20, %c0_21], %40 {strides = array<i32>} : memref<8x128xf32, #tpu.memory_space<vmem>>, vector<8x128xf32>,
    %cst_22 = arith.constant 0.000000e+00 : f32
    %42 = vector.broadcast %cst_22 : f32 to vector<8x768xf32>
    %43 = arith.maximumf %1, %42 : vector<8x768xf32>
    %c0_23 = arith.constant 0 : index
    %c0_24 = arith.constant 0 : index
    %44 = vector.load %arg7[%c0_23, %c0_24] : memref<768x128xf32, #tpu.memory_space<vmem>>, vector<768x128xf32>
    %cst_25 = arith.constant dense<0.000000e+00> : vector<8x128xf32>
    %45 = tpu.matmul %43, %44, %cst_25 {dimension_numbers = #tpu.dot_dimension_numbers<[1], [0], [0], [1], [0, 0, 1, 1], [], []>} : vector<8x768xf32>, vector<768x128xf32>, vector<8x128xf32> -> vector<8x128xf32>
    %c0_26 = arith.constant 0 : index
    %c0_27 = arith.constant 0 : index
    %46 = vector.load %arg8[%c0_26, %c0_27] : memref<1x128xf32, #tpu.memory_space<vmem>>, vector<1x128xf32>
    %47 = vector.broadcast %46 : vector<1x128xf32> to vector<8x128xf32>
    %48 = arith.addf %45, %47 : vector<8x128xf32>
    %c0_28 = arith.constant 0 : index
    %c0_29 = arith.constant 0 : index
    %49 = vector.load %arg10[%c0_28, %c0_29] : memref<8x128xf32, #tpu.memory_space<vmem>>, vector<8x128xf32>
    tpu.vector_store %arg10[%c0_28, %c0_29], %48 {strides = array<i32>} : memref<8x128xf32, #tpu.memory_space<vmem>>, vector<8x128xf32>,
    return
  }
  func.func @transform_0(%arg0: i32) -> (i32, i32) {
    %c0_i32 = arith.constant 0 : i32
    %c0_i32_0 = arith.constant 0 : i32
    return %arg0, %c0_i32 : i32, i32
  }
  func.func @transform_1(%arg0: i32) -> (i32, i32) {
    %c0_i32 = arith.constant 0 : i32
    %c0_i32_0 = arith.constant 0 : i32
    return %arg0, %c0_i32 : i32, i32
  }
  func.func @transform_2(%arg0: i32) -> (i32, i32) {
    %c0_i32 = arith.constant 0 : i32
    %c0_i32_0 = arith.constant 0 : i32
    %c0_i32_1 = arith.constant 0 : i32
    return %c0_i32, %c0_i32_0 : i32, i32
  }
  func.func @transform_3(%arg0: i32) -> (i32, i32) {
    %c0_i32 = arith.constant 0 : i32
    %c0_i32_0 = arith.constant 0 : i32
    %c0_i32_1 = arith.constant 0 : i32
    return %c0_i32, %c0_i32_0 : i32, i32
  }
  func.func @transform_4(%arg0: i32) -> (i32, i32) {
    %c0_i32 = arith.constant 0 : i32
    %c0_i32_0 = arith.constant 0 : i32
    %c0_i32_1 = arith.constant 0 : i32
    return %c0_i32, %c0_i32_0 : i32, i32
  }
  func.func @transform_5(%arg0: i32) -> (i32, i32) {
    %c0_i32 = arith.constant 0 : i32
    %c0_i32_0 = arith.constant 0 : i32
    %c0_i32_1 = arith.constant 0 : i32
    return %c0_i32, %c0_i32_0 : i32, i32
  }
  func.func @transform_6(%arg0: i32) -> (i32, i32) {
    %c0_i32 = arith.constant 0 : i32
    %c0_i32_0 = arith.constant 0 : i32
    %c0_i32_1 = arith.constant 0 : i32
    return %c0_i32, %c0_i32_0 : i32, i32
  }
  func.func @transform_7(%arg0: i32) -> (i32, i32) {
    %c0_i32 = arith.constant 0 : i32
    %c0_i32_0 = arith.constant 0 : i32
    %c0_i32_1 = arith.constant 0 : i32
    return %c0_i32, %c0_i32_0 : i32, i32
  }
  func.func @transform_8(%arg0: i32) -> (i32, i32) {
    %c0_i32 = arith.constant 0 : i32
    %c0_i32_0 = arith.constant 0 : i32
    return %arg0, %c0_i32 : i32, i32
  }
  func.func @transform_9(%arg0: i32) -> (i32, i32) {
    %c0_i32 = arith.constant 0 : i32
    %c0_i32_0 = arith.constant 0 : i32
    return %arg0, %c0_i32 : i32, i32
  }
}

</mosaic_0001>

<llo_original>
// kernel: forward.1
$region0: #{forward.1}
  #allocation0 [shape = 'u32[]', space=smem, size = 0x4, offset = 0x4, fixed_abs, tag = 'smem constant byte address 0x4 - core index']
  #allocation1 [shape = 'u32[72,128]{1,0:T(1,128)}', space=vmem, size = 0x9000, scoped, tag = 'internal scratch']
  %s0 = inlined_call_operand.vmem [shape: f32[8,768], index: 0, kind: input, shape index: {}]
  %s1 = inlined_call_operand.vmem [shape: f32[8,768], index: 1, kind: input, shape index: {}]
  %s2 = inlined_call_operand.vmem [shape: bf16[768,1536], index: 2, kind: input, shape index: {}]
  %s3 = inlined_call_operand.vmem [shape: f32[1,1536], index: 3, kind: input, shape index: {}]
  %s4 = inlined_call_operand.vmem [shape: bf16[1536,128], index: 4, kind: input, shape index: {}]
  %s5 = inlined_call_operand.vmem [shape: f32[1,128], index: 5, kind: input, shape index: {}]
  %s6 = inlined_call_operand.vmem [shape: f32[768,128], index: 6, kind: input, shape index: {}]
  %s7 = inlined_call_operand.vmem [shape: f32[1,128], index: 7, kind: input, shape index: {}]
  %s8 = inlined_call_operand.vmem [shape: f32[8,128], index: 8, kind: output, shape index: {0}]
  %s9 = inlined_call_operand.vmem [shape: f32[8,128], index: 9, kind: output, shape index: {1}]
  %10 = xla_tuple %s8, %s9
  %s11 = sld [smem:[#allocation0]]
  $region50: #{forward.1} parent=0
    _
  %s13 = ssub.s32 1, %s11
  %s14 = scalar_select 0, %s13, %s11
  // Predicated region
  $region2: #{forward.1} parent=0 // pred_check
    _
  $region3: #{forward.1} parent=0 // pred_check_branch
    %16 = sbr.rel (0) target = $region5
  $region4: #{forward.1} parent=0 // pred_region
    _
  $region5: #{forward.1} parent=0 // pred_fallthru
    _
  // Predicated region
  $region6: #{forward.1} parent=0 // pred_check
    _
  $region7: #{forward.1} parent=0 // pred_check_branch
    %18 = sbr.rel (0) target = $region9
  $region8: #{forward.1} parent=0 // pred_region
    _
  $region9: #{forward.1} parent=0 // pred_fallthru
    _
  // Predicated region
  $region10: #{forward.1} parent=0 // pred_check
    _
  $region11: #{forward.1} parent=0 // pred_check_branch
    %20 = sbr.rel (0) target = $region13
  $region12: #{forward.1} parent=0 // pred_region
    _
  $region13: #{forward.1} parent=0 // pred_fallthru
    _
  // Predicated region
  $region14: #{forward.1} parent=0 // pred_check
    _
  $region15: #{forward.1} parent=0 // pred_check_branch
    %22 = sbr.rel (0) target = $region17
  $region16: #{forward.1} parent=0 // pred_region
    _
  $region17: #{forward.1} parent=0 // pred_fallthru
    _
  // Predicated region
  $region18: #{forward.1} parent=0 // pred_check
    _
  $region19: #{forward.1} parent=0 // pred_check_branch
    %24 = sbr.rel (0) target = $region21
  $region20: #{forward.1} parent=0 // pred_region
    _
  $region21: #{forward.1} parent=0 // pred_fallthru
    _
  // Predicated region
  $region22: #{forward.1} parent=0 // pred_check
    _
  $region23: #{forward.1} parent=0 // pred_check_branch
    %26 = sbr.rel (0) target = $region25
  $region24: #{forward.1} parent=0 // pred_region
    _
  $region25: #{forward.1} parent=0 // pred_fallthru
    _
  // Predicated region
  $region26: #{forward.1} parent=0 // pred_check
    _
  $region27: #{forward.1} parent=0 // pred_check_branch
    %28 = sbr.rel (0) target = $region29
  $region28: #{forward.1} parent=0 // pred_region
    _
  $region29: #{forward.1} parent=0 // pred_fallthru
    _
  // Predicated region
  $region30: #{forward.1} parent=0 // pred_check
    _
  $region31: #{forward.1} parent=0 // pred_check_branch
    %30 = sbr.rel (0) target = $region33
  $region32: #{forward.1} parent=0 // pred_region
    _
  $region33: #{forward.1} parent=0 // pred_fallthru
    _
  %v31 = vld [vmem:[%s0] sm:$0xff]
  %v32 = vld [vmem:[%s0 + $0x8] sm:$0xff]
  %v33 = vld [vmem:[%s0 + $0x10] sm:$0xff]
  %v34 = vld [vmem:[%s0 + $0x18] sm:$0xff]
  %v35 = vld [vmem:[%s0 + $0x20] sm:$0xff]
  %v36 = vld [vmem:[%s0 + $0x28] sm:$0xff]
  %v37 = vld [vmem:[%s1] sm:$0xff]
  %v38 = vld [vmem:[%s1 + $0x8] sm:$0xff]
  %v39 = vld [vmem:[%s1 + $0x10] sm:$0xff]
  %v40 = vld [vmem:[%s1 + $0x18] sm:$0xff]
  %v41 = vld [vmem:[%s1 + $0x20] sm:$0xff]
  %v42 = vld [vmem:[%s1 + $0x28] sm:$0xff]
  %v43 = vmul.f32 %v31, %v37
  %v44 = vmul.f32 %v32, %v38
  %v45 = vmul.f32 %v33, %v39
  %v46 = vmul.f32 %v34, %v40
  %v47 = vmul.f32 %v35, %v41
  %v48 = vmul.f32 %v36, %v42
  %v49 = vpack.c.bf16 %v43, %v43
  %v50 = vpack.c.bf16 %v44, %v44
  %v51 = vpack.c.bf16 %v45, %v45
  %v52 = vpack.c.bf16 %v46, %v46
  %v53 = vpack.c.bf16 %v47, %v47
  %v54 = vpack.c.bf16 %v48, %v48
  %v55 = vld [vmem:[%s2] sm:$0xff]
  %v56 = vld [vmem:[%s2 + $0x8] sm:$0xff]
  %v57 = vld [vmem:[%s2 + $0x10] sm:$0xff]
  %v58 = vld [vmem:[%s2 + $0x18] sm:$0xff]
  %v59 = vld [vmem:[%s2 + $0x20] sm:$0xff]
  %v60 = vld [vmem:[%s2 + $0x28] sm:$0xff]
  %v61 = vld [vmem:[%s2 + $0x30] sm:$0xff]
  %v62 = vld [vmem:[%s2 + $0x38] sm:$0xff]
  %v63 = vld [vmem:[%s2 + $0x40] sm:$0xff]
  %v64 = vld [vmem:[%s2 + $0x48] sm:$0xff]
  %v65 = vld [vmem:[%s2 + $0x50] sm:$0xff]
  %v66 = vld [vmem:[%s2 + $0x58] sm:$0xff]
  %v67 = vld [vmem:[%s2 + $0x60] sm:$0xff]
  %v68 = vld [vmem:[%s2 + $0x68] sm:$0xff]
  %v69 = vld [vmem:[%s2 + $0x70] sm:$0xff]
  %v70 = vld [vmem:[%s2 + $0x78] sm:$0xff]
  %v71 = vld [vmem:[%s2 + $0x80] sm:$0xff]
  %v72 = vld [vmem:[%s2 + $0x88] sm:$0xff]
  %v73 = vld [vmem:[%s2 + $0x90] sm:$0xff]
  %v74 = vld [vmem:[%s2 + $0x98] sm:$0xff]
  %v75 = vld [vmem:[%s2 + $0xa0] sm:$0xff]
  %v76 = vld [vmem:[%s2 + $0xa8] sm:$0xff]
  %v77 = vld [vmem:[%s2 + $0xb0] sm:$0xff]
  %v78 = vld [vmem:[%s2 + $0xb8] sm:$0xff]
  %v79 = vld [vmem:[%s2 + $0xc0] sm:$0xff]
  %v80 = vld [vmem:[%s2 + $0xc8] sm:$0xff]
  %v81 = vld [vmem:[%s2 + $0xd0] sm:$0xff]
  %v82 = vld [vmem:[%s2 + $0xd8] sm:$0xff]
  %v83 = vld [vmem:[%s2 + $0xe0] sm:$0xff]
  %v84 = vld [vmem:[%s2 + $0xe8] sm:$0xff]
  %v85 = vld [vmem:[%s2 + $0xf0] sm:$0xff]
  %v86 = vld [vmem:[%s2 + $0xf8] sm:$0xff]
  %v87 = vld [vmem:[%s2 + $0x100] sm:$0xff]
  %v88 = vld [vmem:[%s2 + $0x108] sm:$0xff]
  %v89 = vld [vmem:[%s2 + $0x110] sm:$0xff]
  %v90 = vld [vmem:[%s2 + $0x118] sm:$0xff]
  %v91 = vld [vmem:[%s2 + $0x120] sm:$0xff]
  %v92 = vld [vmem:[%s2 + $0x128] sm:$0xff]
  %v93 = vld [vmem:[%s2 + $0x130] sm:$0xff]
  %v94 = vld [vmem:[%s2 + $0x138] sm:$0xff]
  %v95 = vld [vmem:[%s2 + $0x140] sm:$0xff]
  %v96 = vld [vmem:[%s2 + $0x148] sm:$0xff]
  %v97 = vld [vmem:[%s2 + $0x150] sm:$0xff]
  %v98 = vld [vmem:[%s2 + $0x158] sm:$0xff]
  %v99 = vld [vmem:[%s2 + $0x160] sm:$0xff]
  %v100 = vld [vmem:[%s2 + $0x168] sm:$0xff]
  %v101 = vld [vmem:[%s2 + $0x170] sm:$0xff]
  %v102 = vld [vmem:[%s2 + $0x178] sm:$0xff]
  %v103 = vld [vmem:[%s2 + $0x180] sm:$0xff]
  %v104 = vld [vmem:[%s2 + $0x188] sm:$0xff]
  %v105 = vld [vmem:[%s2 + $0x190] sm:$0xff]
  %v106 = vld [vmem:[%s2 + $0x198] sm:$0xff]
  %v107 = vld [vmem:[%s2 + $0x1a0] sm:$0xff]
  %v108 = vld [vmem:[%s2 + $0x1a8] sm:$0xff]
  %v109 = vld [vmem:[%s2 + $0x1b0] sm:$0xff]
  %v110 = vld [vmem:[%s2 + $0x1b8] sm:$0xff]
  %v111 = vld [vmem:[%s2 + $0x1c0] sm:$0xff]
  %v112 = vld [vmem:[%s2 + $0x1c8] sm:$0xff]
  %v113 = vld [vmem:[%s2 + $0x1d0] sm:$0xff]
  %v114 = vld [vmem:[%s2 + $0x1d8] sm:$0xff]
  %v115 = vld [vmem:[%s2 + $0x1e0] sm:$0xff]
  %v116 = vld [vmem:[%s2 + $0x1e8] sm:$0xff]
  %v117 = vld [vmem:[%s2 + $0x1f0] sm:$0xff]
  %v118 = vld [vmem:[%s2 + $0x1f8] sm:$0xff]
  %v119 = vld [vmem:[%s2 + $0x200] sm:$0xff]
  %v120 = vld [vmem:[%s2 + $0x208] sm:$0xff]
  %v121 = vld [vmem:[%s2 + $0x210] sm:$0xff]
  %v122 = vld [vmem:[%s2 + $0x218] sm:$0xff]
  %v123 = vld [vmem:[%s2 + $0x220] sm:$0xff]
  %v124 = vld [vmem:[%s2 + $0x228] sm:$0xff]
  %v125 = vld [vmem:[%s2 + $0x230] sm:$0xff]
  %v126 = vld [vmem:[%s2 + $0x238] sm:$0xff]
  %v127 = vld [vmem:[%s2 + $0x240] sm:$0xff]
  %v128 = vld [vmem:[%s2 + $0x248] sm:$0xff]
  %v129 = vld [vmem:[%s2 + $0x250] sm:$0xff]
  %v130 = vld [vmem:[%s2 + $0x258] sm:$0xff]
  %v131 = vld [vmem:[%s2 + $0x260] sm:$0xff]
  %v132 = vld [vmem:[%s2 + $0x268] sm:$0xff]
  %v133 = vld [vmem:[%s2 + $0x270] sm:$0xff]
  %v134 = vld [vmem:[%s2 + $0x278] sm:$0xff]
  %v135 = vld [vmem:[%s2 + $0x280] sm:$0xff]
  %v136 = vld [vmem:[%s2 + $0x288] sm:$0xff]
  %v137 = vld [vmem:[%s2 + $0x290] sm:$0xff]
  %v138 = vld [vmem:[%s2 + $0x298] sm:$0xff]
  %v139 = vld [vmem:[%s2 + $0x2a0] sm:$0xff]
  %v140 = vld [vmem:[%s2 + $0x2a8] sm:$0xff]
  %v141 = vld [vmem:[%s2 + $0x2b0] sm:$0xff]
  %v142 = vld [vmem:[%s2 + $0x2b8] sm:$0xff]
  %v143 = vld [vmem:[%s2 + $0x2c0] sm:$0xff]
  %v144 = vld [vmem:[%s2 + $0x2c8] sm:$0xff]
  %v145 = vld [vmem:[%s2 + $0x2d0] sm:$0xff]
  %v146 = vld [vmem:[%s2 + $0x2d8] sm:$0xff]
  %v147 = vld [vmem:[%s2 + $0x2e0] sm:$0xff]
  %v148 = vld [vmem:[%s2 + $0x2e8] sm:$0xff]
  %v149 = vld [vmem:[%s2 + $0x2f0] sm:$0xff]
  %v150 = vld [vmem:[%s2 + $0x2f8] sm:$0xff]
  %v151 = vld [vmem:[%s2 + $0x300] sm:$0xff]
  %v152 = vld [vmem:[%s2 + $0x308] sm:$0xff]
  %v153 = vld [vmem:[%s2 + $0x310] sm:$0xff]
  %v154 = vld [vmem:[%s2 + $0x318] sm:$0xff]
  %v155 = vld [vmem:[%s2 + $0x320] sm:$0xff]
  %v156 = vld [vmem:[%s2 + $0x328] sm:$0xff]
  %v157 = vld [vmem:[%s2 + $0x330] sm:$0xff]
  %v158 = vld [vmem:[%s2 + $0x338] sm:$0xff]
  %v159 = vld [vmem:[%s2 + $0x340] sm:$0xff]
  %v160 = vld [vmem:[%s2 + $0x348] sm:$0xff]
  %v161 = vld [vmem:[%s2 + $0x350] sm:$0xff]
  %v162 = vld [vmem:[%s2 + $0x358] sm:$0xff]
  %v163 = vld [vmem:[%s2 + $0x360] sm:$0xff]
  %v164 = vld [vmem:[%s2 + $0x368] sm:$0xff]
  %v165 = vld [vmem:[%s2 + $0x370] sm:$0xff]
  %v166 = vld [vmem:[%s2 + $0x378] sm:$0xff]
  %v167 = vld [vmem:[%s2 + $0x380] sm:$0xff]
  %v168 = vld [vmem:[%s2 + $0x388] sm:$0xff]
  %v169 = vld [vmem:[%s2 + $0x390] sm:$0xff]
  %v170 = vld [vmem:[%s2 + $0x398] sm:$0xff]
  %v171 = vld [vmem:[%s2 + $0x3a0] sm:$0xff]
  %v172 = vld [vmem:[%s2 + $0x3a8] sm:$0xff]
  %v173 = vld [vmem:[%s2 + $0x3b0] sm:$0xff]
  %v174 = vld [vmem:[%s2 + $0x3b8] sm:$0xff]
  %v175 = vld [vmem:[%s2 + $0x3c0] sm:$0xff]
  %v176 = vld [vmem:[%s2 + $0x3c8] sm:$0xff]
  %v177 = vld [vmem:[%s2 + $0x3d0] sm:$0xff]
  %v178 = vld [vmem:[%s2 + $0x3d8] sm:$0xff]
  %v179 = vld [vmem:[%s2 + $0x3e0] sm:$0xff]
  %v180 = vld [vmem:[%s2 + $0x3e8] sm:$0xff]
  %v181 = vld [vmem:[%s2 + $0x3f0] sm:$0xff]
  %v182 = vld [vmem:[%s2 + $0x3f8] sm:$0xff]
  %v183 = vld [vmem:[%s2 + $0x400] sm:$0xff]
  %v184 = vld [vmem:[%s2 + $0x408] sm:$0xff]
  %v185 = vld [vmem:[%s2 + $0x410] sm:$0xff]
  %v186 = vld [vmem:[%s2 + $0x418] sm:$0xff]
  %v187 = vld [vmem:[%s2 + $0x420] sm:$0xff]
  %v188 = vld [vmem:[%s2 + $0x428] sm:$0xff]
  %v189 = vld [vmem:[%s2 + $0x430] sm:$0xff]
  %v190 = vld [vmem:[%s2 + $0x438] sm:$0xff]
  %v191 = vld [vmem:[%s2 + $0x440] sm:$0xff]
  %v192 = vld [vmem:[%s2 + $0x448] sm:$0xff]
  %v193 = vld [vmem:[%s2 + $0x450] sm:$0xff]
  %v194 = vld [vmem:[%s2 + $0x458] sm:$0xff]
  %v195 = vld [vmem:[%s2 + $0x460] sm:$0xff]
  %v196 = vld [vmem:[%s2 + $0x468] sm:$0xff]
  %v197 = vld [vmem:[%s2 + $0x470] sm:$0xff]
  %v198 = vld [vmem:[%s2 + $0x478] sm:$0xff]
  %v199 = vld [vmem:[%s2 + $0x480] sm:$0xff]
  %v200 = vld [vmem:[%s2 + $0x488] sm:$0xff]
  %v201 = vld [vmem:[%s2 + $0x490] sm:$0xff]
  %v202 = vld [vmem:[%s2 + $0x498] sm:$0xff]
  %v203 = vld [vmem:[%s2 + $0x4a0] sm:$0xff]
  %v204 = vld [vmem:[%s2 + $0x4a8] sm:$0xff]
  %v205 = vld [vmem:[%s2 + $0x4b0] sm:$0xff]
  %v206 = vld [vmem:[%s2 + $0x4b8] sm:$0xff]
  %v207 = vld [vmem:[%s2 + $0x4c0] sm:$0xff]
  %v208 = vld [vmem:[%s2 + $0x4c8] sm:$0xff]
  %v209 = vld [vmem:[%s2 + $0x4d0] sm:$0xff]
  %v210 = vld [vmem:[%s2 + $0x4d8] sm:$0xff]
  %v211 = vld [vmem:[%s2 + $0x4e0] sm:$0xff]
  %v212 = vld [vmem:[%s2 + $0x4e8] sm:$0xff]
  %v213 = vld [vmem:[%s2 + $0x4f0] sm:$0xff]
  %v214 = vld [vmem:[%s2 + $0x4f8] sm:$0xff]
  %v215 = vld [vmem:[%s2 + $0x500] sm:$0xff]
  %v216 = vld [vmem:[%s2 + $0x508] sm:$0xff]
  %v217 = vld [vmem:[%s2 + $0x510] sm:$0xff]
  %v218 = vld [vmem:[%s2 + $0x518] sm:$0xff]
  %v219 = vld [vmem:[%s2 + $0x520] sm:$0xff]
  %v220 = vld [vmem:[%s2 + $0x528] sm:$0xff]
  %v221 = vld [vmem:[%s2 + $0x530] sm:$0xff]
  %v222 = vld [vmem:[%s2 + $0x538] sm:$0xff]
  %v223 = vld [vmem:[%s2 + $0x540] sm:$0xff]
  %v224 = vld [vmem:[%s2 + $0x548] sm:$0xff]
  %v225 = vld [vmem:[%s2 + $0x550] sm:$0xff]
  %v226 = vld [vmem:[%s2 + $0x558] sm:$0xff]
  %v227 = vld [vmem:[%s2 + $0x560] sm:$0xff]
  %v228 = vld [vmem:[%s2 + $0x568] sm:$0xff]
  %v229 = vld [vmem:[%s2 + $0x570] sm:$0xff]
  %v230 = vld [vmem:[%s2 + $0x578] sm:$0xff]
  %v231 = vld [vmem:[%s2 + $0x580] sm:$0xff]
  %v232 = vld [vmem:[%s2 + $0x588] sm:$0xff]
  %v233 = vld [vmem:[%s2 + $0x590] sm:$0xff]
  %v234 = vld [vmem:[%s2 + $0x598] sm:$0xff]
  %v235 = vld [vmem:[%s2 + $0x5a0] sm:$0xff]
  %v236 = vld [vmem:[%s2 + $0x5a8] sm:$0xff]
  %v237 = vld [vmem:[%s2 + $0x5b0] sm:$0xff]
  %v238 = vld [vmem:[%s2 + $0x5b8] sm:$0xff]
  %v239 = vld [vmem:[%s2 + $0x5c0] sm:$0xff]
  %v240 = vld [vmem:[%s2 + $0x5c8] sm:$0xff]
  %v241 = vld [vmem:[%s2 + $0x5d0] sm:$0xff]
  %v242 = vld [vmem:[%s2 + $0x5d8] sm:$0xff]
  %v243 = vld [vmem:[%s2 + $0x5e0] sm:$0xff]
  %v244 = vld [vmem:[%s2 + $0x5e8] sm:$0xff]
  %v245 = vld [vmem:[%s2 + $0x5f0] sm:$0xff]
  %v246 = vld [vmem:[%s2 + $0x5f8] sm:$0xff]
  %v247 = vld [vmem:[%s2 + $0x600] sm:$0xff]
  %v248 = vld [vmem:[%s2 + $0x608] sm:$0xff]
  %v249 = vld [vmem:[%s2 + $0x610] sm:$0xff]
  %v250 = vld [vmem:[%s2 + $0x618] sm:$0xff]
  %v251 = vld [vmem:[%s2 + $0x620] sm:$0xff]
  %v252 = vld [vmem:[%s2 + $0x628] sm:$0xff]
  %v253 = vld [vmem:[%s2 + $0x630] sm:$0xff]
  %v254 = vld [vmem:[%s2 + $0x638] sm:$0xff]
  %v255 = vld [vmem:[%s2 + $0x640] sm:$0xff]
  %v256 = vld [vmem:[%s2 + $0x648] sm:$0xff]
  %v257 = vld [vmem:[%s2 + $0x650] sm:$0xff]
  %v258 = vld [vmem:[%s2 + $0x658] sm:$0xff]
  %v259 = vld [vmem:[%s2 + $0x660] sm:$0xff]
  %v260 = vld [vmem:[%s2 + $0x668] sm:$0xff]
  %v261 = vld [vmem:[%s2 + $0x670] sm:$0xff]
  %v262 = vld [vmem:[%s2 + $0x678] sm:$0xff]
  %v263 = vld [vmem:[%s2 + $0x680] sm:$0xff]
  %v264 = vld [vmem:[%s2 + $0x688] sm:$0xff]
  %v265 = vld [vmem:[%s2 + $0x690] sm:$0xff]
  %v266 = vld [vmem:[%s2 + $0x698] sm:$0xff]
  %v267 = vld [vmem:[%s2 + $0x6a0] sm:$0xff]
  %v268 = vld [vmem:[%s2 + $0x6a8] sm:$0xff]
  %v269 = vld [vmem:[%s2 + $0x6b0] sm:$0xff]
  %v270 = vld [vmem:[%s2 + $0x6b8] sm:$0xff]
  %v271 = vld [vmem:[%s2 + $0x6c0] sm:$0xff]
  %v272 = vld [vmem:[%s2 + $0x6c8] sm:$0xff]
  %v273 = vld [vmem:[%s2 + $0x6d0] sm:$0xff]
  %v274 = vld [vmem:[%s2 + $0x6d8] sm:$0xff]
  %v275 = vld [vmem:[%s2 + $0x6e0] sm:$0xff]
  %v276 = vld [vmem:[%s2 + $0x6e8] sm:$0xff]
  %v277 = vld [vmem:[%s2 + $0x6f0] sm:$0xff]
  %v278 = vld [vmem:[%s2 + $0x6f8] sm:$0xff]
  %v279 = vld [vmem:[%s2 + $0x700] sm:$0xff]
  %v280 = vld [vmem:[%s2 + $0x708] sm:$0xff]
  %v281 = vld [vmem:[%s2 + $0x710] sm:$0xff]
  %v282 = vld [vmem:[%s2 + $0x718] sm:$0xff]
  %v283 = vld [vmem:[%s2 + $0x720] sm:$0xff]
  %v284 = vld [vmem:[%s2 + $0x728] sm:$0xff]
  %v285 = vld [vmem:[%s2 + $0x730] sm:$0xff]
  %v286 = vld [vmem:[%s2 + $0x738] sm:$0xff]
  %v287 = vld [vmem:[%s2 + $0x740] sm:$0xff]
  %v288 = vld [vmem:[%s2 + $0x748] sm:$0xff]
  %v289 = vld [vmem:[%s2 + $0x750] sm:$0xff]
  %v290 = vld [vmem:[%s2 + $0x758] sm:$0xff]
  %v291 = vld [vmem:[%s2 + $0x760] sm:$0xff]
  %v292 = vld [vmem:[%s2 + $0x768] sm:$0xff]
  %v293 = vld [vmem:[%s2 + $0x770] sm:$0xff]
  %v294 = vld [vmem:[%s2 + $0x778] sm:$0xff]
  %v295 = vld [vmem:[%s2 + $0x780] sm:$0xff]
  %v296 = vld [vmem:[%s2 + $0x788] sm:$0xff]
  %v297 = vld [vmem:[%s2 + $0x790] sm:$0xff]
  %v298 = vld [vmem:[%s2 + $0x798] sm:$0xff]
  %v299 = vld [vmem:[%s2 + $0x7a0] sm:$0xff]
  %v300 = vld [vmem:[%s2 + $0x7a8] sm:$0xff]
  %v301 = vld [vmem:[%s2 + $0x7b0] sm:$0xff]
  %v302 = vld [vmem:[%s2 + $0x7b8] sm:$0xff]
  %v303 = vld [vmem:[%s2 + $0x7c0] sm:$0xff]
  %v304 = vld [vmem:[%s2 + $0x7c8] sm:$0xff]
  %v305 = vld [vmem:[%s2 + $0x7d0] sm:$0xff]
  %v306 = vld [vmem:[%s2 + $0x7d8] sm:$0xff]
  %v307 = vld [vmem:[%s2 + $0x7e0] sm:$0xff]
  %v308 = vld [vmem:[%s2 + $0x7e8] sm:$0xff]
  %v309 = vld [vmem:[%s2 + $0x7f0] sm:$0xff]
  %v310 = vld [vmem:[%s2 + $0x7f8] sm:$0xff]
  %v311 = vld [vmem:[%s2 + $0x800] sm:$0xff]
  %v312 = vld [vmem:[%s2 + $0x808] sm:$0xff]
  %v313 = vld [vmem:[%s2 + $0x810] sm:$0xff]
  %v314 = vld [vmem:[%s2 + $0x818] sm:$0xff]
  %v315 = vld [vmem:[%s2 + $0x820] sm:$0xff]
  %v316 = vld [vmem:[%s2 + $0x828] sm:$0xff]
  %v317 = vld [vmem:[%s2 + $0x830] sm:$0xff]
  %v318 = vld [vmem:[%s2 + $0x838] sm:$0xff]
  %v319 = vld [vmem:[%s2 + $0x840] sm:$0xff]
  %v320 = vld [vmem:[%s2 + $0x848] sm:$0xff]
  %v321 = vld [vmem:[%s2 + $0x850] sm:$0xff]
  %v322 = vld [vmem:[%s2 + $0x858] sm:$0xff]
  %v323 = vld [vmem:[%s2 + $0x860] sm:$0xff]
  %v324 = vld [vmem:[%s2 + $0x868] sm:$0xff]
  %v325 = vld [vmem:[%s2 + $0x870] sm:$0xff]
  %v326 = vld [vmem:[%s2 + $0x878] sm:$0xff]
  %v327 = vld [vmem:[%s2 + $0x880] sm:$0xff]
  %v328 = vld [vmem:[%s2 + $0x888] sm:$0xff]
  %v329 = vld [vmem:[%s2 + $0x890] sm:$0xff]
  %v330 = vld [vmem:[%s2 + $0x898] sm:$0xff]
  %v331 = vld [vmem:[%s2 + $0x8a0] sm:$0xff]
  %v332 = vld [vmem:[%s2 + $0x8a8] sm:$0xff]
  %v333 = vld [vmem:[%s2 + $0x8b0] sm:$0xff]
  %v334 = vld [vmem:[%s2 + $0x8b8] sm:$0xff]
  %v335 = vld [vmem:[%s2 + $0x8c0] sm:$0xff]
  %v336 = vld [vmem:[%s2 + $0x8c8] sm:$0xff]
  %v337 = vld [vmem:[%s2 + $0x8d0] sm:$0xff]
  %v338 = vld [vmem:[%s2 + $0x8d8] sm:$0xff]
  %v339 = vld [vmem:[%s2 + $0x8e0] sm:$0xff]
  %v340 = vld [vmem:[%s2 + $0x8e8] sm:$0xff]
  %v341 = vld [vmem:[%s2 + $0x8f0] sm:$0xff]
  %v342 = vld [vmem:[%s2 + $0x8f8] sm:$0xff]
  %v343 = vld [vmem:[%s2 + $0x900] sm:$0xff]
  %v344 = vld [vmem:[%s2 + $0x908] sm:$0xff]
  %v345 = vld [vmem:[%s2 + $0x910] sm:$0xff]
  %v346 = vld [vmem:[%s2 + $0x918] sm:$0xff]
  %v347 = vld [vmem:[%s2 + $0x920] sm:$0xff]
  %v348 = vld [vmem:[%s2 + $0x928] sm:$0xff]
  %v349 = vld [vmem:[%s2 + $0x930] sm:$0xff]
  %v350 = vld [vmem:[%s2 + $0x938] sm:$0xff]
  %v351 = vld [vmem:[%s2 + $0x940] sm:$0xff]
  %v352 = vld [vmem:[%s2 + $0x948] sm:$0xff]
  %v353 = vld [vmem:[%s2 + $0x950] sm:$0xff]
  %v354 = vld [vmem:[%s2 + $0x958] sm:$0xff]
  %v355 = vld [vmem:[%s2 + $0x960] sm:$0xff]
  %v356 = vld [vmem:[%s2 + $0x968] sm:$0xff]
  %v357 = vld [vmem:[%s2 + $0x970] sm:$0xff]
  %v358 = vld [vmem:[%s2 + $0x978] sm:$0xff]
  %v359 = vld [vmem:[%s2 + $0x980] sm:$0xff]
  %v360 = vld [vmem:[%s2 + $0x988] sm:$0xff]
  %v361 = vld [vmem:[%s2 + $0x990] sm:$0xff]
  %v362 = vld [vmem:[%s2 + $0x998] sm:$0xff]
  %v363 = vld [vmem:[%s2 + $0x9a0] sm:$0xff]
  %v364 = vld [vmem:[%s2 + $0x9a8] sm:$0xff]
  %v365 = vld [vmem:[%s2 + $0x9b0] sm:$0xff]
  %v366 = vld [vmem:[%s2 + $0x9b8] sm:$0xff]
  %v367 = vld [vmem:[%s2 + $0x9c0] sm:$0xff]
  %v368 = vld [vmem:[%s2 + $0x9c8] sm:$0xff]
  %v369 = vld [vmem:[%s2 + $0x9d0] sm:$0xff]
  %v370 = vld [vmem:[%s2 + $0x9d8] sm:$0xff]
  %v371 = vld [vmem:[%s2 + $0x9e0] sm:$0xff]
  %v372 = vld [vmem:[%s2 + $0x9e8] sm:$0xff]
  %v373 = vld [vmem:[%s2 + $0x9f0] sm:$0xff]
  %v374 = vld [vmem:[%s2 + $0x9f8] sm:$0xff]
  %v375 = vld [vmem:[%s2 + $0xa00] sm:$0xff]
  %v376 = vld [vmem:[%s2 + $0xa08] sm:$0xff]
  %v377 = vld [vmem:[%s2 + $0xa10] sm:$0xff]
  %v378 = vld [vmem:[%s2 + $0xa18] sm:$0xff]
  %v379 = vld [vmem:[%s2 + $0xa20] sm:$0xff]
  %v380 = vld [vmem:[%s2 + $0xa28] sm:$0xff]
  %v381 = vld [vmem:[%s2 + $0xa30] sm:$0xff]
  %v382 = vld [vmem:[%s2 + $0xa38] sm:$0xff]
  %v383 = vld [vmem:[%s2 + $0xa40] sm:$0xff]
  %v384 = vld [vmem:[%s2 + $0xa48] sm:$0xff]
  %v385 = vld [vmem:[%s2 + $0xa50] sm:$0xff]
  %v386 = vld [vmem:[%s2 + $0xa58] sm:$0xff]
  %v387 = vld [vmem:[%s2 + $0xa60] sm:$0xff]
  %v388 = vld [vmem:[%s2 + $0xa68] sm:$0xff]
  %v389 = vld [vmem:[%s2 + $0xa70] sm:$0xff]
  %v390 = vld [vmem:[%s2 + $0xa78] sm:$0xff]
  %v391 = vld [vmem:[%s2 + $0xa80] sm:$0xff]
  %v392 = vld [vmem:[%s2 + $0xa88] sm:$0xff]
  %v393 = vld [vmem:[%s2 + $0xa90] sm:$0xff]
  %v394 = vld [vmem:[%s2 + $0xa98] sm:$0xff]
  %v395 = vld [vmem:[%s2 + $0xaa0] sm:$0xff]
  %v396 = vld [vmem:[%s2 + $0xaa8] sm:$0xff]
  %v397 = vld [vmem:[%s2 + $0xab0] sm:$0xff]
  %v398 = vld [vmem:[%s2 + $0xab8] sm:$0xff]
  %v399 = vld [vmem:[%s2 + $0xac0] sm:$0xff]
  %v400 = vld [vmem:[%s2 + $0xac8] sm:$0xff]
  %v401 = vld [vmem:[%s2 + $0xad0] sm:$0xff]
  %v402 = vld [vmem:[%s2 + $0xad8] sm:$0xff]
  %v403 = vld [vmem:[%s2 + $0xae0] sm:$0xff]
  %v404 = vld [vmem:[%s2 + $0xae8] sm:$0xff]
  %v405 = vld [vmem:[%s2 + $0xaf0] sm:$0xff]
  %v406 = vld [vmem:[%s2 + $0xaf8] sm:$0xff]
  %v407 = vld [vmem:[%s2 + $0xb00] sm:$0xff]
  %v408 = vld [vmem:[%s2 + $0xb08] sm:$0xff]
  %v409 = vld [vmem:[%s2 + $0xb10] sm:$0xff]
  %v410 = vld [vmem:[%s2 + $0xb18] sm:$0xff]
  %v411 = vld [vmem:[%s2 + $0xb20] sm:$0xff]
  %v412 = vld [vmem:[%s2 + $0xb28] sm:$0xff]
  %v413 = vld [vmem:[%s2 + $0xb30] sm:$0xff]
  %v414 = vld [vmem:[%s2 + $0xb38] sm:$0xff]
  %v415 = vld [vmem:[%s2 + $0xb40] sm:$0xff]
  %v416 = vld [vmem:[%s2 + $0xb48] sm:$0xff]
  %v417 = vld [vmem:[%s2 + $0xb50] sm:$0xff]
  %v418 = vld [vmem:[%s2 + $0xb58] sm:$0xff]
  %v419 = vld [vmem:[%s2 + $0xb60] sm:$0xff]
  %v420 = vld [vmem:[%s2 + $0xb68] sm:$0xff]
  %v421 = vld [vmem:[%s2 + $0xb70] sm:$0xff]
  %v422 = vld [vmem:[%s2 + $0xb78] sm:$0xff]
  %v423 = vld [vmem:[%s2 + $0xb80] sm:$0xff]
  %v424 = vld [vmem:[%s2 + $0xb88] sm:$0xff]
  %v425 = vld [vmem:[%s2 + $0xb90] sm:$0xff]
  %v426 = vld [vmem:[%s2 + $0xb98] sm:$0xff]
  %v427 = vld [vmem:[%s2 + $0xba0] sm:$0xff]
  %v428 = vld [vmem:[%s2 + $0xba8] sm:$0xff]
  %v429 = vld [vmem:[%s2 + $0xbb0] sm:$0xff]
  %v430 = vld [vmem:[%s2 + $0xbb8] sm:$0xff]
  %v431 = vld [vmem:[%s2 + $0xbc0] sm:$0xff]
  %v432 = vld [vmem:[%s2 + $0xbc8] sm:$0xff]
  %v433 = vld [vmem:[%s2 + $0xbd0] sm:$0xff]
  %v434 = vld [vmem:[%s2 + $0xbd8] sm:$0xff]
  %v435 = vld [vmem:[%s2 + $0xbe0] sm:$0xff]
  %v436 = vld [vmem:[%s2 + $0xbe8] sm:$0xff]
  %v437 = vld [vmem:[%s2 + $0xbf0] sm:$0xff]
  %v438 = vld [vmem:[%s2 + $0xbf8] sm:$0xff]
  %v439 = vld [vmem:[%s2 + $0xc00] sm:$0xff]
  %v440 = vld [vmem:[%s2 + $0xc08] sm:$0xff]
  %v441 = vld [vmem:[%s2 + $0xc10] sm:$0xff]
  %v442 = vld [vmem:[%s2 + $0xc18] sm:$0xff]
  %v443 = vld [vmem:[%s2 + $0xc20] sm:$0xff]
  %v444 = vld [vmem:[%s2 + $0xc28] sm:$0xff]
  %v445 = vld [vmem:[%s2 + $0xc30] sm:$0xff]
  %v446 = vld [vmem:[%s2 + $0xc38] sm:$0xff]
  %v447 = vld [vmem:[%s2 + $0xc40] sm:$0xff]
  %v448 = vld [vmem:[%s2 + $0xc48] sm:$0xff]
  %v449 = vld [vmem:[%s2 + $0xc50] sm:$0xff]
  %v450 = vld [vmem:[%s2 + $0xc58] sm:$0xff]
  %v451 = vld [vmem:[%s2 + $0xc60] sm:$0xff]
  %v452 = vld [vmem:[%s2 + $0xc68] sm:$0xff]
  %v453 = vld [vmem:[%s2 + $0xc70] sm:$0xff]
  %v454 = vld [vmem:[%s2 + $0xc78] sm:$0xff]
  %v455 = vld [vmem:[%s2 + $0xc80] sm:$0xff]
  %v456 = vld [vmem:[%s2 + $0xc88] sm:$0xff]
  %v457 = vld [vmem:[%s2 + $0xc90] sm:$0xff]
  %v458 = vld [vmem:[%s2 + $0xc98] sm:$0xff]
  %v459 = vld [vmem:[%s2 + $0xca0] sm:$0xff]
  %v460 = vld [vmem:[%s2 + $0xca8] sm:$0xff]
  %v461 = vld [vmem:[%s2 + $0xcb0] sm:$0xff]
  %v462 = vld [vmem:[%s2 + $0xcb8] sm:$0xff]
  %v463 = vld [vmem:[%s2 + $0xcc0] sm:$0xff]
  %v464 = vld [vmem:[%s2 + $0xcc8] sm:$0xff]
  %v465 = vld [vmem:[%s2 + $0xcd0] sm:$0xff]
  %v466 = vld [vmem:[%s2 + $0xcd8] sm:$0xff]
  %v467 = vld [vmem:[%s2 + $0xce0] sm:$0xff]
  %v468 = vld [vmem:[%s2 + $0xce8] sm:$0xff]
  %v469 = vld [vmem:[%s2 + $0xcf0] sm:$0xff]
  %v470 = vld [vmem:[%s2 + $0xcf8] sm:$0xff]
  %v471 = vld [vmem:[%s2 + $0xd00] sm:$0xff]
  %v472 = vld [vmem:[%s2 + $0xd08] sm:$0xff]
  %v473 = vld [vmem:[%s2 + $0xd10] sm:$0xff]
  %v474 = vld [vmem:[%s2 + $0xd18] sm:$0xff]
  %v475 = vld [vmem:[%s2 + $0xd20] sm:$0xff]
  %v476 = vld [vmem:[%s2 + $0xd28] sm:$0xff]
  %v477 = vld [vmem:[%s2 + $0xd30] sm:$0xff]
  %v478 = vld [vmem:[%s2 + $0xd38] sm:$0xff]
  %v479 = vld [vmem:[%s2 + $0xd40] sm:$0xff]
  %v480 = vld [vmem:[%s2 + $0xd48] sm:$0xff]
  %v481 = vld [vmem:[%s2 + $0xd50] sm:$0xff]
  %v482 = vld [vmem:[%s2 + $0xd58] sm:$0xff]
  %v483 = vld [vmem:[%s2 + $0xd60] sm:$0xff]
  %v484 = vld [vmem:[%s2 + $0xd68] sm:$0xff]
  %v485 = vld [vmem:[%s2 + $0xd70] sm:$0xff]
  %v486 = vld [vmem:[%s2 + $0xd78] sm:$0xff]
  %v487 = vld [vmem:[%s2 + $0xd80] sm:$0xff]
  %v488 = vld [vmem:[%s2 + $0xd88] sm:$0xff]
  %v489 = vld [vmem:[%s2 + $0xd90] sm:$0xff]
  %v490 = vld [vmem:[%s2 + $0xd98] sm:$0xff]
  %v491 = vld [vmem:[%s2 + $0xda0] sm:$0xff]
  %v492 = vld [vmem:[%s2 + $0xda8] sm:$0xff]
  %v493 = vld [vmem:[%s2 + $0xdb0] sm:$0xff]
  %v494 = vld [vmem:[%s2 + $0xdb8] sm:$0xff]
  %v495 = vld [vmem:[%s2 + $0xdc0] sm:$0xff]
  %v496 = vld [vmem:[%s2 + $0xdc8] sm:$0xff]
  %v497 = vld [vmem:[%s2 + $0xdd0] sm:$0xff]
  %v498 = vld [vmem:[%s2 + $0xdd8] sm:$0xff]
  %v499 = vld [vmem:[%s2 + $0xde0] sm:$0xff]
  %v500 = vld [vmem:[%s2 + $0xde8] sm:$0xff]
  %v501 = vld [vmem:[%s2 + $0xdf0] sm:$0xff]
  %v502 = vld [vmem:[%s2 + $0xdf8] sm:$0xff]
  %v503 = vld [vmem:[%s2 + $0xe00] sm:$0xff]
  %v504 = vld [vmem:[%s2 + $0xe08] sm:$0xff]
  %v505 = vld [vmem:[%s2 + $0xe10] sm:$0xff]
  %v506 = vld [vmem:[%s2 + $0xe18] sm:$0xff]
  %v507 = vld [vmem:[%s2 + $0xe20] sm:$0xff]
  %v508 = vld [vmem:[%s2 + $0xe28] sm:$0xff]
  %v509 = vld [vmem:[%s2 + $0xe30] sm:$0xff]
  %v510 = vld [vmem:[%s2 + $0xe38] sm:$0xff]
  %v511 = vld [vmem:[%s2 + $0xe40] sm:$0xff]
  %v512 = vld [vmem:[%s2 + $0xe48] sm:$0xff]
  %v513 = vld [vmem:[%s2 + $0xe50] sm:$0xff]
  %v514 = vld [vmem:[%s2 + $0xe58] sm:$0xff]
  %v515 = vld [vmem:[%s2 + $0xe60] sm:$0xff]
  %v516 = vld [vmem:[%s2 + $0xe68] sm:$0xff]
  %v517 = vld [vmem:[%s2 + $0xe70] sm:$0xff]
  %v518 = vld [vmem:[%s2 + $0xe78] sm:$0xff]
  %v519 = vld [vmem:[%s2 + $0xe80] sm:$0xff]
  %v520 = vld [vmem:[%s2 + $0xe88] sm:$0xff]
  %v521 = vld [vmem:[%s2 + $0xe90] sm:$0xff]
  %v522 = vld [vmem:[%s2 + $0xe98] sm:$0xff]
  %v523 = vld [vmem:[%s2 + $0xea0] sm:$0xff]
  %v524 = vld [vmem:[%s2 + $0xea8] sm:$0xff]
  %v525 = vld [vmem:[%s2 + $0xeb0] sm:$0xff]
  %v526 = vld [vmem:[%s2 + $0xeb8] sm:$0xff]
  %v527 = vld [vmem:[%s2 + $0xec0] sm:$0xff]
  %v528 = vld [vmem:[%s2 + $0xec8] sm:$0xff]
  %v529 = vld [vmem:[%s2 + $0xed0] sm:$0xff]
  %v530 = vld [vmem:[%s2 + $0xed8] sm:$0xff]
  %v531 = vld [vmem:[%s2 + $0xee0] sm:$0xff]
  %v532 = vld [vmem:[%s2 + $0xee8] sm:$0xff]
  %v533 = vld [vmem:[%s2 + $0xef0] sm:$0xff]
  %v534 = vld [vmem:[%s2 + $0xef8] sm:$0xff]
  %v535 = vld [vmem:[%s2 + $0xf00] sm:$0xff]
  %v536 = vld [vmem:[%s2 + $0xf08] sm:$0xff]
  %v537 = vld [vmem:[%s2 + $0xf10] sm:$0xff]
  %v538 = vld [vmem:[%s2 + $0xf18] sm:$0xff]
  %v539 = vld [vmem:[%s2 + $0xf20] sm:$0xff]
  %v540 = vld [vmem:[%s2 + $0xf28] sm:$0xff]
  %v541 = vld [vmem:[%s2 + $0xf30] sm:$0xff]
  %v542 = vld [vmem:[%s2 + $0xf38] sm:$0xff]
  %v543 = vld [vmem:[%s2 + $0xf40] sm:$0xff]
  %v544 = vld [vmem:[%s2 + $0xf48] sm:$0xff]
  %v545 = vld [vmem:[%s2 + $0xf50] sm:$0xff]
  %v546 = vld [vmem:[%s2 + $0xf58] sm:$0xff]
  %v547 = vld [vmem:[%s2 + $0xf60] sm:$0xff]
  %v548 = vld [vmem:[%s2 + $0xf68] sm:$0xff]
  %v549 = vld [vmem:[%s2 + $0xf70] sm:$0xff]
  %v550 = vld [vmem:[%s2 + $0xf78] sm:$0xff]
  %v551 = vld [vmem:[%s2 + $0xf80] sm:$0xff]
  %v552 = vld [vmem:[%s2 + $0xf88] sm:$0xff]
  %v553 = vld [vmem:[%s2 + $0xf90] sm:$0xff]
  %v554 = vld [vmem:[%s2 + $0xf98] sm:$0xff]
  %v555 = vld [vmem:[%s2 + $0xfa0] sm:$0xff]
  %v556 = vld [vmem:[%s2 + $0xfa8] sm:$0xff]
  %v557 = vld [vmem:[%s2 + $0xfb0] sm:$0xff]
  %v558 = vld [vmem:[%s2 + $0xfb8] sm:$0xff]
  %v559 = vld [vmem:[%s2 + $0xfc0] sm:$0xff]
  %v560 = vld [vmem:[%s2 + $0xfc8] sm:$0xff]
  %v561 = vld [vmem:[%s2 + $0xfd0] sm:$0xff]
  %v562 = vld [vmem:[%s2 + $0xfd8] sm:$0xff]
  %v563 = vld [vmem:[%s2 + $0xfe0] sm:$0xff]
  %v564 = vld [vmem:[%s2 + $0xfe8] sm:$0xff]
  %v565 = vld [vmem:[%s2 + $0xff0] sm:$0xff]
  %v566 = vld [vmem:[%s2 + $0xff8] sm:$0xff]
  %v567 = vld [vmem:[%s2 + $0x1000] sm:$0xff]
  %v568 = vld [vmem:[%s2 + $0x1008] sm:$0xff]
  %v569 = vld [vmem:[%s2 + $0x1010] sm:$0xff]
  %v570 = vld [vmem:[%s2 + $0x1018] sm:$0xff]
  %v571 = vld [vmem:[%s2 + $0x1020] sm:$0xff]
  %v572 = vld [vmem:[%s2 + $0x1028] sm:$0xff]
  %v573 = vld [vmem:[%s2 + $0x1030] sm:$0xff]
  %v574 = vld [vmem:[%s2 + $0x1038] sm:$0xff]
  %v575 = vld [vmem:[%s2 + $0x1040] sm:$0xff]
  %v576 = vld [vmem:[%s2 + $0x1048] sm:$0xff]
  %v577 = vld [vmem:[%s2 + $0x1050] sm:$0xff]
  %v578 = vld [vmem:[%s2 + $0x1058] sm:$0xff]
  %v579 = vld [vmem:[%s2 + $0x1060] sm:$0xff]
  %v580 = vld [vmem:[%s2 + $0x1068] sm:$0xff]
  %v581 = vld [vmem:[%s2 + $0x1070] sm:$0xff]
  %v582 = vld [vmem:[%s2 + $0x1078] sm:$0xff]
  %v583 = vld [vmem:[%s2 + $0x1080] sm:$0xff]
  %v584 = vld [vmem:[%s2 + $0x1088] sm:$0xff]
  %v585 = vld [vmem:[%s2 + $0x1090] sm:$0xff]
  %v586 = vld [vmem:[%s2 + $0x1098] sm:$0xff]
  %v587 = vld [vmem:[%s2 + $0x10a0] sm:$0xff]
  %v588 = vld [vmem:[%s2 + $0x10a8] sm:$0xff]
  %v589 = vld [vmem:[%s2 + $0x10b0] sm:$0xff]
  %v590 = vld [vmem:[%s2 + $0x10b8] sm:$0xff]
  %v591 = vld [vmem:[%s2 + $0x10c0] sm:$0xff]
  %v592 = vld [vmem:[%s2 + $0x10c8] sm:$0xff]
  %v593 = vld [vmem:[%s2 + $0x10d0] sm:$0xff]
  %v594 = vld [vmem:[%s2 + $0x10d8] sm:$0xff]
  %v595 = vld [vmem:[%s2 + $0x10e0] sm:$0xff]
  %v596 = vld [vmem:[%s2 + $0x10e8] sm:$0xff]
  %v597 = vld [vmem:[%s2 + $0x10f0] sm:$0xff]
  %v598 = vld [vmem:[%s2 + $0x10f8] sm:$0xff]
  %v599 = vld [vmem:[%s2 + $0x1100] sm:$0xff]
  %v600 = vld [vmem:[%s2 + $0x1108] sm:$0xff]
  %v601 = vld [vmem:[%s2 + $0x1110] sm:$0xff]
  %v602 = vld [vmem:[%s2 + $0x1118] sm:$0xff]
  %v603 = vld [vmem:[%s2 + $0x1120] sm:$0xff]
  %v604 = vld [vmem:[%s2 + $0x1128] sm:$0xff]
  %v605 = vld [vmem:[%s2 + $0x1130] sm:$0xff]
  %v606 = vld [vmem:[%s2 + $0x1138] sm:$0xff]
  %v607 = vld [vmem:[%s2 + $0x1140] sm:$0xff]
  %v608 = vld [vmem:[%s2 + $0x1148] sm:$0xff]
  %v609 = vld [vmem:[%s2 + $0x1150] sm:$0xff]
  %v610 = vld [vmem:[%s2 + $0x1158] sm:$0xff]
  %v611 = vld [vmem:[%s2 + $0x1160] sm:$0xff]
  %v612 = vld [vmem:[%s2 + $0x1168] sm:$0xff]
  %v613 = vld [vmem:[%s2 + $0x1170] sm:$0xff]
  %v614 = vld [vmem:[%s2 + $0x1178] sm:$0xff]
  %v615 = vld [vmem:[%s2 + $0x1180] sm:$0xff]
  %v616 = vld [vmem:[%s2 + $0x1188] sm:$0xff]
  %v617 = vld [vmem:[%s2 + $0x1190] sm:$0xff]
  %v618 = vld [vmem:[%s2 + $0x1198] sm:$0xff]
  %v619 = vld [vmem:[%s2 + $0x11a0] sm:$0xff]
  %v620 = vld [vmem:[%s2 + $0x11a8] sm:$0xff]
  %v621 = vld [vmem:[%s2 + $0x11b0] sm:$0xff]
  %v622 = vld [vmem:[%s2 + $0x11b8] sm:$0xff]
  %v623 = vld [vmem:[%s2 + $0x11c0] sm:$0xff]
  %v624 = vld [vmem:[%s2 + $0x11c8] sm:$0xff]
  %v625 = vld [vmem:[%s2 + $0x11d0] sm:$0xff]
  %v626 = vld [vmem:[%s2 + $0x11d8] sm:$0xff]
  %v627 = vld [vmem:[%s2 + $0x11e0] sm:$0xff]
  %v628 = vld [vmem:[%s2 + $0x11e8] sm:$0xff]
  %v629 = vld [vmem:[%s2 + $0x11f0] sm:$0xff]
  %v630 = vld [vmem:[%s2 + $0x11f8] sm:$0xff]
  %v631 = vld [vmem:[%s3] sm:$0xff]
  %v632 = vld [vmem:[%s3 + $0x8] sm:$0xf]
  %v635 = vperm.slane %v631, 0
  %v636 = vperm.slane %v631, 1
  %v637 = vperm.slane %v631, 2
  %v638 = vperm.slane %v631, 3
  %v639 = vperm.slane %v631, 4
  %v640 = vperm.slane %v631, 5
  %v641 = vperm.slane %v631, 6
  %v642 = vperm.slane %v631, 7
  %v643 = vperm.slane %v632, 0
  %v644 = vperm.slane %v632, 1
  %v645 = vperm.slane %v632, 2
  %v646 = vperm.slane %v632, 3
  %v1235 = vunpack.c.l.b16 %v55
  %v1236 = vunpack.c.h.b16 %v55
  %v1237 = vunpack.c.l.b16 %v56
  %v1238 = vunpack.c.h.b16 %v56
  %v1239 = vunpack.c.l.b16 %v57
  %v1240 = vunpack.c.h.b16 %v57
  %v1241 = vunpack.c.l.b16 %v58
  %v1242 = vunpack.c.h.b16 %v58
  %v1243 = vunpack.c.l.b16 %v59
  %v1244 = vunpack.c.h.b16 %v59
  %v1245 = vunpack.c.l.b16 %v60
  %v1246 = vunpack.c.h.b16 %v60
  %v1247 = vunpack.c.l.b16 %v61
  %v1248 = vunpack.c.h.b16 %v61
  %v1249 = vunpack.c.l.b16 %v62
  %v1250 = vunpack.c.h.b16 %v62
  %v1251 = vunpack.c.l.b16 %v63
  %v1252 = vunpack.c.h.b16 %v63
  %v1253 = vunpack.c.l.b16 %v64
  %v1254 = vunpack.c.h.b16 %v64
  %v1255 = vunpack.c.l.b16 %v65
  %v1256 = vunpack.c.h.b16 %v65
  %v1257 = vunpack.c.l.b16 %v66
  %v1258 = vunpack.c.h.b16 %v66
  %v1259 = vunpack.c.l.b16 %v67
  %v1260 = vunpack.c.h.b16 %v67
  %v1261 = vunpack.c.l.b16 %v68
  %v1262 = vunpack.c.h.b16 %v68
  %v1263 = vunpack.c.l.b16 %v69
  %v1264 = vunpack.c.h.b16 %v69
  %v1265 = vunpack.c.l.b16 %v70
  %v1266 = vunpack.c.h.b16 %v70
  %v1267 = vunpack.c.l.b16 %v71
  %v1268 = vunpack.c.h.b16 %v71
  %v1269 = vunpack.c.l.b16 %v72
  %v1270 = vunpack.c.h.b16 %v72
  %v1271 = vunpack.c.l.b16 %v73
  %v1272 = vunpack.c.h.b16 %v73
  %v1273 = vunpack.c.l.b16 %v74
  %v1274 = vunpack.c.h.b16 %v74
  %v1275 = vunpack.c.l.b16 %v75
  %v1276 = vunpack.c.h.b16 %v75
  %v1277 = vunpack.c.l.b16 %v76
  %v1278 = vunpack.c.h.b16 %v76
  %v1279 = vunpack.c.l.b16 %v77
  %v1280 = vunpack.c.h.b16 %v77
  %v1281 = vunpack.c.l.b16 %v78
  %v1282 = vunpack.c.h.b16 %v78
  %v1283 = vunpack.c.l.b16 %v79
  %v1284 = vunpack.c.h.b16 %v79
  %v1285 = vunpack.c.l.b16 %v80
  %v1286 = vunpack.c.h.b16 %v80
  %v1287 = vunpack.c.l.b16 %v81
  %v1288 = vunpack.c.h.b16 %v81
  %v1289 = vunpack.c.l.b16 %v82
  %v1290 = vunpack.c.h.b16 %v82
  %v1291 = vunpack.c.l.b16 %v83
  %v1292 = vunpack.c.h.b16 %v83
  %v1293 = vunpack.c.l.b16 %v84
  %v1294 = vunpack.c.h.b16 %v84
  %v1295 = vunpack.c.l.b16 %v85
  %v1296 = vunpack.c.h.b16 %v85
  %v1297 = vunpack.c.l.b16 %v86
  %v1298 = vunpack.c.h.b16 %v86
  %v1299 = vunpack.c.l.b16 %v87
  %v1300 = vunpack.c.h.b16 %v87
  %v1301 = vunpack.c.l.b16 %v88
  %v1302 = vunpack.c.h.b16 %v88
  %v1303 = vunpack.c.l.b16 %v89
  %v1304 = vunpack.c.h.b16 %v89
  %v1305 = vunpack.c.l.b16 %v90
  %v1306 = vunpack.c.h.b16 %v90
  %v1307 = vunpack.c.l.b16 %v91
  %v1308 = vunpack.c.h.b16 %v91
  %v1309 = vunpack.c.l.b16 %v92
  %v1310 = vunpack.c.h.b16 %v92
  %v1311 = vunpack.c.l.b16 %v93
  %v1312 = vunpack.c.h.b16 %v93
  %v1313 = vunpack.c.l.b16 %v94
  %v1314 = vunpack.c.h.b16 %v94
  %v1315 = vunpack.c.l.b16 %v95
  %v1316 = vunpack.c.h.b16 %v95
  %v1317 = vunpack.c.l.b16 %v96
  %v1318 = vunpack.c.h.b16 %v96
  %v1319 = vunpack.c.l.b16 %v97
  %v1320 = vunpack.c.h.b16 %v97
  %v1321 = vunpack.c.l.b16 %v98
  %v1322 = vunpack.c.h.b16 %v98
  %v1323 = vunpack.c.l.b16 %v99
  %v1324 = vunpack.c.h.b16 %v99
  %v1325 = vunpack.c.l.b16 %v100
  %v1326 = vunpack.c.h.b16 %v100
  %v1327 = vunpack.c.l.b16 %v101
  %v1328 = vunpack.c.h.b16 %v101
  %v1329 = vunpack.c.l.b16 %v102
  %v1330 = vunpack.c.h.b16 %v102
  %v1331 = vunpack.c.l.b16 %v103
  %v1332 = vunpack.c.h.b16 %v103
  %v1333 = vunpack.c.l.b16 %v104
  %v1334 = vunpack.c.h.b16 %v104
  %v1335 = vunpack.c.l.b16 %v105
  %v1336 = vunpack.c.h.b16 %v105
  %v1337 = vunpack.c.l.b16 %v106
  %v1338 = vunpack.c.h.b16 %v106
  %v1339 = vunpack.c.l.b16 %v107
  %v1340 = vunpack.c.h.b16 %v107
  %v1341 = vunpack.c.l.b16 %v108
  %v1342 = vunpack.c.h.b16 %v108
  %v1343 = vunpack.c.l.b16 %v109
  %v1344 = vunpack.c.h.b16 %v109
  %v1345 = vunpack.c.l.b16 %v110
  %v1346 = vunpack.c.h.b16 %v110
  %v1347 = vunpack.c.l.b16 %v111
  %v1348 = vunpack.c.h.b16 %v111
  %v1349 = vunpack.c.l.b16 %v112
  %v1350 = vunpack.c.h.b16 %v112
  %v1351 = vunpack.c.l.b16 %v113
  %v1352 = vunpack.c.h.b16 %v113
  %v1353 = vunpack.c.l.b16 %v114
  %v1354 = vunpack.c.h.b16 %v114
  %v1355 = vunpack.c.l.b16 %v115
  %v1356 = vunpack.c.h.b16 %v115
  %v1357 = vunpack.c.l.b16 %v116
  %v1358 = vunpack.c.h.b16 %v116
  %v1359 = vunpack.c.l.b16 %v117
  %v1360 = vunpack.c.h.b16 %v117
  %v1361 = vunpack.c.l.b16 %v118
  %v1362 = vunpack.c.h.b16 %v118
  %v1363 = vunpack.c.l.b16 %v119
  %v1364 = vunpack.c.h.b16 %v119
  %v1365 = vunpack.c.l.b16 %v120
  %v1366 = vunpack.c.h.b16 %v120
  %v1367 = vunpack.c.l.b16 %v121
  %v1368 = vunpack.c.h.b16 %v121
  %v1369 = vunpack.c.l.b16 %v122
  %v1370 = vunpack.c.h.b16 %v122
  %v1371 = vunpack.c.l.b16 %v123
  %v1372 = vunpack.c.h.b16 %v123
  %v1373 = vunpack.c.l.b16 %v124
  %v1374 = vunpack.c.h.b16 %v124
  %v1375 = vunpack.c.l.b16 %v125
  %v1376 = vunpack.c.h.b16 %v125
  %v1377 = vunpack.c.l.b16 %v126
  %v1378 = vunpack.c.h.b16 %v126
  %v1379 = vunpack.c.l.b16 %v127
  %v1380 = vunpack.c.h.b16 %v127
  %v1381 = vunpack.c.l.b16 %v128
  %v1382 = vunpack.c.h.b16 %v128
  %v1383 = vunpack.c.l.b16 %v129
  %v1384 = vunpack.c.h.b16 %v129
  %v1385 = vunpack.c.l.b16 %v130
  %v1386 = vunpack.c.h.b16 %v130
  %v1387 = vunpack.c.l.b16 %v131
  %v1388 = vunpack.c.h.b16 %v131
  %v1389 = vunpack.c.l.b16 %v132
  %v1390 = vunpack.c.h.b16 %v132
  %v1391 = vunpack.c.l.b16 %v133
  %v1392 = vunpack.c.h.b16 %v133
  %v1393 = vunpack.c.l.b16 %v134
  %v1394 = vunpack.c.h.b16 %v134
  %v1395 = vunpack.c.l.b16 %v135
  %v1396 = vunpack.c.h.b16 %v135
  %v1397 = vunpack.c.l.b16 %v136
  %v1398 = vunpack.c.h.b16 %v136
  %v1399 = vunpack.c.l.b16 %v137
  %v1400 = vunpack.c.h.b16 %v137
  %v1401 = vunpack.c.l.b16 %v138
  %v1402 = vunpack.c.h.b16 %v138
  %v1403 = vunpack.c.l.b16 %v139
  %v1404 = vunpack.c.h.b16 %v139
  %v1405 = vunpack.c.l.b16 %v140
  %v1406 = vunpack.c.h.b16 %v140
  %v1407 = vunpack.c.l.b16 %v141
  %v1408 = vunpack.c.h.b16 %v141
  %v1409 = vunpack.c.l.b16 %v142
  %v1410 = vunpack.c.h.b16 %v142
  %v1411 = vunpack.c.l.b16 %v143
  %v1412 = vunpack.c.h.b16 %v143
  %v1413 = vunpack.c.l.b16 %v144
  %v1414 = vunpack.c.h.b16 %v144
  %v1415 = vunpack.c.l.b16 %v145
  %v1416 = vunpack.c.h.b16 %v145
  %v1417 = vunpack.c.l.b16 %v146
  %v1418 = vunpack.c.h.b16 %v146
  %v1419 = vunpack.c.l.b16 %v147
  %v1420 = vunpack.c.h.b16 %v147
  %v1421 = vunpack.c.l.b16 %v148
  %v1422 = vunpack.c.h.b16 %v148
  %v1423 = vunpack.c.l.b16 %v149
  %v1424 = vunpack.c.h.b16 %v149
  %v1425 = vunpack.c.l.b16 %v150
  %v1426 = vunpack.c.h.b16 %v150
  %v1427 = vunpack.c.l.b16 %v151
  %v1428 = vunpack.c.h.b16 %v151
  %v1429 = vunpack.c.l.b16 %v152
  %v1430 = vunpack.c.h.b16 %v152
  %v1431 = vunpack.c.l.b16 %v153
  %v1432 = vunpack.c.h.b16 %v153
  %v1433 = vunpack.c.l.b16 %v154
  %v1434 = vunpack.c.h.b16 %v154
  %v1435 = vunpack.c.l.b16 %v155
  %v1436 = vunpack.c.h.b16 %v155
  %v1437 = vunpack.c.l.b16 %v156
  %v1438 = vunpack.c.h.b16 %v156
  %v1439 = vunpack.c.l.b16 %v157
  %v1440 = vunpack.c.h.b16 %v157
  %v1441 = vunpack.c.l.b16 %v158
  %v1442 = vunpack.c.h.b16 %v158
  %v1443 = vunpack.c.l.b16 %v159
  %v1444 = vunpack.c.h.b16 %v159
  %v1445 = vunpack.c.l.b16 %v160
  %v1446 = vunpack.c.h.b16 %v160
  %v1447 = vunpack.c.l.b16 %v161
  %v1448 = vunpack.c.h.b16 %v161
  %v1449 = vunpack.c.l.b16 %v162
  %v1450 = vunpack.c.h.b16 %v162
  %v1451 = vunpack.c.l.b16 %v163
  %v1452 = vunpack.c.h.b16 %v163
  %v1453 = vunpack.c.l.b16 %v164
  %v1454 = vunpack.c.h.b16 %v164
  %v1455 = vunpack.c.l.b16 %v165
  %v1456 = vunpack.c.h.b16 %v165
  %v1457 = vunpack.c.l.b16 %v166
  %v1458 = vunpack.c.h.b16 %v166
  %v1459 = vunpack.c.l.b16 %v167
  %v1460 = vunpack.c.h.b16 %v167
  %v1461 = vunpack.c.l.b16 %v168
  %v1462 = vunpack.c.h.b16 %v168
  %v1463 = vunpack.c.l.b16 %v169
  %v1464 = vunpack.c.h.b16 %v169
  %v1465 = vunpack.c.l.b16 %v170
  %v1466 = vunpack.c.h.b16 %v170
  %v1467 = vunpack.c.l.b16 %v171
  %v1468 = vunpack.c.h.b16 %v171
  %v1469 = vunpack.c.l.b16 %v172
  %v1470 = vunpack.c.h.b16 %v172
  %v1471 = vunpack.c.l.b16 %v173
  %v1472 = vunpack.c.h.b16 %v173
  %v1473 = vunpack.c.l.b16 %v174
  %v1474 = vunpack.c.h.b16 %v174
  %v1475 = vunpack.c.l.b16 %v175
  %v1476 = vunpack.c.h.b16 %v175
  %v1477 = vunpack.c.l.b16 %v176
  %v1478 = vunpack.c.h.b16 %v176
  %v1479 = vunpack.c.l.b16 %v177
  %v1480 = vunpack.c.h.b16 %v177
  %v1481 = vunpack.c.l.b16 %v178
  %v1482 = vunpack.c.h.b16 %v178
  %v1483 = vunpack.c.l.b16 %v179
  %v1484 = vunpack.c.h.b16 %v179
  %v1485 = vunpack.c.l.b16 %v180
  %v1486 = vunpack.c.h.b16 %v180
  %v1487 = vunpack.c.l.b16 %v181
  %v1488 = vunpack.c.h.b16 %v181
  %v1489 = vunpack.c.l.b16 %v182
  %v1490 = vunpack.c.h.b16 %v182
  %v1491 = vunpack.c.l.b16 %v183
  %v1492 = vunpack.c.h.b16 %v183
  %v1493 = vunpack.c.l.b16 %v184
  %v1494 = vunpack.c.h.b16 %v184
  %v1495 = vunpack.c.l.b16 %v185
  %v1496 = vunpack.c.h.b16 %v185
  %v1497 = vunpack.c.l.b16 %v186
  %v1498 = vunpack.c.h.b16 %v186
  %v1499 = vunpack.c.l.b16 %v187
  %v1500 = vunpack.c.h.b16 %v187
  %v1501 = vunpack.c.l.b16 %v188
  %v1502 = vunpack.c.h.b16 %v188
  %v1503 = vunpack.c.l.b16 %v189
  %v1504 = vunpack.c.h.b16 %v189
  %v1505 = vunpack.c.l.b16 %v190
  %v1506 = vunpack.c.h.b16 %v190
  %v1507 = vunpack.c.l.b16 %v191
  %v1508 = vunpack.c.h.b16 %v191
  %v1509 = vunpack.c.l.b16 %v192
  %v1510 = vunpack.c.h.b16 %v192
  %v1511 = vunpack.c.l.b16 %v193
  %v1512 = vunpack.c.h.b16 %v193
  %v1513 = vunpack.c.l.b16 %v194
  %v1514 = vunpack.c.h.b16 %v194
  %v1515 = vunpack.c.l.b16 %v195
  %v1516 = vunpack.c.h.b16 %v195
  %v1517 = vunpack.c.l.b16 %v196
  %v1518 = vunpack.c.h.b16 %v196
  %v1519 = vunpack.c.l.b16 %v197
  %v1520 = vunpack.c.h.b16 %v197
  %v1521 = vunpack.c.l.b16 %v198
  %v1522 = vunpack.c.h.b16 %v198
  %v1523 = vunpack.c.l.b16 %v199
  %v1524 = vunpack.c.h.b16 %v199
  %v1525 = vunpack.c.l.b16 %v200
  %v1526 = vunpack.c.h.b16 %v200
  %v1527 = vunpack.c.l.b16 %v201
  %v1528 = vunpack.c.h.b16 %v201
  %v1529 = vunpack.c.l.b16 %v202
  %v1530 = vunpack.c.h.b16 %v202
  %v1531 = vunpack.c.l.b16 %v203
  %v1532 = vunpack.c.h.b16 %v203
  %v1533 = vunpack.c.l.b16 %v204
  %v1534 = vunpack.c.h.b16 %v204
  %v1535 = vunpack.c.l.b16 %v205
  %v1536 = vunpack.c.h.b16 %v205
  %v1537 = vunpack.c.l.b16 %v206
  %v1538 = vunpack.c.h.b16 %v206
  %v1539 = vunpack.c.l.b16 %v207
  %v1540 = vunpack.c.h.b16 %v207
  %v1541 = vunpack.c.l.b16 %v208
  %v1542 = vunpack.c.h.b16 %v208
  %v1543 = vunpack.c.l.b16 %v209
  %v1544 = vunpack.c.h.b16 %v209
  %v1545 = vunpack.c.l.b16 %v210
  %v1546 = vunpack.c.h.b16 %v210
  %v1547 = vunpack.c.l.b16 %v211
  %v1548 = vunpack.c.h.b16 %v211
  %v1549 = vunpack.c.l.b16 %v212
  %v1550 = vunpack.c.h.b16 %v212
  %v1551 = vunpack.c.l.b16 %v213
  %v1552 = vunpack.c.h.b16 %v213
  %v1553 = vunpack.c.l.b16 %v214
  %v1554 = vunpack.c.h.b16 %v214
  %v1555 = vunpack.c.l.b16 %v215
  %v1556 = vunpack.c.h.b16 %v215
  %v1557 = vunpack.c.l.b16 %v216
  %v1558 = vunpack.c.h.b16 %v216
  %v1559 = vunpack.c.l.b16 %v217
  %v1560 = vunpack.c.h.b16 %v217
  %v1561 = vunpack.c.l.b16 %v218
  %v1562 = vunpack.c.h.b16 %v218
  %v1563 = vunpack.c.l.b16 %v219
  %v1564 = vunpack.c.h.b16 %v219
  %v1565 = vunpack.c.l.b16 %v220
  %v1566 = vunpack.c.h.b16 %v220
  %v1567 = vunpack.c.l.b16 %v221
  %v1568 = vunpack.c.h.b16 %v221
  %v1569 = vunpack.c.l.b16 %v222
  %v1570 = vunpack.c.h.b16 %v222
  %v1571 = vunpack.c.l.b16 %v223
  %v1572 = vunpack.c.h.b16 %v223
  %v1573 = vunpack.c.l.b16 %v224
  %v1574 = vunpack.c.h.b16 %v224
  %v1575 = vunpack.c.l.b16 %v225
  %v1576 = vunpack.c.h.b16 %v225
  %v1577 = vunpack.c.l.b16 %v226
  %v1578 = vunpack.c.h.b16 %v226
  %v1579 = vunpack.c.l.b16 %v227
  %v1580 = vunpack.c.h.b16 %v227
  %v1581 = vunpack.c.l.b16 %v228
  %v1582 = vunpack.c.h.b16 %v228
  %v1583 = vunpack.c.l.b16 %v229
  %v1584 = vunpack.c.h.b16 %v229
  %v1585 = vunpack.c.l.b16 %v230
  %v1586 = vunpack.c.h.b16 %v230
  %v1587 = vunpack.c.l.b16 %v231
  %v1588 = vunpack.c.h.b16 %v231
  %v1589 = vunpack.c.l.b16 %v232
  %v1590 = vunpack.c.h.b16 %v232
  %v1591 = vunpack.c.l.b16 %v233
  %v1592 = vunpack.c.h.b16 %v233
  %v1593 = vunpack.c.l.b16 %v234
  %v1594 = vunpack.c.h.b16 %v234
  %v1595 = vunpack.c.l.b16 %v235
  %v1596 = vunpack.c.h.b16 %v235
  %v1597 = vunpack.c.l.b16 %v236
  %v1598 = vunpack.c.h.b16 %v236
  %v1599 = vunpack.c.l.b16 %v237
  %v1600 = vunpack.c.h.b16 %v237
  %v1601 = vunpack.c.l.b16 %v238
  %v1602 = vunpack.c.h.b16 %v238
  %v1603 = vunpack.c.l.b16 %v239
  %v1604 = vunpack.c.h.b16 %v239
  %v1605 = vunpack.c.l.b16 %v240
  %v1606 = vunpack.c.h.b16 %v240
  %v1607 = vunpack.c.l.b16 %v241
  %v1608 = vunpack.c.h.b16 %v241
  %v1609 = vunpack.c.l.b16 %v242
  %v1610 = vunpack.c.h.b16 %v242
  %v1611 = vunpack.c.l.b16 %v243
  %v1612 = vunpack.c.h.b16 %v243
  %v1613 = vunpack.c.l.b16 %v244
  %v1614 = vunpack.c.h.b16 %v244
  %v1615 = vunpack.c.l.b16 %v245
  %v1616 = vunpack.c.h.b16 %v245
  %v1617 = vunpack.c.l.b16 %v246
  %v1618 = vunpack.c.h.b16 %v246
  %v1619 = vunpack.c.l.b16 %v247
  %v1620 = vunpack.c.h.b16 %v247
  %v1621 = vunpack.c.l.b16 %v248
  %v1622 = vunpack.c.h.b16 %v248
  %v1623 = vunpack.c.l.b16 %v249
  %v1624 = vunpack.c.h.b16 %v249
  %v1625 = vunpack.c.l.b16 %v250
  %v1626 = vunpack.c.h.b16 %v250
  %v1627 = vunpack.c.l.b16 %v251
  %v1628 = vunpack.c.h.b16 %v251
  %v1629 = vunpack.c.l.b16 %v252
  %v1630 = vunpack.c.h.b16 %v252
  %v1631 = vunpack.c.l.b16 %v253
  %v1632 = vunpack.c.h.b16 %v253
  %v1633 = vunpack.c.l.b16 %v254
  %v1634 = vunpack.c.h.b16 %v254
  %v1635 = vunpack.c.l.b16 %v255
  %v1636 = vunpack.c.h.b16 %v255
  %v1637 = vunpack.c.l.b16 %v256
  %v1638 = vunpack.c.h.b16 %v256
  %v1639 = vunpack.c.l.b16 %v257
  %v1640 = vunpack.c.h.b16 %v257
  %v1641 = vunpack.c.l.b16 %v258
  %v1642 = vunpack.c.h.b16 %v258
  %v1643 = vunpack.c.l.b16 %v259
  %v1644 = vunpack.c.h.b16 %v259
  %v1645 = vunpack.c.l.b16 %v260
  %v1646 = vunpack.c.h.b16 %v260
  %v1647 = vunpack.c.l.b16 %v261
  %v1648 = vunpack.c.h.b16 %v261
  %v1649 = vunpack.c.l.b16 %v262
  %v1650 = vunpack.c.h.b16 %v262
  %v1651 = vunpack.c.l.b16 %v263
  %v1652 = vunpack.c.h.b16 %v263
  %v1653 = vunpack.c.l.b16 %v264
  %v1654 = vunpack.c.h.b16 %v264
  %v1655 = vunpack.c.l.b16 %v265
  %v1656 = vunpack.c.h.b16 %v265
  %v1657 = vunpack.c.l.b16 %v266
  %v1658 = vunpack.c.h.b16 %v266
  %v1659 = vunpack.c.l.b16 %v267
  %v1660 = vunpack.c.h.b16 %v267
  %v1661 = vunpack.c.l.b16 %v268
  %v1662 = vunpack.c.h.b16 %v268
  %v1663 = vunpack.c.l.b16 %v269
  %v1664 = vunpack.c.h.b16 %v269
  %v1665 = vunpack.c.l.b16 %v270
  %v1666 = vunpack.c.h.b16 %v270
  %v1667 = vunpack.c.l.b16 %v271
  %v1668 = vunpack.c.h.b16 %v271
  %v1669 = vunpack.c.l.b16 %v272
  %v1670 = vunpack.c.h.b16 %v272
  %v1671 = vunpack.c.l.b16 %v273
  %v1672 = vunpack.c.h.b16 %v273
  %v1673 = vunpack.c.l.b16 %v274
  %v1674 = vunpack.c.h.b16 %v274
  %v1675 = vunpack.c.l.b16 %v275
  %v1676 = vunpack.c.h.b16 %v275
  %v1677 = vunpack.c.l.b16 %v276
  %v1678 = vunpack.c.h.b16 %v276
  %v1679 = vunpack.c.l.b16 %v277
  %v1680 = vunpack.c.h.b16 %v277
  %v1681 = vunpack.c.l.b16 %v278
  %v1682 = vunpack.c.h.b16 %v278
  %v1683 = vunpack.c.l.b16 %v279
  %v1684 = vunpack.c.h.b16 %v279
  %v1685 = vunpack.c.l.b16 %v280
  %v1686 = vunpack.c.h.b16 %v280
  %v1687 = vunpack.c.l.b16 %v281
  %v1688 = vunpack.c.h.b16 %v281
  %v1689 = vunpack.c.l.b16 %v282
  %v1690 = vunpack.c.h.b16 %v282
  %v1691 = vunpack.c.l.b16 %v283
  %v1692 = vunpack.c.h.b16 %v283
  %v1693 = vunpack.c.l.b16 %v284
  %v1694 = vunpack.c.h.b16 %v284
  %v1695 = vunpack.c.l.b16 %v285
  %v1696 = vunpack.c.h.b16 %v285
  %v1697 = vunpack.c.l.b16 %v286
  %v1698 = vunpack.c.h.b16 %v286
  %v1699 = vunpack.c.l.b16 %v287
  %v1700 = vunpack.c.h.b16 %v287
  %v1701 = vunpack.c.l.b16 %v288
  %v1702 = vunpack.c.h.b16 %v288
  %v1703 = vunpack.c.l.b16 %v289
  %v1704 = vunpack.c.h.b16 %v289
  %v1705 = vunpack.c.l.b16 %v290
  %v1706 = vunpack.c.h.b16 %v290
  %v1707 = vunpack.c.l.b16 %v291
  %v1708 = vunpack.c.h.b16 %v291
  %v1709 = vunpack.c.l.b16 %v292
  %v1710 = vunpack.c.h.b16 %v292
  %v1711 = vunpack.c.l.b16 %v293
  %v1712 = vunpack.c.h.b16 %v293
  %v1713 = vunpack.c.l.b16 %v294
  %v1714 = vunpack.c.h.b16 %v294
  %v1715 = vunpack.c.l.b16 %v295
  %v1716 = vunpack.c.h.b16 %v295
  %v1717 = vunpack.c.l.b16 %v296
  %v1718 = vunpack.c.h.b16 %v296
  %v1719 = vunpack.c.l.b16 %v297
  %v1720 = vunpack.c.h.b16 %v297
  %v1721 = vunpack.c.l.b16 %v298
  %v1722 = vunpack.c.h.b16 %v298
  %v1723 = vunpack.c.l.b16 %v299
  %v1724 = vunpack.c.h.b16 %v299
  %v1725 = vunpack.c.l.b16 %v300
  %v1726 = vunpack.c.h.b16 %v300
  %v1727 = vunpack.c.l.b16 %v301
  %v1728 = vunpack.c.h.b16 %v301
  %v1729 = vunpack.c.l.b16 %v302
  %v1730 = vunpack.c.h.b16 %v302
  %v1731 = vunpack.c.l.b16 %v303
  %v1732 = vunpack.c.h.b16 %v303
  %v1733 = vunpack.c.l.b16 %v304
  %v1734 = vunpack.c.h.b16 %v304
  %v1735 = vunpack.c.l.b16 %v305
  %v1736 = vunpack.c.h.b16 %v305
  %v1737 = vunpack.c.l.b16 %v306
  %v1738 = vunpack.c.h.b16 %v306
  %v1739 = vunpack.c.l.b16 %v307
  %v1740 = vunpack.c.h.b16 %v307
  %v1741 = vunpack.c.l.b16 %v308
  %v1742 = vunpack.c.h.b16 %v308
  %v1743 = vunpack.c.l.b16 %v309
  %v1744 = vunpack.c.h.b16 %v309
  %v1745 = vunpack.c.l.b16 %v310
  %v1746 = vunpack.c.h.b16 %v310
  %v1747 = vunpack.c.l.b16 %v311
  %v1748 = vunpack.c.h.b16 %v311
  %v1749 = vunpack.c.l.b16 %v312
  %v1750 = vunpack.c.h.b16 %v312
  %v1751 = vunpack.c.l.b16 %v313
  %v1752 = vunpack.c.h.b16 %v313
  %v1753 = vunpack.c.l.b16 %v314
  %v1754 = vunpack.c.h.b16 %v314
  %v1755 = vunpack.c.l.b16 %v315
  %v1756 = vunpack.c.h.b16 %v315
  %v1757 = vunpack.c.l.b16 %v316
  %v1758 = vunpack.c.h.b16 %v316
  %v1759 = vunpack.c.l.b16 %v317
  %v1760 = vunpack.c.h.b16 %v317
  %v1761 = vunpack.c.l.b16 %v318
  %v1762 = vunpack.c.h.b16 %v318
  %v1763 = vunpack.c.l.b16 %v319
  %v1764 = vunpack.c.h.b16 %v319
  %v1765 = vunpack.c.l.b16 %v320
  %v1766 = vunpack.c.h.b16 %v320
  %v1767 = vunpack.c.l.b16 %v321
  %v1768 = vunpack.c.h.b16 %v321
  %v1769 = vunpack.c.l.b16 %v322
  %v1770 = vunpack.c.h.b16 %v322
  %v1771 = vunpack.c.l.b16 %v323
  %v1772 = vunpack.c.h.b16 %v323
  %v1773 = vunpack.c.l.b16 %v324
  %v1774 = vunpack.c.h.b16 %v324
  %v1775 = vunpack.c.l.b16 %v325
  %v1776 = vunpack.c.h.b16 %v325
  %v1777 = vunpack.c.l.b16 %v326
  %v1778 = vunpack.c.h.b16 %v326
  %v1779 = vunpack.c.l.b16 %v327
  %v1780 = vunpack.c.h.b16 %v327
  %v1781 = vunpack.c.l.b16 %v328
  %v1782 = vunpack.c.h.b16 %v328
  %v1783 = vunpack.c.l.b16 %v329
  %v1784 = vunpack.c.h.b16 %v329
  %v1785 = vunpack.c.l.b16 %v330
  %v1786 = vunpack.c.h.b16 %v330
  %v1787 = vunpack.c.l.b16 %v331
  %v1788 = vunpack.c.h.b16 %v331
  %v1789 = vunpack.c.l.b16 %v332
  %v1790 = vunpack.c.h.b16 %v332
  %v1791 = vunpack.c.l.b16 %v333
  %v1792 = vunpack.c.h.b16 %v333
  %v1793 = vunpack.c.l.b16 %v334
  %v1794 = vunpack.c.h.b16 %v334
  %v1795 = vunpack.c.l.b16 %v335
  %v1796 = vunpack.c.h.b16 %v335
  %v1797 = vunpack.c.l.b16 %v336
  %v1798 = vunpack.c.h.b16 %v336
  %v1799 = vunpack.c.l.b16 %v337
  %v1800 = vunpack.c.h.b16 %v337
  %v1801 = vunpack.c.l.b16 %v338
  %v1802 = vunpack.c.h.b16 %v338
  %v1803 = vunpack.c.l.b16 %v339
  %v1804 = vunpack.c.h.b16 %v339
  %v1805 = vunpack.c.l.b16 %v340
  %v1806 = vunpack.c.h.b16 %v340
  %v1807 = vunpack.c.l.b16 %v341
  %v1808 = vunpack.c.h.b16 %v341
  %v1809 = vunpack.c.l.b16 %v342
  %v1810 = vunpack.c.h.b16 %v342
  %v1811 = vunpack.c.l.b16 %v343
  %v1812 = vunpack.c.h.b16 %v343
  %v1813 = vunpack.c.l.b16 %v344
  %v1814 = vunpack.c.h.b16 %v344
  %v1815 = vunpack.c.l.b16 %v345
  %v1816 = vunpack.c.h.b16 %v345
  %v1817 = vunpack.c.l.b16 %v346
  %v1818 = vunpack.c.h.b16 %v346
  %v1819 = vunpack.c.l.b16 %v347
  %v1820 = vunpack.c.h.b16 %v347
  %v1821 = vunpack.c.l.b16 %v348
  %v1822 = vunpack.c.h.b16 %v348
  %v1823 = vunpack.c.l.b16 %v349
  %v1824 = vunpack.c.h.b16 %v349
  %v1825 = vunpack.c.l.b16 %v350
  %v1826 = vunpack.c.h.b16 %v350
  %v1827 = vunpack.c.l.b16 %v351
  %v1828 = vunpack.c.h.b16 %v351
  %v1829 = vunpack.c.l.b16 %v352
  %v1830 = vunpack.c.h.b16 %v352
  %v1831 = vunpack.c.l.b16 %v353
  %v1832 = vunpack.c.h.b16 %v353
  %v1833 = vunpack.c.l.b16 %v354
  %v1834 = vunpack.c.h.b16 %v354
  %v1835 = vunpack.c.l.b16 %v355
  %v1836 = vunpack.c.h.b16 %v355
  %v1837 = vunpack.c.l.b16 %v356
  %v1838 = vunpack.c.h.b16 %v356
  %v1839 = vunpack.c.l.b16 %v357
  %v1840 = vunpack.c.h.b16 %v357
  %v1841 = vunpack.c.l.b16 %v358
  %v1842 = vunpack.c.h.b16 %v358
  %v1843 = vunpack.c.l.b16 %v359
  %v1844 = vunpack.c.h.b16 %v359
  %v1845 = vunpack.c.l.b16 %v360
  %v1846 = vunpack.c.h.b16 %v360
  %v1847 = vunpack.c.l.b16 %v361
  %v1848 = vunpack.c.h.b16 %v361
  %v1849 = vunpack.c.l.b16 %v362
  %v1850 = vunpack.c.h.b16 %v362
  %v1851 = vunpack.c.l.b16 %v363
  %v1852 = vunpack.c.h.b16 %v363
  %v1853 = vunpack.c.l.b16 %v364
  %v1854 = vunpack.c.h.b16 %v364
  %v1855 = vunpack.c.l.b16 %v365
  %v1856 = vunpack.c.h.b16 %v365
  %v1857 = vunpack.c.l.b16 %v366
  %v1858 = vunpack.c.h.b16 %v366
  %v1859 = vunpack.c.l.b16 %v367
  %v1860 = vunpack.c.h.b16 %v367
  %v1861 = vunpack.c.l.b16 %v368
  %v1862 = vunpack.c.h.b16 %v368
  %v1863 = vunpack.c.l.b16 %v369
  %v1864 = vunpack.c.h.b16 %v369
  %v1865 = vunpack.c.l.b16 %v370
  %v1866 = vunpack.c.h.b16 %v370
  %v1867 = vunpack.c.l.b16 %v371
  %v1868 = vunpack.c.h.b16 %v371
  %v1869 = vunpack.c.l.b16 %v372
  %v1870 = vunpack.c.h.b16 %v372
  %v1871 = vunpack.c.l.b16 %v373
  %v1872 = vunpack.c.h.b16 %v373
  %v1873 = vunpack.c.l.b16 %v374
  %v1874 = vunpack.c.h.b16 %v374
  %v1875 = vunpack.c.l.b16 %v375
  %v1876 = vunpack.c.h.b16 %v375
  %v1877 = vunpack.c.l.b16 %v376
  %v1878 = vunpack.c.h.b16 %v376
  %v1879 = vunpack.c.l.b16 %v377
  %v1880 = vunpack.c.h.b16 %v377
  %v1881 = vunpack.c.l.b16 %v378
  %v1882 = vunpack.c.h.b16 %v378
  %v1883 = vunpack.c.l.b16 %v379
  %v1884 = vunpack.c.h.b16 %v379
  %v1885 = vunpack.c.l.b16 %v380
  %v1886 = vunpack.c.h.b16 %v380
  %v1887 = vunpack.c.l.b16 %v381
  %v1888 = vunpack.c.h.b16 %v381
  %v1889 = vunpack.c.l.b16 %v382
  %v1890 = vunpack.c.h.b16 %v382
  %v1891 = vunpack.c.l.b16 %v383
  %v1892 = vunpack.c.h.b16 %v383
  %v1893 = vunpack.c.l.b16 %v384
  %v1894 = vunpack.c.h.b16 %v384
  %v1895 = vunpack.c.l.b16 %v385
  %v1896 = vunpack.c.h.b16 %v385
  %v1897 = vunpack.c.l.b16 %v386
  %v1898 = vunpack.c.h.b16 %v386
  %v1899 = vunpack.c.l.b16 %v387
  %v1900 = vunpack.c.h.b16 %v387
  %v1901 = vunpack.c.l.b16 %v388
  %v1902 = vunpack.c.h.b16 %v388
  %v1903 = vunpack.c.l.b16 %v389
  %v1904 = vunpack.c.h.b16 %v389
  %v1905 = vunpack.c.l.b16 %v390
  %v1906 = vunpack.c.h.b16 %v390
  %v1907 = vunpack.c.l.b16 %v391
  %v1908 = vunpack.c.h.b16 %v391
  %v1909 = vunpack.c.l.b16 %v392
  %v1910 = vunpack.c.h.b16 %v392
  %v1911 = vunpack.c.l.b16 %v393
  %v1912 = vunpack.c.h.b16 %v393
  %v1913 = vunpack.c.l.b16 %v394
  %v1914 = vunpack.c.h.b16 %v394
  %v1915 = vunpack.c.l.b16 %v395
  %v1916 = vunpack.c.h.b16 %v395
  %v1917 = vunpack.c.l.b16 %v396
  %v1918 = vunpack.c.h.b16 %v396
  %v1919 = vunpack.c.l.b16 %v397
  %v1920 = vunpack.c.h.b16 %v397
  %v1921 = vunpack.c.l.b16 %v398
  %v1922 = vunpack.c.h.b16 %v398
  %v1923 = vunpack.c.l.b16 %v399
  %v1924 = vunpack.c.h.b16 %v399
  %v1925 = vunpack.c.l.b16 %v400
  %v1926 = vunpack.c.h.b16 %v400
  %v1927 = vunpack.c.l.b16 %v401
  %v1928 = vunpack.c.h.b16 %v401
  %v1929 = vunpack.c.l.b16 %v402
  %v1930 = vunpack.c.h.b16 %v402
  %v1931 = vunpack.c.l.b16 %v403
  %v1932 = vunpack.c.h.b16 %v403
  %v1933 = vunpack.c.l.b16 %v404
  %v1934 = vunpack.c.h.b16 %v404
  %v1935 = vunpack.c.l.b16 %v405
  %v1936 = vunpack.c.h.b16 %v405
  %v1937 = vunpack.c.l.b16 %v406
  %v1938 = vunpack.c.h.b16 %v406
  %v1939 = vunpack.c.l.b16 %v407
  %v1940 = vunpack.c.h.b16 %v407
  %v1941 = vunpack.c.l.b16 %v408
  %v1942 = vunpack.c.h.b16 %v408
  %v1943 = vunpack.c.l.b16 %v409
  %v1944 = vunpack.c.h.b16 %v409
  %v1945 = vunpack.c.l.b16 %v410
  %v1946 = vunpack.c.h.b16 %v410
  %v1947 = vunpack.c.l.b16 %v411
  %v1948 = vunpack.c.h.b16 %v411
  %v1949 = vunpack.c.l.b16 %v412
  %v1950 = vunpack.c.h.b16 %v412
  %v1951 = vunpack.c.l.b16 %v413
  %v1952 = vunpack.c.h.b16 %v413
  %v1953 = vunpack.c.l.b16 %v414
  %v1954 = vunpack.c.h.b16 %v414
  %v1955 = vunpack.c.l.b16 %v415
  %v1956 = vunpack.c.h.b16 %v415
  %v1957 = vunpack.c.l.b16 %v416
  %v1958 = vunpack.c.h.b16 %v416
  %v1959 = vunpack.c.l.b16 %v417
  %v1960 = vunpack.c.h.b16 %v417
  %v1961 = vunpack.c.l.b16 %v418
  %v1962 = vunpack.c.h.b16 %v418
  %v1963 = vunpack.c.l.b16 %v419
  %v1964 = vunpack.c.h.b16 %v419
  %v1965 = vunpack.c.l.b16 %v420
  %v1966 = vunpack.c.h.b16 %v420
  %v1967 = vunpack.c.l.b16 %v421
  %v1968 = vunpack.c.h.b16 %v421
  %v1969 = vunpack.c.l.b16 %v422
  %v1970 = vunpack.c.h.b16 %v422
  %v1971 = vunpack.c.l.b16 %v423
  %v1972 = vunpack.c.h.b16 %v423
  %v1973 = vunpack.c.l.b16 %v424
  %v1974 = vunpack.c.h.b16 %v424
  %v1975 = vunpack.c.l.b16 %v425
  %v1976 = vunpack.c.h.b16 %v425
  %v1977 = vunpack.c.l.b16 %v426
  %v1978 = vunpack.c.h.b16 %v426
  %v1979 = vunpack.c.l.b16 %v427
  %v1980 = vunpack.c.h.b16 %v427
  %v1981 = vunpack.c.l.b16 %v428
  %v1982 = vunpack.c.h.b16 %v428
  %v1983 = vunpack.c.l.b16 %v429
  %v1984 = vunpack.c.h.b16 %v429
  %v1985 = vunpack.c.l.b16 %v430
  %v1986 = vunpack.c.h.b16 %v430
  %v1987 = vunpack.c.l.b16 %v431
  %v1988 = vunpack.c.h.b16 %v431
  %v1989 = vunpack.c.l.b16 %v432
  %v1990 = vunpack.c.h.b16 %v432
  %v1991 = vunpack.c.l.b16 %v433
  %v1992 = vunpack.c.h.b16 %v433
  %v1993 = vunpack.c.l.b16 %v434
  %v1994 = vunpack.c.h.b16 %v434
  %v1995 = vunpack.c.l.b16 %v435
  %v1996 = vunpack.c.h.b16 %v435
  %v1997 = vunpack.c.l.b16 %v436
  %v1998 = vunpack.c.h.b16 %v436
  %v1999 = vunpack.c.l.b16 %v437
  %v2000 = vunpack.c.h.b16 %v437
  %v2001 = vunpack.c.l.b16 %v438
  %v2002 = vunpack.c.h.b16 %v438
  %v2003 = vunpack.c.l.b16 %v439
  %v2004 = vunpack.c.h.b16 %v439
  %v2005 = vunpack.c.l.b16 %v440
  %v2006 = vunpack.c.h.b16 %v440
  %v2007 = vunpack.c.l.b16 %v441
  %v2008 = vunpack.c.h.b16 %v441
  %v2009 = vunpack.c.l.b16 %v442
  %v2010 = vunpack.c.h.b16 %v442
  %v2011 = vunpack.c.l.b16 %v443
  %v2012 = vunpack.c.h.b16 %v443
  %v2013 = vunpack.c.l.b16 %v444
  %v2014 = vunpack.c.h.b16 %v444
  %v2015 = vunpack.c.l.b16 %v445
  %v2016 = vunpack.c.h.b16 %v445
  %v2017 = vunpack.c.l.b16 %v446
  %v2018 = vunpack.c.h.b16 %v446
  %v2019 = vunpack.c.l.b16 %v447
  %v2020 = vunpack.c.h.b16 %v447
  %v2021 = vunpack.c.l.b16 %v448
  %v2022 = vunpack.c.h.b16 %v448
  %v2023 = vunpack.c.l.b16 %v449
  %v2024 = vunpack.c.h.b16 %v449
  %v2025 = vunpack.c.l.b16 %v450
  %v2026 = vunpack.c.h.b16 %v450
  %v2027 = vunpack.c.l.b16 %v451
  %v2028 = vunpack.c.h.b16 %v451
  %v2029 = vunpack.c.l.b16 %v452
  %v2030 = vunpack.c.h.b16 %v452
  %v2031 = vunpack.c.l.b16 %v453
  %v2032 = vunpack.c.h.b16 %v453
  %v2033 = vunpack.c.l.b16 %v454
  %v2034 = vunpack.c.h.b16 %v454
  %v2035 = vunpack.c.l.b16 %v455
  %v2036 = vunpack.c.h.b16 %v455
  %v2037 = vunpack.c.l.b16 %v456
  %v2038 = vunpack.c.h.b16 %v456
  %v2039 = vunpack.c.l.b16 %v457
  %v2040 = vunpack.c.h.b16 %v457
  %v2041 = vunpack.c.l.b16 %v458
  %v2042 = vunpack.c.h.b16 %v458
  %v2043 = vunpack.c.l.b16 %v459
  %v2044 = vunpack.c.h.b16 %v459
  %v2045 = vunpack.c.l.b16 %v460
  %v2046 = vunpack.c.h.b16 %v460
  %v2047 = vunpack.c.l.b16 %v461
  %v2048 = vunpack.c.h.b16 %v461
  %v2049 = vunpack.c.l.b16 %v462
  %v2050 = vunpack.c.h.b16 %v462
  %v2051 = vunpack.c.l.b16 %v463
  %v2052 = vunpack.c.h.b16 %v463
  %v2053 = vunpack.c.l.b16 %v464
  %v2054 = vunpack.c.h.b16 %v464
  %v2055 = vunpack.c.l.b16 %v465
  %v2056 = vunpack.c.h.b16 %v465
  %v2057 = vunpack.c.l.b16 %v466
  %v2058 = vunpack.c.h.b16 %v466
  %v2059 = vunpack.c.l.b16 %v467
  %v2060 = vunpack.c.h.b16 %v467
  %v2061 = vunpack.c.l.b16 %v468
  %v2062 = vunpack.c.h.b16 %v468
  %v2063 = vunpack.c.l.b16 %v469
  %v2064 = vunpack.c.h.b16 %v469
  %v2065 = vunpack.c.l.b16 %v470
  %v2066 = vunpack.c.h.b16 %v470
  %v2067 = vunpack.c.l.b16 %v471
  %v2068 = vunpack.c.h.b16 %v471
  %v2069 = vunpack.c.l.b16 %v472
  %v2070 = vunpack.c.h.b16 %v472
  %v2071 = vunpack.c.l.b16 %v473
  %v2072 = vunpack.c.h.b16 %v473
  %v2073 = vunpack.c.l.b16 %v474
  %v2074 = vunpack.c.h.b16 %v474
  %v2075 = vunpack.c.l.b16 %v475
  %v2076 = vunpack.c.h.b16 %v475
  %v2077 = vunpack.c.l.b16 %v476
  %v2078 = vunpack.c.h.b16 %v476
  %v2079 = vunpack.c.l.b16 %v477
  %v2080 = vunpack.c.h.b16 %v477
  %v2081 = vunpack.c.l.b16 %v478
  %v2082 = vunpack.c.h.b16 %v478
  %v2083 = vunpack.c.l.b16 %v479
  %v2084 = vunpack.c.h.b16 %v479
  %v2085 = vunpack.c.l.b16 %v480
  %v2086 = vunpack.c.h.b16 %v480
  %v2087 = vunpack.c.l.b16 %v481
  %v2088 = vunpack.c.h.b16 %v481
  %v2089 = vunpack.c.l.b16 %v482
  %v2090 = vunpack.c.h.b16 %v482
  %v2091 = vunpack.c.l.b16 %v483
  %v2092 = vunpack.c.h.b16 %v483
  %v2093 = vunpack.c.l.b16 %v484
  %v2094 = vunpack.c.h.b16 %v484
  %v2095 = vunpack.c.l.b16 %v485
  %v2096 = vunpack.c.h.b16 %v485
  %v2097 = vunpack.c.l.b16 %v486
  %v2098 = vunpack.c.h.b16 %v486
  %v2099 = vunpack.c.l.b16 %v487
  %v2100 = vunpack.c.h.b16 %v487
  %v2101 = vunpack.c.l.b16 %v488
  %v2102 = vunpack.c.h.b16 %v488
  %v2103 = vunpack.c.l.b16 %v489
  %v2104 = vunpack.c.h.b16 %v489
  %v2105 = vunpack.c.l.b16 %v490
  %v2106 = vunpack.c.h.b16 %v490
  %v2107 = vunpack.c.l.b16 %v491
  %v2108 = vunpack.c.h.b16 %v491
  %v2109 = vunpack.c.l.b16 %v492
  %v2110 = vunpack.c.h.b16 %v492
  %v2111 = vunpack.c.l.b16 %v493
  %v2112 = vunpack.c.h.b16 %v493
  %v2113 = vunpack.c.l.b16 %v494
  %v2114 = vunpack.c.h.b16 %v494
  %v2115 = vunpack.c.l.b16 %v495
  %v2116 = vunpack.c.h.b16 %v495
  %v2117 = vunpack.c.l.b16 %v496
  %v2118 = vunpack.c.h.b16 %v496
  %v2119 = vunpack.c.l.b16 %v497
  %v2120 = vunpack.c.h.b16 %v497
  %v2121 = vunpack.c.l.b16 %v498
  %v2122 = vunpack.c.h.b16 %v498
  %v2123 = vunpack.c.l.b16 %v499
  %v2124 = vunpack.c.h.b16 %v499
  %v2125 = vunpack.c.l.b16 %v500
  %v2126 = vunpack.c.h.b16 %v500
  %v2127 = vunpack.c.l.b16 %v501
  %v2128 = vunpack.c.h.b16 %v501
  %v2129 = vunpack.c.l.b16 %v502
  %v2130 = vunpack.c.h.b16 %v502
  %v2131 = vunpack.c.l.b16 %v503
  %v2132 = vunpack.c.h.b16 %v503
  %v2133 = vunpack.c.l.b16 %v504
  %v2134 = vunpack.c.h.b16 %v504
  %v2135 = vunpack.c.l.b16 %v505
  %v2136 = vunpack.c.h.b16 %v505
  %v2137 = vunpack.c.l.b16 %v506
  %v2138 = vunpack.c.h.b16 %v506
  %v2139 = vunpack.c.l.b16 %v507
  %v2140 = vunpack.c.h.b16 %v507
  %v2141 = vunpack.c.l.b16 %v508
  %v2142 = vunpack.c.h.b16 %v508
  %v2143 = vunpack.c.l.b16 %v509
  %v2144 = vunpack.c.h.b16 %v509
  %v2145 = vunpack.c.l.b16 %v510
  %v2146 = vunpack.c.h.b16 %v510
  %v2147 = vunpack.c.l.b16 %v511
  %v2148 = vunpack.c.h.b16 %v511
  %v2149 = vunpack.c.l.b16 %v512
  %v2150 = vunpack.c.h.b16 %v512
  %v2151 = vunpack.c.l.b16 %v513
  %v2152 = vunpack.c.h.b16 %v513
  %v2153 = vunpack.c.l.b16 %v514
  %v2154 = vunpack.c.h.b16 %v514
  %v2155 = vunpack.c.l.b16 %v515
  %v2156 = vunpack.c.h.b16 %v515
  %v2157 = vunpack.c.l.b16 %v516
  %v2158 = vunpack.c.h.b16 %v516
  %v2159 = vunpack.c.l.b16 %v517
  %v2160 = vunpack.c.h.b16 %v517
  %v2161 = vunpack.c.l.b16 %v518
  %v2162 = vunpack.c.h.b16 %v518
  %v2163 = vunpack.c.l.b16 %v519
  %v2164 = vunpack.c.h.b16 %v519
  %v2165 = vunpack.c.l.b16 %v520
  %v2166 = vunpack.c.h.b16 %v520
  %v2167 = vunpack.c.l.b16 %v521
  %v2168 = vunpack.c.h.b16 %v521
  %v2169 = vunpack.c.l.b16 %v522
  %v2170 = vunpack.c.h.b16 %v522
  %v2171 = vunpack.c.l.b16 %v523
  %v2172 = vunpack.c.h.b16 %v523
  %v2173 = vunpack.c.l.b16 %v524
  %v2174 = vunpack.c.h.b16 %v524
  %v2175 = vunpack.c.l.b16 %v525
  %v2176 = vunpack.c.h.b16 %v525
  %v2177 = vunpack.c.l.b16 %v526
  %v2178 = vunpack.c.h.b16 %v526
  %v2179 = vunpack.c.l.b16 %v527
  %v2180 = vunpack.c.h.b16 %v527
  %v2181 = vunpack.c.l.b16 %v528
  %v2182 = vunpack.c.h.b16 %v528
  %v2183 = vunpack.c.l.b16 %v529
  %v2184 = vunpack.c.h.b16 %v529
  %v2185 = vunpack.c.l.b16 %v530
  %v2186 = vunpack.c.h.b16 %v530
  %v2187 = vunpack.c.l.b16 %v531
  %v2188 = vunpack.c.h.b16 %v531
  %v2189 = vunpack.c.l.b16 %v532
  %v2190 = vunpack.c.h.b16 %v532
  %v2191 = vunpack.c.l.b16 %v533
  %v2192 = vunpack.c.h.b16 %v533
  %v2193 = vunpack.c.l.b16 %v534
  %v2194 = vunpack.c.h.b16 %v534
  %v2195 = vunpack.c.l.b16 %v535
  %v2196 = vunpack.c.h.b16 %v535
  %v2197 = vunpack.c.l.b16 %v536
  %v2198 = vunpack.c.h.b16 %v536
  %v2199 = vunpack.c.l.b16 %v537
  %v2200 = vunpack.c.h.b16 %v537
  %v2201 = vunpack.c.l.b16 %v538
  %v2202 = vunpack.c.h.b16 %v538
  %v2203 = vunpack.c.l.b16 %v539
  %v2204 = vunpack.c.h.b16 %v539
  %v2205 = vunpack.c.l.b16 %v540
  %v2206 = vunpack.c.h.b16 %v540
  %v2207 = vunpack.c.l.b16 %v541
  %v2208 = vunpack.c.h.b16 %v541
  %v2209 = vunpack.c.l.b16 %v542
  %v2210 = vunpack.c.h.b16 %v542
  %v2211 = vunpack.c.l.b16 %v543
  %v2212 = vunpack.c.h.b16 %v543
  %v2213 = vunpack.c.l.b16 %v544
  %v2214 = vunpack.c.h.b16 %v544
  %v2215 = vunpack.c.l.b16 %v545
  %v2216 = vunpack.c.h.b16 %v545
  %v2217 = vunpack.c.l.b16 %v546
  %v2218 = vunpack.c.h.b16 %v546
  %v2219 = vunpack.c.l.b16 %v547
  %v2220 = vunpack.c.h.b16 %v547
  %v2221 = vunpack.c.l.b16 %v548
  %v2222 = vunpack.c.h.b16 %v548
  %v2223 = vunpack.c.l.b16 %v549
  %v2224 = vunpack.c.h.b16 %v549
  %v2225 = vunpack.c.l.b16 %v550
  %v2226 = vunpack.c.h.b16 %v550
  %v2227 = vunpack.c.l.b16 %v551
  %v2228 = vunpack.c.h.b16 %v551
  %v2229 = vunpack.c.l.b16 %v552
  %v2230 = vunpack.c.h.b16 %v552
  %v2231 = vunpack.c.l.b16 %v553
  %v2232 = vunpack.c.h.b16 %v553
  %v2233 = vunpack.c.l.b16 %v554
  %v2234 = vunpack.c.h.b16 %v554
  %v2235 = vunpack.c.l.b16 %v555
  %v2236 = vunpack.c.h.b16 %v555
  %v2237 = vunpack.c.l.b16 %v556
  %v2238 = vunpack.c.h.b16 %v556
  %v2239 = vunpack.c.l.b16 %v557
  %v2240 = vunpack.c.h.b16 %v557
  %v2241 = vunpack.c.l.b16 %v558
  %v2242 = vunpack.c.h.b16 %v558
  %v2243 = vunpack.c.l.b16 %v559
  %v2244 = vunpack.c.h.b16 %v559
  %v2245 = vunpack.c.l.b16 %v560
  %v2246 = vunpack.c.h.b16 %v560
  %v2247 = vunpack.c.l.b16 %v561
  %v2248 = vunpack.c.h.b16 %v561
  %v2249 = vunpack.c.l.b16 %v562
  %v2250 = vunpack.c.h.b16 %v562
  %v2251 = vunpack.c.l.b16 %v563
  %v2252 = vunpack.c.h.b16 %v563
  %v2253 = vunpack.c.l.b16 %v564
  %v2254 = vunpack.c.h.b16 %v564
  %v2255 = vunpack.c.l.b16 %v565
  %v2256 = vunpack.c.h.b16 %v565
  %v2257 = vunpack.c.l.b16 %v566
  %v2258 = vunpack.c.h.b16 %v566
  %v2259 = vunpack.c.l.b16 %v567
  %v2260 = vunpack.c.h.b16 %v567
  %v2261 = vunpack.c.l.b16 %v568
  %v2262 = vunpack.c.h.b16 %v568
  %v2263 = vunpack.c.l.b16 %v569
  %v2264 = vunpack.c.h.b16 %v569
  %v2265 = vunpack.c.l.b16 %v570
  %v2266 = vunpack.c.h.b16 %v570
  %v2267 = vunpack.c.l.b16 %v571
  %v2268 = vunpack.c.h.b16 %v571
  %v2269 = vunpack.c.l.b16 %v572
  %v2270 = vunpack.c.h.b16 %v572
  %v2271 = vunpack.c.l.b16 %v573
  %v2272 = vunpack.c.h.b16 %v573
  %v2273 = vunpack.c.l.b16 %v574
  %v2274 = vunpack.c.h.b16 %v574
  %v2275 = vunpack.c.l.b16 %v575
  %v2276 = vunpack.c.h.b16 %v575
  %v2277 = vunpack.c.l.b16 %v576
  %v2278 = vunpack.c.h.b16 %v576
  %v2279 = vunpack.c.l.b16 %v577
  %v2280 = vunpack.c.h.b16 %v577
  %v2281 = vunpack.c.l.b16 %v578
  %v2282 = vunpack.c.h.b16 %v578
  %v2283 = vunpack.c.l.b16 %v579
  %v2284 = vunpack.c.h.b16 %v579
  %v2285 = vunpack.c.l.b16 %v580
  %v2286 = vunpack.c.h.b16 %v580
  %v2287 = vunpack.c.l.b16 %v581
  %v2288 = vunpack.c.h.b16 %v581
  %v2289 = vunpack.c.l.b16 %v582
  %v2290 = vunpack.c.h.b16 %v582
  %v2291 = vunpack.c.l.b16 %v583
  %v2292 = vunpack.c.h.b16 %v583
  %v2293 = vunpack.c.l.b16 %v584
  %v2294 = vunpack.c.h.b16 %v584
  %v2295 = vunpack.c.l.b16 %v585
  %v2296 = vunpack.c.h.b16 %v585
  %v2297 = vunpack.c.l.b16 %v586
  %v2298 = vunpack.c.h.b16 %v586
  %v2299 = vunpack.c.l.b16 %v587
  %v2300 = vunpack.c.h.b16 %v587
  %v2301 = vunpack.c.l.b16 %v588
  %v2302 = vunpack.c.h.b16 %v588
  %v2303 = vunpack.c.l.b16 %v589
  %v2304 = vunpack.c.h.b16 %v589
  %v2305 = vunpack.c.l.b16 %v590
  %v2306 = vunpack.c.h.b16 %v590
  %v2307 = vunpack.c.l.b16 %v591
  %v2308 = vunpack.c.h.b16 %v591
  %v2309 = vunpack.c.l.b16 %v592
  %v2310 = vunpack.c.h.b16 %v592
  %v2311 = vunpack.c.l.b16 %v593
  %v2312 = vunpack.c.h.b16 %v593
  %v2313 = vunpack.c.l.b16 %v594
  %v2314 = vunpack.c.h.b16 %v594
  %v2315 = vunpack.c.l.b16 %v595
  %v2316 = vunpack.c.h.b16 %v595
  %v2317 = vunpack.c.l.b16 %v596
  %v2318 = vunpack.c.h.b16 %v596
  %v2319 = vunpack.c.l.b16 %v597
  %v2320 = vunpack.c.h.b16 %v597
  %v2321 = vunpack.c.l.b16 %v598
  %v2322 = vunpack.c.h.b16 %v598
  %v2323 = vunpack.c.l.b16 %v599
  %v2324 = vunpack.c.h.b16 %v599
  %v2325 = vunpack.c.l.b16 %v600
  %v2326 = vunpack.c.h.b16 %v600
  %v2327 = vunpack.c.l.b16 %v601
  %v2328 = vunpack.c.h.b16 %v601
  %v2329 = vunpack.c.l.b16 %v602
  %v2330 = vunpack.c.h.b16 %v602
  %v2331 = vunpack.c.l.b16 %v603
  %v2332 = vunpack.c.h.b16 %v603
  %v2333 = vunpack.c.l.b16 %v604
  %v2334 = vunpack.c.h.b16 %v604
  %v2335 = vunpack.c.l.b16 %v605
  %v2336 = vunpack.c.h.b16 %v605
  %v2337 = vunpack.c.l.b16 %v606
  %v2338 = vunpack.c.h.b16 %v606
  %v2339 = vunpack.c.l.b16 %v607
  %v2340 = vunpack.c.h.b16 %v607
  %v2341 = vunpack.c.l.b16 %v608
  %v2342 = vunpack.c.h.b16 %v608
  %v2343 = vunpack.c.l.b16 %v609
  %v2344 = vunpack.c.h.b16 %v609
  %v2345 = vunpack.c.l.b16 %v610
  %v2346 = vunpack.c.h.b16 %v610
  %v2347 = vunpack.c.l.b16 %v611
  %v2348 = vunpack.c.h.b16 %v611
  %v2349 = vunpack.c.l.b16 %v612
  %v2350 = vunpack.c.h.b16 %v612
  %v2351 = vunpack.c.l.b16 %v613
  %v2352 = vunpack.c.h.b16 %v613
  %v2353 = vunpack.c.l.b16 %v614
  %v2354 = vunpack.c.h.b16 %v614
  %v2355 = vunpack.c.l.b16 %v615
  %v2356 = vunpack.c.h.b16 %v615
  %v2357 = vunpack.c.l.b16 %v616
  %v2358 = vunpack.c.h.b16 %v616
  %v2359 = vunpack.c.l.b16 %v617
  %v2360 = vunpack.c.h.b16 %v617
  %v2361 = vunpack.c.l.b16 %v618
  %v2362 = vunpack.c.h.b16 %v618
  %v2363 = vunpack.c.l.b16 %v619
  %v2364 = vunpack.c.h.b16 %v619
  %v2365 = vunpack.c.l.b16 %v620
  %v2366 = vunpack.c.h.b16 %v620
  %v2367 = vunpack.c.l.b16 %v621
  %v2368 = vunpack.c.h.b16 %v621
  %v2369 = vunpack.c.l.b16 %v622
  %v2370 = vunpack.c.h.b16 %v622
  %v2371 = vunpack.c.l.b16 %v623
  %v2372 = vunpack.c.h.b16 %v623
  %v2373 = vunpack.c.l.b16 %v624
  %v2374 = vunpack.c.h.b16 %v624
  %v2375 = vunpack.c.l.b16 %v625
  %v2376 = vunpack.c.h.b16 %v625
  %v2377 = vunpack.c.l.b16 %v626
  %v2378 = vunpack.c.h.b16 %v626
  %v2379 = vunpack.c.l.b16 %v627
  %v2380 = vunpack.c.h.b16 %v627
  %v2381 = vunpack.c.l.b16 %v628
  %v2382 = vunpack.c.h.b16 %v628
  %v2383 = vunpack.c.l.b16 %v629
  %v2384 = vunpack.c.h.b16 %v629
  %v2385 = vunpack.c.l.b16 %v630
  %v2386 = vunpack.c.h.b16 %v630
  %v2387 = vpack.c.b16 %v1247, %v1235
  %v2388 = vpack.c.b16 %v1248, %v1236
  %v2389 = vpack.c.b16 %v1249, %v1237
  %v2390 = vpack.c.b16 %v1250, %v1238
  %v2391 = vpack.c.b16 %v1251, %v1239
  %v2392 = vpack.c.b16 %v1252, %v1240
  %v2393 = vpack.c.b16 %v1253, %v1241
  %v2394 = vpack.c.b16 %v1254, %v1242
  %v2395 = vpack.c.b16 %v1255, %v1243
  %v2396 = vpack.c.b16 %v1256, %v1244
  %v2397 = vpack.c.b16 %v1257, %v1245
  %v2398 = vpack.c.b16 %v1258, %v1246
  %v2399 = vpack.c.b16 %v1271, %v1259
  %v2400 = vpack.c.b16 %v1272, %v1260
  %v2401 = vpack.c.b16 %v1273, %v1261
  %v2402 = vpack.c.b16 %v1274, %v1262
  %v2403 = vpack.c.b16 %v1275, %v1263
  %v2404 = vpack.c.b16 %v1276, %v1264
  %v2405 = vpack.c.b16 %v1277, %v1265
  %v2406 = vpack.c.b16 %v1278, %v1266
  %v2407 = vpack.c.b16 %v1279, %v1267
  %v2408 = vpack.c.b16 %v1280, %v1268
  %v2409 = vpack.c.b16 %v1281, %v1269
  %v2410 = vpack.c.b16 %v1282, %v1270
  %v2411 = vpack.c.b16 %v1295, %v1283
  %v2412 = vpack.c.b16 %v1296, %v1284
  %v2413 = vpack.c.b16 %v1297, %v1285
  %v2414 = vpack.c.b16 %v1298, %v1286
  %v2415 = vpack.c.b16 %v1299, %v1287
  %v2416 = vpack.c.b16 %v1300, %v1288
  %v2417 = vpack.c.b16 %v1301, %v1289
  %v2418 = vpack.c.b16 %v1302, %v1290
  %v2419 = vpack.c.b16 %v1303, %v1291
  %v2420 = vpack.c.b16 %v1304, %v1292
  %v2421 = vpack.c.b16 %v1305, %v1293
  %v2422 = vpack.c.b16 %v1306, %v1294
  %v2423 = vpack.c.b16 %v1319, %v1307
  %v2424 = vpack.c.b16 %v1320, %v1308
  %v2425 = vpack.c.b16 %v1321, %v1309
  %v2426 = vpack.c.b16 %v1322, %v1310
  %v2427 = vpack.c.b16 %v1323, %v1311
  %v2428 = vpack.c.b16 %v1324, %v1312
  %v2429 = vpack.c.b16 %v1325, %v1313
  %v2430 = vpack.c.b16 %v1326, %v1314
  %v2431 = vpack.c.b16 %v1327, %v1315
  %v2432 = vpack.c.b16 %v1328, %v1316
  %v2433 = vpack.c.b16 %v1329, %v1317
  %v2434 = vpack.c.b16 %v1330, %v1318
  %v2435 = vpack.c.b16 %v1343, %v1331
  %v2436 = vpack.c.b16 %v1344, %v1332
  %v2437 = vpack.c.b16 %v1345, %v1333
  %v2438 = vpack.c.b16 %v1346, %v1334
  %v2439 = vpack.c.b16 %v1347, %v1335
  %v2440 = vpack.c.b16 %v1348, %v1336
  %v2441 = vpack.c.b16 %v1349, %v1337
  %v2442 = vpack.c.b16 %v1350, %v1338
  %v2443 = vpack.c.b16 %v1351, %v1339
  %v2444 = vpack.c.b16 %v1352, %v1340
  %v2445 = vpack.c.b16 %v1353, %v1341
  %v2446 = vpack.c.b16 %v1354, %v1342
  %v2447 = vpack.c.b16 %v1367, %v1355
  %v2448 = vpack.c.b16 %v1368, %v1356
  %v2449 = vpack.c.b16 %v1369, %v1357
  %v2450 = vpack.c.b16 %v1370, %v1358
  %v2451 = vpack.c.b16 %v1371, %v1359
  %v2452 = vpack.c.b16 %v1372, %v1360
  %v2453 = vpack.c.b16 %v1373, %v1361
  %v2454 = vpack.c.b16 %v1374, %v1362
  %v2455 = vpack.c.b16 %v1375, %v1363
  %v2456 = vpack.c.b16 %v1376, %v1364
  %v2457 = vpack.c.b16 %v1377, %v1365
  %v2458 = vpack.c.b16 %v1378, %v1366
  %v2459 = vpack.c.b16 %v1391, %v1379
  %v2460 = vpack.c.b16 %v1392, %v1380
  %v2461 = vpack.c.b16 %v1393, %v1381
  %v2462 = vpack.c.b16 %v1394, %v1382
  %v2463 = vpack.c.b16 %v1395, %v1383
  %v2464 = vpack.c.b16 %v1396, %v1384
  %v2465 = vpack.c.b16 %v1397, %v1385
  %v2466 = vpack.c.b16 %v1398, %v1386
  %v2467 = vpack.c.b16 %v1399, %v1387
  %v2468 = vpack.c.b16 %v1400, %v1388
  %v2469 = vpack.c.b16 %v1401, %v1389
  %v2470 = vpack.c.b16 %v1402, %v1390
  %v2471 = vpack.c.b16 %v1415, %v1403
  %v2472 = vpack.c.b16 %v1416, %v1404
  %v2473 = vpack.c.b16 %v1417, %v1405
  %v2474 = vpack.c.b16 %v1418, %v1406
  %v2475 = vpack.c.b16 %v1419, %v1407
  %v2476 = vpack.c.b16 %v1420, %v1408
  %v2477 = vpack.c.b16 %v1421, %v1409
  %v2478 = vpack.c.b16 %v1422, %v1410
  %v2479 = vpack.c.b16 %v1423, %v1411
  %v2480 = vpack.c.b16 %v1424, %v1412
  %v2481 = vpack.c.b16 %v1425, %v1413
  %v2482 = vpack.c.b16 %v1426, %v1414
  %v2483 = vpack.c.b16 %v1439, %v1427
  %v2484 = vpack.c.b16 %v1440, %v1428
  %v2485 = vpack.c.b16 %v1441, %v1429
  %v2486 = vpack.c.b16 %v1442, %v1430
  %v2487 = vpack.c.b16 %v1443, %v1431
  %v2488 = vpack.c.b16 %v1444, %v1432
  %v2489 = vpack.c.b16 %v1445, %v1433
  %v2490 = vpack.c.b16 %v1446, %v1434
  %v2491 = vpack.c.b16 %v1447, %v1435
  %v2492 = vpack.c.b16 %v1448, %v1436
  %v2493 = vpack.c.b16 %v1449, %v1437
  %v2494 = vpack.c.b16 %v1450, %v1438
  %v2495 = vpack.c.b16 %v1463, %v1451
  %v2496 = vpack.c.b16 %v1464, %v1452
  %v2497 = vpack.c.b16 %v1465, %v1453
  %v2498 = vpack.c.b16 %v1466, %v1454
  %v2499 = vpack.c.b16 %v1467, %v1455
  %v2500 = vpack.c.b16 %v1468, %v1456
  %v2501 = vpack.c.b16 %v1469, %v1457
  %v2502 = vpack.c.b16 %v1470, %v1458
  %v2503 = vpack.c.b16 %v1471, %v1459
  %v2504 = vpack.c.b16 %v1472, %v1460
  %v2505 = vpack.c.b16 %v1473, %v1461
  %v2506 = vpack.c.b16 %v1474, %v1462
  %v2507 = vpack.c.b16 %v1487, %v1475
  %v2508 = vpack.c.b16 %v1488, %v1476
  %v2509 = vpack.c.b16 %v1489, %v1477
  %v2510 = vpack.c.b16 %v1490, %v1478
  %v2511 = vpack.c.b16 %v1491, %v1479
  %v2512 = vpack.c.b16 %v1492, %v1480
  %v2513 = vpack.c.b16 %v1493, %v1481
  %v2514 = vpack.c.b16 %v1494, %v1482
  %v2515 = vpack.c.b16 %v1495, %v1483
  %v2516 = vpack.c.b16 %v1496, %v1484
  %v2517 = vpack.c.b16 %v1497, %v1485
  %v2518 = vpack.c.b16 %v1498, %v1486
  %v2519 = vpack.c.b16 %v1511, %v1499
  %v2520 = vpack.c.b16 %v1512, %v1500
  %v2521 = vpack.c.b16 %v1513, %v1501
  %v2522 = vpack.c.b16 %v1514, %v1502
  %v2523 = vpack.c.b16 %v1515, %v1503
  %v2524 = vpack.c.b16 %v1516, %v1504
  %v2525 = vpack.c.b16 %v1517, %v1505
  %v2526 = vpack.c.b16 %v1518, %v1506
  %v2527 = vpack.c.b16 %v1519, %v1507
  %v2528 = vpack.c.b16 %v1520, %v1508
  %v2529 = vpack.c.b16 %v1521, %v1509
  %v2530 = vpack.c.b16 %v1522, %v1510
  %v2531 = vpack.c.b16 %v1535, %v1523
  %v2532 = vpack.c.b16 %v1536, %v1524
  %v2533 = vpack.c.b16 %v1537, %v1525
  %v2534 = vpack.c.b16 %v1538, %v1526
  %v2535 = vpack.c.b16 %v1539, %v1527
  %v2536 = vpack.c.b16 %v1540, %v1528
  %v2537 = vpack.c.b16 %v1541, %v1529
  %v2538 = vpack.c.b16 %v1542, %v1530
  %v2539 = vpack.c.b16 %v1543, %v1531
  %v2540 = vpack.c.b16 %v1544, %v1532
  %v2541 = vpack.c.b16 %v1545, %v1533
  %v2542 = vpack.c.b16 %v1546, %v1534
  %v2543 = vpack.c.b16 %v1559, %v1547
  %v2544 = vpack.c.b16 %v1560, %v1548
  %v2545 = vpack.c.b16 %v1561, %v1549
  %v2546 = vpack.c.b16 %v1562, %v1550
  %v2547 = vpack.c.b16 %v1563, %v1551
  %v2548 = vpack.c.b16 %v1564, %v1552
  %v2549 = vpack.c.b16 %v1565, %v1553
  %v2550 = vpack.c.b16 %v1566, %v1554
  %v2551 = vpack.c.b16 %v1567, %v1555
  %v2552 = vpack.c.b16 %v1568, %v1556
  %v2553 = vpack.c.b16 %v1569, %v1557
  %v2554 = vpack.c.b16 %v1570, %v1558
  %v2555 = vpack.c.b16 %v1583, %v1571
  %v2556 = vpack.c.b16 %v1584, %v1572
  %v2557 = vpack.c.b16 %v1585, %v1573
  %v2558 = vpack.c.b16 %v1586, %v1574
  %v2559 = vpack.c.b16 %v1587, %v1575
  %v2560 = vpack.c.b16 %v1588, %v1576
  %v2561 = vpack.c.b16 %v1589, %v1577
  %v2562 = vpack.c.b16 %v1590, %v1578
  %v2563 = vpack.c.b16 %v1591, %v1579
  %v2564 = vpack.c.b16 %v1592, %v1580
  %v2565 = vpack.c.b16 %v1593, %v1581
  %v2566 = vpack.c.b16 %v1594, %v1582
  %v2567 = vpack.c.b16 %v1607, %v1595
  %v2568 = vpack.c.b16 %v1608, %v1596
  %v2569 = vpack.c.b16 %v1609, %v1597
  %v2570 = vpack.c.b16 %v1610, %v1598
  %v2571 = vpack.c.b16 %v1611, %v1599
  %v2572 = vpack.c.b16 %v1612, %v1600
  %v2573 = vpack.c.b16 %v1613, %v1601
  %v2574 = vpack.c.b16 %v1614, %v1602
  %v2575 = vpack.c.b16 %v1615, %v1603
  %v2576 = vpack.c.b16 %v1616, %v1604
  %v2577 = vpack.c.b16 %v1617, %v1605
  %v2578 = vpack.c.b16 %v1618, %v1606
  %v2579 = vpack.c.b16 %v1631, %v1619
  %v2580 = vpack.c.b16 %v1632, %v1620
  %v2581 = vpack.c.b16 %v1633, %v1621
  %v2582 = vpack.c.b16 %v1634, %v1622
  %v2583 = vpack.c.b16 %v1635, %v1623
  %v2584 = vpack.c.b16 %v1636, %v1624
  %v2585 = vpack.c.b16 %v1637, %v1625
  %v2586 = vpack.c.b16 %v1638, %v1626
  %v2587 = vpack.c.b16 %v1639, %v1627
  %v2588 = vpack.c.b16 %v1640, %v1628
  %v2589 = vpack.c.b16 %v1641, %v1629
  %v2590 = vpack.c.b16 %v1642, %v1630
  %v2591 = vpack.c.b16 %v1655, %v1643
  %v2592 = vpack.c.b16 %v1656, %v1644
  %v2593 = vpack.c.b16 %v1657, %v1645
  %v2594 = vpack.c.b16 %v1658, %v1646
  %v2595 = vpack.c.b16 %v1659, %v1647
  %v2596 = vpack.c.b16 %v1660, %v1648
  %v2597 = vpack.c.b16 %v1661, %v1649
  %v2598 = vpack.c.b16 %v1662, %v1650
  %v2599 = vpack.c.b16 %v1663, %v1651
  %v2600 = vpack.c.b16 %v1664, %v1652
  %v2601 = vpack.c.b16 %v1665, %v1653
  %v2602 = vpack.c.b16 %v1666, %v1654
  %v2603 = vpack.c.b16 %v1679, %v1667
  %v2604 = vpack.c.b16 %v1680, %v1668
  %v2605 = vpack.c.b16 %v1681, %v1669
  %v2606 = vpack.c.b16 %v1682, %v1670
  %v2607 = vpack.c.b16 %v1683, %v1671
  %v2608 = vpack.c.b16 %v1684, %v1672
  %v2609 = vpack.c.b16 %v1685, %v1673
  %v2610 = vpack.c.b16 %v1686, %v1674
  %v2611 = vpack.c.b16 %v1687, %v1675
  %v2612 = vpack.c.b16 %v1688, %v1676
  %v2613 = vpack.c.b16 %v1689, %v1677
  %v2614 = vpack.c.b16 %v1690, %v1678
  %v2615 = vpack.c.b16 %v1703, %v1691
  %v2616 = vpack.c.b16 %v1704, %v1692
  %v2617 = vpack.c.b16 %v1705, %v1693
  %v2618 = vpack.c.b16 %v1706, %v1694
  %v2619 = vpack.c.b16 %v1707, %v1695
  %v2620 = vpack.c.b16 %v1708, %v1696
  %v2621 = vpack.c.b16 %v1709, %v1697
  %v2622 = vpack.c.b16 %v1710, %v1698
  %v2623 = vpack.c.b16 %v1711, %v1699
  %v2624 = vpack.c.b16 %v1712, %v1700
  %v2625 = vpack.c.b16 %v1713, %v1701
  %v2626 = vpack.c.b16 %v1714, %v1702
  %v2627 = vpack.c.b16 %v1727, %v1715
  %v2628 = vpack.c.b16 %v1728, %v1716
  %v2629 = vpack.c.b16 %v1729, %v1717
  %v2630 = vpack.c.b16 %v1730, %v1718
  %v2631 = vpack.c.b16 %v1731, %v1719
  %v2632 = vpack.c.b16 %v1732, %v1720
  %v2633 = vpack.c.b16 %v1733, %v1721
  %v2634 = vpack.c.b16 %v1734, %v1722
  %v2635 = vpack.c.b16 %v1735, %v1723
  %v2636 = vpack.c.b16 %v1736, %v1724
  %v2637 = vpack.c.b16 %v1737, %v1725
  %v2638 = vpack.c.b16 %v1738, %v1726
  %v2639 = vpack.c.b16 %v1751, %v1739
  %v2640 = vpack.c.b16 %v1752, %v1740
  %v2641 = vpack.c.b16 %v1753, %v1741
  %v2642 = vpack.c.b16 %v1754, %v1742
  %v2643 = vpack.c.b16 %v1755, %v1743
  %v2644 = vpack.c.b16 %v1756, %v1744
  %v2645 = vpack.c.b16 %v1757, %v1745
  %v2646 = vpack.c.b16 %v1758, %v1746
  %v2647 = vpack.c.b16 %v1759, %v1747
  %v2648 = vpack.c.b16 %v1760, %v1748
  %v2649 = vpack.c.b16 %v1761, %v1749
  %v2650 = vpack.c.b16 %v1762, %v1750
  %v2651 = vpack.c.b16 %v1775, %v1763
  %v2652 = vpack.c.b16 %v1776, %v1764
  %v2653 = vpack.c.b16 %v1777, %v1765
  %v2654 = vpack.c.b16 %v1778, %v1766
  %v2655 = vpack.c.b16 %v1779, %v1767
  %v2656 = vpack.c.b16 %v1780, %v1768
  %v2657 = vpack.c.b16 %v1781, %v1769
  %v2658 = vpack.c.b16 %v1782, %v1770
  %v2659 = vpack.c.b16 %v1783, %v1771
  %v2660 = vpack.c.b16 %v1784, %v1772
  %v2661 = vpack.c.b16 %v1785, %v1773
  %v2662 = vpack.c.b16 %v1786, %v1774
  %v2663 = vpack.c.b16 %v1799, %v1787
  %v2664 = vpack.c.b16 %v1800, %v1788
  %v2665 = vpack.c.b16 %v1801, %v1789
  %v2666 = vpack.c.b16 %v1802, %v1790
  %v2667 = vpack.c.b16 %v1803, %v1791
  %v2668 = vpack.c.b16 %v1804, %v1792
  %v2669 = vpack.c.b16 %v1805, %v1793
  %v2670 = vpack.c.b16 %v1806, %v1794
  %v2671 = vpack.c.b16 %v1807, %v1795
  %v2672 = vpack.c.b16 %v1808, %v1796
  %v2673 = vpack.c.b16 %v1809, %v1797
  %v2674 = vpack.c.b16 %v1810, %v1798
  %v2675 = vpack.c.b16 %v1823, %v1811
  %v2676 = vpack.c.b16 %v1824, %v1812
  %v2677 = vpack.c.b16 %v1825, %v1813
  %v2678 = vpack.c.b16 %v1826, %v1814
  %v2679 = vpack.c.b16 %v1827, %v1815
  %v2680 = vpack.c.b16 %v1828, %v1816
  %v2681 = vpack.c.b16 %v1829, %v1817
  %v2682 = vpack.c.b16 %v1830, %v1818
  %v2683 = vpack.c.b16 %v1831, %v1819
  %v2684 = vpack.c.b16 %v1832, %v1820
  %v2685 = vpack.c.b16 %v1833, %v1821
  %v2686 = vpack.c.b16 %v1834, %v1822
  %v2687 = vpack.c.b16 %v1847, %v1835
  %v2688 = vpack.c.b16 %v1848, %v1836
  %v2689 = vpack.c.b16 %v1849, %v1837
  %v2690 = vpack.c.b16 %v1850, %v1838
  %v2691 = vpack.c.b16 %v1851, %v1839
  %v2692 = vpack.c.b16 %v1852, %v1840
  %v2693 = vpack.c.b16 %v1853, %v1841
  %v2694 = vpack.c.b16 %v1854, %v1842
  %v2695 = vpack.c.b16 %v1855, %v1843
  %v2696 = vpack.c.b16 %v1856, %v1844
  %v2697 = vpack.c.b16 %v1857, %v1845
  %v2698 = vpack.c.b16 %v1858, %v1846
  %v2699 = vpack.c.b16 %v1871, %v1859
  %v2700 = vpack.c.b16 %v1872, %v1860
  %v2701 = vpack.c.b16 %v1873, %v1861
  %v2702 = vpack.c.b16 %v1874, %v1862
  %v2703 = vpack.c.b16 %v1875, %v1863
  %v2704 = vpack.c.b16 %v1876, %v1864
  %v2705 = vpack.c.b16 %v1877, %v1865
  %v2706 = vpack.c.b16 %v1878, %v1866
  %v2707 = vpack.c.b16 %v1879, %v1867
  %v2708 = vpack.c.b16 %v1880, %v1868
  %v2709 = vpack.c.b16 %v1881, %v1869
  %v2710 = vpack.c.b16 %v1882, %v1870
  %v2711 = vpack.c.b16 %v1895, %v1883
  %v2712 = vpack.c.b16 %v1896, %v1884
  %v2713 = vpack.c.b16 %v1897, %v1885
  %v2714 = vpack.c.b16 %v1898, %v1886
  %v2715 = vpack.c.b16 %v1899, %v1887
  %v2716 = vpack.c.b16 %v1900, %v1888
  %v2717 = vpack.c.b16 %v1901, %v1889
  %v2718 = vpack.c.b16 %v1902, %v1890
  %v2719 = vpack.c.b16 %v1903, %v1891
  %v2720 = vpack.c.b16 %v1904, %v1892
  %v2721 = vpack.c.b16 %v1905, %v1893
  %v2722 = vpack.c.b16 %v1906, %v1894
  %v2723 = vpack.c.b16 %v1919, %v1907
  %v2724 = vpack.c.b16 %v1920, %v1908
  %v2725 = vpack.c.b16 %v1921, %v1909
  %v2726 = vpack.c.b16 %v1922, %v1910
  %v2727 = vpack.c.b16 %v1923, %v1911
  %v2728 = vpack.c.b16 %v1924, %v1912
  %v2729 = vpack.c.b16 %v1925, %v1913
  %v2730 = vpack.c.b16 %v1926, %v1914
  %v2731 = vpack.c.b16 %v1927, %v1915
  %v2732 = vpack.c.b16 %v1928, %v1916
  %v2733 = vpack.c.b16 %v1929, %v1917
  %v2734 = vpack.c.b16 %v1930, %v1918
  %v2735 = vpack.c.b16 %v1943, %v1931
  %v2736 = vpack.c.b16 %v1944, %v1932
  %v2737 = vpack.c.b16 %v1945, %v1933
  %v2738 = vpack.c.b16 %v1946, %v1934
  %v2739 = vpack.c.b16 %v1947, %v1935
  %v2740 = vpack.c.b16 %v1948, %v1936
  %v2741 = vpack.c.b16 %v1949, %v1937
  %v2742 = vpack.c.b16 %v1950, %v1938
  %v2743 = vpack.c.b16 %v1951, %v1939
  %v2744 = vpack.c.b16 %v1952, %v1940
  %v2745 = vpack.c.b16 %v1953, %v1941
  %v2746 = vpack.c.b16 %v1954, %v1942
  %v2747 = vpack.c.b16 %v1967, %v1955
  %v2748 = vpack.c.b16 %v1968, %v1956
  %v2749 = vpack.c.b16 %v1969, %v1957
  %v2750 = vpack.c.b16 %v1970, %v1958
  %v2751 = vpack.c.b16 %v1971, %v1959
  %v2752 = vpack.c.b16 %v1972, %v1960
  %v2753 = vpack.c.b16 %v1973, %v1961
  %v2754 = vpack.c.b16 %v1974, %v1962
  %v2755 = vpack.c.b16 %v1975, %v1963
  %v2756 = vpack.c.b16 %v1976, %v1964
  %v2757 = vpack.c.b16 %v1977, %v1965
  %v2758 = vpack.c.b16 %v1978, %v1966
  %v2759 = vpack.c.b16 %v1991, %v1979
  %v2760 = vpack.c.b16 %v1992, %v1980
  %v2761 = vpack.c.b16 %v1993, %v1981
  %v2762 = vpack.c.b16 %v1994, %v1982
  %v2763 = vpack.c.b16 %v1995, %v1983
  %v2764 = vpack.c.b16 %v1996, %v1984
  %v2765 = vpack.c.b16 %v1997, %v1985
  %v2766 = vpack.c.b16 %v1998, %v1986
  %v2767 = vpack.c.b16 %v1999, %v1987
  %v2768 = vpack.c.b16 %v2000, %v1988
  %v2769 = vpack.c.b16 %v2001, %v1989
  %v2770 = vpack.c.b16 %v2002, %v1990
  %v2771 = vpack.c.b16 %v2015, %v2003
  %v2772 = vpack.c.b16 %v2016, %v2004
  %v2773 = vpack.c.b16 %v2017, %v2005
  %v2774 = vpack.c.b16 %v2018, %v2006
  %v2775 = vpack.c.b16 %v2019, %v2007
  %v2776 = vpack.c.b16 %v2020, %v2008
  %v2777 = vpack.c.b16 %v2021, %v2009
  %v2778 = vpack.c.b16 %v2022, %v2010
  %v2779 = vpack.c.b16 %v2023, %v2011
  %v2780 = vpack.c.b16 %v2024, %v2012
  %v2781 = vpack.c.b16 %v2025, %v2013
  %v2782 = vpack.c.b16 %v2026, %v2014
  %v2783 = vpack.c.b16 %v2039, %v2027
  %v2784 = vpack.c.b16 %v2040, %v2028
  %v2785 = vpack.c.b16 %v2041, %v2029
  %v2786 = vpack.c.b16 %v2042, %v2030
  %v2787 = vpack.c.b16 %v2043, %v2031
  %v2788 = vpack.c.b16 %v2044, %v2032
  %v2789 = vpack.c.b16 %v2045, %v2033
  %v2790 = vpack.c.b16 %v2046, %v2034
  %v2791 = vpack.c.b16 %v2047, %v2035
  %v2792 = vpack.c.b16 %v2048, %v2036
  %v2793 = vpack.c.b16 %v2049, %v2037
  %v2794 = vpack.c.b16 %v2050, %v2038
  %v2795 = vpack.c.b16 %v2063, %v2051
  %v2796 = vpack.c.b16 %v2064, %v2052
  %v2797 = vpack.c.b16 %v2065, %v2053
  %v2798 = vpack.c.b16 %v2066, %v2054
  %v2799 = vpack.c.b16 %v2067, %v2055
  %v2800 = vpack.c.b16 %v2068, %v2056
  %v2801 = vpack.c.b16 %v2069, %v2057
  %v2802 = vpack.c.b16 %v2070, %v2058
  %v2803 = vpack.c.b16 %v2071, %v2059
  %v2804 = vpack.c.b16 %v2072, %v2060
  %v2805 = vpack.c.b16 %v2073, %v2061
  %v2806 = vpack.c.b16 %v2074, %v2062
  %v2807 = vpack.c.b16 %v2087, %v2075
  %v2808 = vpack.c.b16 %v2088, %v2076
  %v2809 = vpack.c.b16 %v2089, %v2077
  %v2810 = vpack.c.b16 %v2090, %v2078
  %v2811 = vpack.c.b16 %v2091, %v2079
  %v2812 = vpack.c.b16 %v2092, %v2080
  %v2813 = vpack.c.b16 %v2093, %v2081
  %v2814 = vpack.c.b16 %v2094, %v2082
  %v2815 = vpack.c.b16 %v2095, %v2083
  %v2816 = vpack.c.b16 %v2096, %v2084
  %v2817 = vpack.c.b16 %v2097, %v2085
  %v2818 = vpack.c.b16 %v2098, %v2086
  %v2819 = vpack.c.b16 %v2111, %v2099
  %v2820 = vpack.c.b16 %v2112, %v2100
  %v2821 = vpack.c.b16 %v2113, %v2101
  %v2822 = vpack.c.b16 %v2114, %v2102
  %v2823 = vpack.c.b16 %v2115, %v2103
  %v2824 = vpack.c.b16 %v2116, %v2104
  %v2825 = vpack.c.b16 %v2117, %v2105
  %v2826 = vpack.c.b16 %v2118, %v2106
  %v2827 = vpack.c.b16 %v2119, %v2107
  %v2828 = vpack.c.b16 %v2120, %v2108
  %v2829 = vpack.c.b16 %v2121, %v2109
  %v2830 = vpack.c.b16 %v2122, %v2110
  %v2831 = vpack.c.b16 %v2135, %v2123
  %v2832 = vpack.c.b16 %v2136, %v2124
  %v2833 = vpack.c.b16 %v2137, %v2125
  %v2834 = vpack.c.b16 %v2138, %v2126
  %v2835 = vpack.c.b16 %v2139, %v2127
  %v2836 = vpack.c.b16 %v2140, %v2128
  %v2837 = vpack.c.b16 %v2141, %v2129
  %v2838 = vpack.c.b16 %v2142, %v2130
  %v2839 = vpack.c.b16 %v2143, %v2131
  %v2840 = vpack.c.b16 %v2144, %v2132
  %v2841 = vpack.c.b16 %v2145, %v2133
  %v2842 = vpack.c.b16 %v2146, %v2134
  %v2843 = vpack.c.b16 %v2159, %v2147
  %v2844 = vpack.c.b16 %v2160, %v2148
  %v2845 = vpack.c.b16 %v2161, %v2149
  %v2846 = vpack.c.b16 %v2162, %v2150
  %v2847 = vpack.c.b16 %v2163, %v2151
  %v2848 = vpack.c.b16 %v2164, %v2152
  %v2849 = vpack.c.b16 %v2165, %v2153
  %v2850 = vpack.c.b16 %v2166, %v2154
  %v2851 = vpack.c.b16 %v2167, %v2155
  %v2852 = vpack.c.b16 %v2168, %v2156
  %v2853 = vpack.c.b16 %v2169, %v2157
  %v2854 = vpack.c.b16 %v2170, %v2158
  %v2855 = vpack.c.b16 %v2183, %v2171
  %v2856 = vpack.c.b16 %v2184, %v2172
  %v2857 = vpack.c.b16 %v2185, %v2173
  %v2858 = vpack.c.b16 %v2186, %v2174
  %v2859 = vpack.c.b16 %v2187, %v2175
  %v2860 = vpack.c.b16 %v2188, %v2176
  %v2861 = vpack.c.b16 %v2189, %v2177
  %v2862 = vpack.c.b16 %v2190, %v2178
  %v2863 = vpack.c.b16 %v2191, %v2179
  %v2864 = vpack.c.b16 %v2192, %v2180
  %v2865 = vpack.c.b16 %v2193, %v2181
  %v2866 = vpack.c.b16 %v2194, %v2182
  %v2867 = vpack.c.b16 %v2207, %v2195
  %v2868 = vpack.c.b16 %v2208, %v2196
  %v2869 = vpack.c.b16 %v2209, %v2197
  %v2870 = vpack.c.b16 %v2210, %v2198
  %v2871 = vpack.c.b16 %v2211, %v2199
  %v2872 = vpack.c.b16 %v2212, %v2200
  %v2873 = vpack.c.b16 %v2213, %v2201
  %v2874 = vpack.c.b16 %v2214, %v2202
  %v2875 = vpack.c.b16 %v2215, %v2203
  %v2876 = vpack.c.b16 %v2216, %v2204
  %v2877 = vpack.c.b16 %v2217, %v2205
  %v2878 = vpack.c.b16 %v2218, %v2206
  %v2879 = vpack.c.b16 %v2231, %v2219
  %v2880 = vpack.c.b16 %v2232, %v2220
  %v2881 = vpack.c.b16 %v2233, %v2221
  %v2882 = vpack.c.b16 %v2234, %v2222
  %v2883 = vpack.c.b16 %v2235, %v2223
  %v2884 = vpack.c.b16 %v2236, %v2224
  %v2885 = vpack.c.b16 %v2237, %v2225
  %v2886 = vpack.c.b16 %v2238, %v2226
  %v2887 = vpack.c.b16 %v2239, %v2227
  %v2888 = vpack.c.b16 %v2240, %v2228
  %v2889 = vpack.c.b16 %v2241, %v2229
  %v2890 = vpack.c.b16 %v2242, %v2230
  %v2891 = vpack.c.b16 %v2255, %v2243
  %v2892 = vpack.c.b16 %v2256, %v2244
  %v2893 = vpack.c.b16 %v2257, %v2245
  %v2894 = vpack.c.b16 %v2258, %v2246
  %v2895 = vpack.c.b16 %v2259, %v2247
  %v2896 = vpack.c.b16 %v2260, %v2248
  %v2897 = vpack.c.b16 %v2261, %v2249
  %v2898 = vpack.c.b16 %v2262, %v2250
  %v2899 = vpack.c.b16 %v2263, %v2251
  %v2900 = vpack.c.b16 %v2264, %v2252
  %v2901 = vpack.c.b16 %v2265, %v2253
  %v2902 = vpack.c.b16 %v2266, %v2254
  %v2903 = vpack.c.b16 %v2279, %v2267
  %v2904 = vpack.c.b16 %v2280, %v2268
  %v2905 = vpack.c.b16 %v2281, %v2269
  %v2906 = vpack.c.b16 %v2282, %v2270
  %v2907 = vpack.c.b16 %v2283, %v2271
  %v2908 = vpack.c.b16 %v2284, %v2272
  %v2909 = vpack.c.b16 %v2285, %v2273
  %v2910 = vpack.c.b16 %v2286, %v2274
  %v2911 = vpack.c.b16 %v2287, %v2275
  %v2912 = vpack.c.b16 %v2288, %v2276
  %v2913 = vpack.c.b16 %v2289, %v2277
  %v2914 = vpack.c.b16 %v2290, %v2278
  %v2915 = vpack.c.b16 %v2303, %v2291
  %v2916 = vpack.c.b16 %v2304, %v2292
  %v2917 = vpack.c.b16 %v2305, %v2293
  %v2918 = vpack.c.b16 %v2306, %v2294
  %v2919 = vpack.c.b16 %v2307, %v2295
  %v2920 = vpack.c.b16 %v2308, %v2296
  %v2921 = vpack.c.b16 %v2309, %v2297
  %v2922 = vpack.c.b16 %v2310, %v2298
  %v2923 = vpack.c.b16 %v2311, %v2299
  %v2924 = vpack.c.b16 %v2312, %v2300
  %v2925 = vpack.c.b16 %v2313, %v2301
  %v2926 = vpack.c.b16 %v2314, %v2302
  %v2927 = vpack.c.b16 %v2327, %v2315
  %v2928 = vpack.c.b16 %v2328, %v2316
  %v2929 = vpack.c.b16 %v2329, %v2317
  %v2930 = vpack.c.b16 %v2330, %v2318
  %v2931 = vpack.c.b16 %v2331, %v2319
  %v2932 = vpack.c.b16 %v2332, %v2320
  %v2933 = vpack.c.b16 %v2333, %v2321
  %v2934 = vpack.c.b16 %v2334, %v2322
  %v2935 = vpack.c.b16 %v2335, %v2323
  %v2936 = vpack.c.b16 %v2336, %v2324
  %v2937 = vpack.c.b16 %v2337, %v2325
  %v2938 = vpack.c.b16 %v2338, %v2326
  %v2939 = vpack.c.b16 %v2351, %v2339
  %v2940 = vpack.c.b16 %v2352, %v2340
  %v2941 = vpack.c.b16 %v2353, %v2341
  %v2942 = vpack.c.b16 %v2354, %v2342
  %v2943 = vpack.c.b16 %v2355, %v2343
  %v2944 = vpack.c.b16 %v2356, %v2344
  %v2945 = vpack.c.b16 %v2357, %v2345
  %v2946 = vpack.c.b16 %v2358, %v2346
  %v2947 = vpack.c.b16 %v2359, %v2347
  %v2948 = vpack.c.b16 %v2360, %v2348
  %v2949 = vpack.c.b16 %v2361, %v2349
  %v2950 = vpack.c.b16 %v2362, %v2350
  %v2951 = vpack.c.b16 %v2375, %v2363
  %v2952 = vpack.c.b16 %v2376, %v2364
  %v2953 = vpack.c.b16 %v2377, %v2365
  %v2954 = vpack.c.b16 %v2378, %v2366
  %v2955 = vpack.c.b16 %v2379, %v2367
  %v2956 = vpack.c.b16 %v2380, %v2368
  %v2957 = vpack.c.b16 %v2381, %v2369
  %v2958 = vpack.c.b16 %v2382, %v2370
  %v2959 = vpack.c.b16 %v2383, %v2371
  %v2960 = vpack.c.b16 %v2384, %v2372
  %v2961 = vpack.c.b16 %v2385, %v2373
  %v2962 = vpack.c.b16 %v2386, %v2374
  %3539 = vmatpush.bf16.msra.mxu0 %v2471
  %3540 = vmatpush.bf16.msra.mxu0 %v2459
  %3541 = vmatpush.bf16.msra.mxu0 %v2447
  %3542 = vmatpush.bf16.msra.mxu0 %v2435
  %3543 = vmatpush.bf16.msra.mxu0 %v2423
  %3544 = vmatpush.bf16.msra.mxu0 %v2411
  %3545 = vmatpush.bf16.msra.mxu0 %v2399
  %3546 = vmatpush.bf16.msra.mxu0 %v2387
  %3547 = vmatmul.bf16.gmra.mxu0 %v49
  %v3548 = vpop.f32.mrf.mxu0
  %v3549 = vadd.f32 %v635, %v3548
  %v3550 = vpop.f32.mrf.mxu0
  %3551 = vdwg.mxu0
  %3552 = vmatpush.bf16.msra.mxu0 %v2567
  %3553 = vmatpush.bf16.msra.mxu0 %v2555
  %3554 = vmatpush.bf16.msra.mxu0 %v2543
  %3555 = vmatpush.bf16.msra.mxu0 %v2531
  %3556 = vmatpush.bf16.msra.mxu0 %v2519
  %3557 = vmatpush.bf16.msra.mxu0 %v2507
  %3558 = vmatpush.bf16.msra.mxu0 %v2495
  %3559 = vmatpush.bf16.msra.mxu0 %v2483
  %3560 = vmatmul.bf16.gmra.mxu0 %v50
  %v3561 = vpop.f32.mrf.mxu0
  %v3562 = vadd.f32 %v3549, %v3561
  %v3563 = vpop.f32.mrf.mxu0
  %3564 = vdwg.mxu0
  %3565 = vmatpush.bf16.msra.mxu0 %v2663
  %3566 = vmatpush.bf16.msra.mxu0 %v2651
  %3567 = vmatpush.bf16.msra.mxu0 %v2639
  %3568 = vmatpush.bf16.msra.mxu0 %v2627
  %3569 = vmatpush.bf16.msra.mxu0 %v2615
  %3570 = vmatpush.bf16.msra.mxu0 %v2603
  %3571 = vmatpush.bf16.msra.mxu0 %v2591
  %3572 = vmatpush.bf16.msra.mxu0 %v2579
  %3573 = vmatmul.bf16.gmra.mxu0 %v51
  %v3574 = vpop.f32.mrf.mxu0
  %v3575 = vadd.f32 %v3562, %v3574
  %v3576 = vpop.f32.mrf.mxu0
  %3577 = vdwg.mxu0
  %3578 = vmatpush.bf16.msra.mxu0 %v2759
  %3579 = vmatpush.bf16.msra.mxu0 %v2747
  %3580 = vmatpush.bf16.msra.mxu0 %v2735
  %3581 = vmatpush.bf16.msra.mxu0 %v2723
  %3582 = vmatpush.bf16.msra.mxu0 %v2711
  %3583 = vmatpush.bf16.msra.mxu0 %v2699
  %3584 = vmatpush.bf16.msra.mxu0 %v2687
  %3585 = vmatpush.bf16.msra.mxu0 %v2675
  %3586 = vmatmul.bf16.gmra.mxu0 %v52
  %v3587 = vpop.f32.mrf.mxu0
  %v3588 = vadd.f32 %v3575, %v3587
  %v3589 = vpop.f32.mrf.mxu0
  %3590 = vdwg.mxu0
  %3591 = vmatpush.bf16.msra.mxu0 %v2855
  %3592 = vmatpush.bf16.msra.mxu0 %v2843
  %3593 = vmatpush.bf16.msra.mxu0 %v2831
  %3594 = vmatpush.bf16.msra.mxu0 %v2819
  %3595 = vmatpush.bf16.msra.mxu0 %v2807
  %3596 = vmatpush.bf16.msra.mxu0 %v2795
  %3597 = vmatpush.bf16.msra.mxu0 %v2783
  %3598 = vmatpush.bf16.msra.mxu0 %v2771
  %3599 = vmatmul.bf16.gmra.mxu0 %v53
  %v3600 = vpop.f32.mrf.mxu0
  %v3601 = vadd.f32 %v3588, %v3600
  %v3602 = vpop.f32.mrf.mxu0
  %3603 = vdwg.mxu0
  %3604 = vmatpush.bf16.msra.mxu0 %v2951
  %3605 = vmatpush.bf16.msra.mxu0 %v2939
  %3606 = vmatpush.bf16.msra.mxu0 %v2927
  %3607 = vmatpush.bf16.msra.mxu0 %v2915
  %3608 = vmatpush.bf16.msra.mxu0 %v2903
  %3609 = vmatpush.bf16.msra.mxu0 %v2891
  %3610 = vmatpush.bf16.msra.mxu0 %v2879
  %3611 = vmatpush.bf16.msra.mxu0 %v2867
  %3612 = vmatmul.bf16.gmra.mxu0 %v54
  %v3613 = vpop.f32.mrf.mxu0
  %v3614 = vadd.f32 %v3601, %v3613
  %v3615 = vpop.f32.mrf.mxu0
  %3616 = vdwg.mxu0
  %3617 = vmatpush.bf16.msra.mxu0 %v2472
  %3618 = vmatpush.bf16.msra.mxu0 %v2460
  %3619 = vmatpush.bf16.msra.mxu0 %v2448
  %3620 = vmatpush.bf16.msra.mxu0 %v2436
  %3621 = vmatpush.bf16.msra.mxu0 %v2424
  %3622 = vmatpush.bf16.msra.mxu0 %v2412
  %3623 = vmatpush.bf16.msra.mxu0 %v2400
  %3624 = vmatpush.bf16.msra.mxu0 %v2388
  %3625 = vmatmul.bf16.gmra.mxu0 %v49
  %v3626 = vpop.f32.mrf.mxu0
  %v3627 = vadd.f32 %v636, %v3626
  %v3628 = vpop.f32.mrf.mxu0
  %3629 = vdwg.mxu0
  %3630 = vmatpush.bf16.msra.mxu0 %v2568
  %3631 = vmatpush.bf16.msra.mxu0 %v2556
  %3632 = vmatpush.bf16.msra.mxu0 %v2544
  %3633 = vmatpush.bf16.msra.mxu0 %v2532
  %3634 = vmatpush.bf16.msra.mxu0 %v2520
  %3635 = vmatpush.bf16.msra.mxu0 %v2508
  %3636 = vmatpush.bf16.msra.mxu0 %v2496
  %3637 = vmatpush.bf16.msra.mxu0 %v2484
  %3638 = vmatmul.bf16.gmra.mxu0 %v50
  %v3639 = vpop.f32.mrf.mxu0
  %v3640 = vadd.f32 %v3627, %v3639
  %v3641 = vpop.f32.mrf.mxu0
  %3642 = vdwg.mxu0
  %3643 = vmatpush.bf16.msra.mxu0 %v2664
  %3644 = vmatpush.bf16.msra.mxu0 %v2652
  %3645 = vmatpush.bf16.msra.mxu0 %v2640
  %3646 = vmatpush.bf16.msra.mxu0 %v2628
  %3647 = vmatpush.bf16.msra.mxu0 %v2616
  %3648 = vmatpush.bf16.msra.mxu0 %v2604
  %3649 = vmatpush.bf16.msra.mxu0 %v2592
  %3650 = vmatpush.bf16.msra.mxu0 %v2580
  %3651 = vmatmul.bf16.gmra.mxu0 %v51
  %v3652 = vpop.f32.mrf.mxu0
  %v3653 = vadd.f32 %v3640, %v3652
  %v3654 = vpop.f32.mrf.mxu0
  %3655 = vdwg.mxu0
  %3656 = vmatpush.bf16.msra.mxu0 %v2760
  %3657 = vmatpush.bf16.msra.mxu0 %v2748
  %3658 = vmatpush.bf16.msra.mxu0 %v2736
  %3659 = vmatpush.bf16.msra.mxu0 %v2724
  %3660 = vmatpush.bf16.msra.mxu0 %v2712
  %3661 = vmatpush.bf16.msra.mxu0 %v2700
  %3662 = vmatpush.bf16.msra.mxu0 %v2688
  %3663 = vmatpush.bf16.msra.mxu0 %v2676
  %3664 = vmatmul.bf16.gmra.mxu0 %v52
  %v3665 = vpop.f32.mrf.mxu0
  %v3666 = vadd.f32 %v3653, %v3665
  %v3667 = vpop.f32.mrf.mxu0
  %3668 = vdwg.mxu0
  %3669 = vmatpush.bf16.msra.mxu0 %v2856
  %3670 = vmatpush.bf16.msra.mxu0 %v2844
  %3671 = vmatpush.bf16.msra.mxu0 %v2832
  %3672 = vmatpush.bf16.msra.mxu0 %v2820
  %3673 = vmatpush.bf16.msra.mxu0 %v2808
  %3674 = vmatpush.bf16.msra.mxu0 %v2796
  %3675 = vmatpush.bf16.msra.mxu0 %v2784
  %3676 = vmatpush.bf16.msra.mxu0 %v2772
  %3677 = vmatmul.bf16.gmra.mxu0 %v53
  %v3678 = vpop.f32.mrf.mxu0
  %v3679 = vadd.f32 %v3666, %v3678
  %v3680 = vpop.f32.mrf.mxu0
  %3681 = vdwg.mxu0
  %3682 = vmatpush.bf16.msra.mxu0 %v2952
  %3683 = vmatpush.bf16.msra.mxu0 %v2940
  %3684 = vmatpush.bf16.msra.mxu0 %v2928
  %3685 = vmatpush.bf16.msra.mxu0 %v2916
  %3686 = vmatpush.bf16.msra.mxu0 %v2904
  %3687 = vmatpush.bf16.msra.mxu0 %v2892
  %3688 = vmatpush.bf16.msra.mxu0 %v2880
  %3689 = vmatpush.bf16.msra.mxu0 %v2868
  %3690 = vmatmul.bf16.gmra.mxu0 %v54
  %v3691 = vpop.f32.mrf.mxu0
  %v3692 = vadd.f32 %v3679, %v3691
  %v3693 = vpop.f32.mrf.mxu0
  %3694 = vdwg.mxu0
  %3695 = vmatpush.bf16.msra.mxu0 %v2473
  %3696 = vmatpush.bf16.msra.mxu0 %v2461
  %3697 = vmatpush.bf16.msra.mxu0 %v2449
  %3698 = vmatpush.bf16.msra.mxu0 %v2437
  %3699 = vmatpush.bf16.msra.mxu0 %v2425
  %3700 = vmatpush.bf16.msra.mxu0 %v2413
  %3701 = vmatpush.bf16.msra.mxu0 %v2401
  %3702 = vmatpush.bf16.msra.mxu0 %v2389
  %3703 = vmatmul.bf16.gmra.mxu0 %v49
  %v3704 = vpop.f32.mrf.mxu0
  %v3705 = vadd.f32 %v637, %v3704
  %v3706 = vpop.f32.mrf.mxu0
  %3707 = vdwg.mxu0
  %3708 = vmatpush.bf16.msra.mxu0 %v2569
  %3709 = vmatpush.bf16.msra.mxu0 %v2557
  %3710 = vmatpush.bf16.msra.mxu0 %v2545
  %3711 = vmatpush.bf16.msra.mxu0 %v2533
  %3712 = vmatpush.bf16.msra.mxu0 %v2521
  %3713 = vmatpush.bf16.msra.mxu0 %v2509
  %3714 = vmatpush.bf16.msra.mxu0 %v2497
  %3715 = vmatpush.bf16.msra.mxu0 %v2485
  %3716 = vmatmul.bf16.gmra.mxu0 %v50
  %v3717 = vpop.f32.mrf.mxu0
  %v3718 = vadd.f32 %v3705, %v3717
  %v3719 = vpop.f32.mrf.mxu0
  %3720 = vdwg.mxu0
  %3721 = vmatpush.bf16.msra.mxu0 %v2665
  %3722 = vmatpush.bf16.msra.mxu0 %v2653
  %3723 = vmatpush.bf16.msra.mxu0 %v2641
  %3724 = vmatpush.bf16.msra.mxu0 %v2629
  %3725 = vmatpush.bf16.msra.mxu0 %v2617
  %3726 = vmatpush.bf16.msra.mxu0 %v2605
  %3727 = vmatpush.bf16.msra.mxu0 %v2593
  %3728 = vmatpush.bf16.msra.mxu0 %v2581
  %3729 = vmatmul.bf16.gmra.mxu0 %v51
  %v3730 = vpop.f32.mrf.mxu0
  %v3731 = vadd.f32 %v3718, %v3730
  %v3732 = vpop.f32.mrf.mxu0
  %3733 = vdwg.mxu0
  %3734 = vmatpush.bf16.msra.mxu0 %v2761
  %3735 = vmatpush.bf16.msra.mxu0 %v2749
  %3736 = vmatpush.bf16.msra.mxu0 %v2737
  %3737 = vmatpush.bf16.msra.mxu0 %v2725
  %3738 = vmatpush.bf16.msra.mxu0 %v2713
  %3739 = vmatpush.bf16.msra.mxu0 %v2701
  %3740 = vmatpush.bf16.msra.mxu0 %v2689
  %3741 = vmatpush.bf16.msra.mxu0 %v2677
  %3742 = vmatmul.bf16.gmra.mxu0 %v52
  %v3743 = vpop.f32.mrf.mxu0
  %v3744 = vadd.f32 %v3731, %v3743
  %v3745 = vpop.f32.mrf.mxu0
  %3746 = vdwg.mxu0
  %3747 = vmatpush.bf16.msra.mxu0 %v2857
  %3748 = vmatpush.bf16.msra.mxu0 %v2845
  %3749 = vmatpush.bf16.msra.mxu0 %v2833
  %3750 = vmatpush.bf16.msra.mxu0 %v2821
  %3751 = vmatpush.bf16.msra.mxu0 %v2809
  %3752 = vmatpush.bf16.msra.mxu0 %v2797
  %3753 = vmatpush.bf16.msra.mxu0 %v2785
  %3754 = vmatpush.bf16.msra.mxu0 %v2773
  %3755 = vmatmul.bf16.gmra.mxu0 %v53
  %v3756 = vpop.f32.mrf.mxu0
  %v3757 = vadd.f32 %v3744, %v3756
  %v3758 = vpop.f32.mrf.mxu0
  %3759 = vdwg.mxu0
  %3760 = vmatpush.bf16.msra.mxu0 %v2953
  %3761 = vmatpush.bf16.msra.mxu0 %v2941
  %3762 = vmatpush.bf16.msra.mxu0 %v2929
  %3763 = vmatpush.bf16.msra.mxu0 %v2917
  %3764 = vmatpush.bf16.msra.mxu0 %v2905
  %3765 = vmatpush.bf16.msra.mxu0 %v2893
  %3766 = vmatpush.bf16.msra.mxu0 %v2881
  %3767 = vmatpush.bf16.msra.mxu0 %v2869
  %3768 = vmatmul.bf16.gmra.mxu0 %v54
  %v3769 = vpop.f32.mrf.mxu0
  %v3770 = vadd.f32 %v3757, %v3769
  %v3771 = vpop.f32.mrf.mxu0
  %3772 = vdwg.mxu0
  %3773 = vmatpush.bf16.msra.mxu0 %v2474
  %3774 = vmatpush.bf16.msra.mxu0 %v2462
  %3775 = vmatpush.bf16.msra.mxu0 %v2450
  %3776 = vmatpush.bf16.msra.mxu0 %v2438
  %3777 = vmatpush.bf16.msra.mxu0 %v2426
  %3778 = vmatpush.bf16.msra.mxu0 %v2414
  %3779 = vmatpush.bf16.msra.mxu0 %v2402
  %3780 = vmatpush.bf16.msra.mxu0 %v2390
  %3781 = vmatmul.bf16.gmra.mxu0 %v49
  %v3782 = vpop.f32.mrf.mxu0
  %v3783 = vadd.f32 %v638, %v3782
  %v3784 = vpop.f32.mrf.mxu0
  %3785 = vdwg.mxu0
  %3786 = vmatpush.bf16.msra.mxu0 %v2570
  %3787 = vmatpush.bf16.msra.mxu0 %v2558
  %3788 = vmatpush.bf16.msra.mxu0 %v2546
  %3789 = vmatpush.bf16.msra.mxu0 %v2534
  %3790 = vmatpush.bf16.msra.mxu0 %v2522
  %3791 = vmatpush.bf16.msra.mxu0 %v2510
  %3792 = vmatpush.bf16.msra.mxu0 %v2498
  %3793 = vmatpush.bf16.msra.mxu0 %v2486
  %3794 = vmatmul.bf16.gmra.mxu0 %v50
  %v3795 = vpop.f32.mrf.mxu0
  %v3796 = vadd.f32 %v3783, %v3795
  %v3797 = vpop.f32.mrf.mxu0
  %3798 = vdwg.mxu0
  %3799 = vmatpush.bf16.msra.mxu0 %v2666
  %3800 = vmatpush.bf16.msra.mxu0 %v2654
  %3801 = vmatpush.bf16.msra.mxu0 %v2642
  %3802 = vmatpush.bf16.msra.mxu0 %v2630
  %3803 = vmatpush.bf16.msra.mxu0 %v2618
  %3804 = vmatpush.bf16.msra.mxu0 %v2606
  %3805 = vmatpush.bf16.msra.mxu0 %v2594
  %3806 = vmatpush.bf16.msra.mxu0 %v2582
  %3807 = vmatmul.bf16.gmra.mxu0 %v51
  %v3808 = vpop.f32.mrf.mxu0
  %v3809 = vadd.f32 %v3796, %v3808
  %v3810 = vpop.f32.mrf.mxu0
  %3811 = vdwg.mxu0
  %3812 = vmatpush.bf16.msra.mxu0 %v2762
  %3813 = vmatpush.bf16.msra.mxu0 %v2750
  %3814 = vmatpush.bf16.msra.mxu0 %v2738
  %3815 = vmatpush.bf16.msra.mxu0 %v2726
  %3816 = vmatpush.bf16.msra.mxu0 %v2714
  %3817 = vmatpush.bf16.msra.mxu0 %v2702
  %3818 = vmatpush.bf16.msra.mxu0 %v2690
  %3819 = vmatpush.bf16.msra.mxu0 %v2678
  %3820 = vmatmul.bf16.gmra.mxu0 %v52
  %v3821 = vpop.f32.mrf.mxu0
  %v3822 = vadd.f32 %v3809, %v3821
  %v3823 = vpop.f32.mrf.mxu0
  %3824 = vdwg.mxu0
  %3825 = vmatpush.bf16.msra.mxu0 %v2858
  %3826 = vmatpush.bf16.msra.mxu0 %v2846
  %3827 = vmatpush.bf16.msra.mxu0 %v2834
  %3828 = vmatpush.bf16.msra.mxu0 %v2822
  %3829 = vmatpush.bf16.msra.mxu0 %v2810
  %3830 = vmatpush.bf16.msra.mxu0 %v2798
  %3831 = vmatpush.bf16.msra.mxu0 %v2786
  %3832 = vmatpush.bf16.msra.mxu0 %v2774
  %3833 = vmatmul.bf16.gmra.mxu0 %v53
  %v3834 = vpop.f32.mrf.mxu0
  %v3835 = vadd.f32 %v3822, %v3834
  %v3836 = vpop.f32.mrf.mxu0
  %3837 = vdwg.mxu0
  %3838 = vmatpush.bf16.msra.mxu0 %v2954
  %3839 = vmatpush.bf16.msra.mxu0 %v2942
  %3840 = vmatpush.bf16.msra.mxu0 %v2930
  %3841 = vmatpush.bf16.msra.mxu0 %v2918
  %3842 = vmatpush.bf16.msra.mxu0 %v2906
  %3843 = vmatpush.bf16.msra.mxu0 %v2894
  %3844 = vmatpush.bf16.msra.mxu0 %v2882
  %3845 = vmatpush.bf16.msra.mxu0 %v2870
  %3846 = vmatmul.bf16.gmra.mxu0 %v54
  %v3847 = vpop.f32.mrf.mxu0
  %v3848 = vadd.f32 %v3835, %v3847
  %v3849 = vpop.f32.mrf.mxu0
  %3850 = vdwg.mxu0
  %3851 = vmatpush.bf16.msra.mxu0 %v2475
  %3852 = vmatpush.bf16.msra.mxu0 %v2463
  %3853 = vmatpush.bf16.msra.mxu0 %v2451
  %3854 = vmatpush.bf16.msra.mxu0 %v2439
  %3855 = vmatpush.bf16.msra.mxu0 %v2427
  %3856 = vmatpush.bf16.msra.mxu0 %v2415
  %3857 = vmatpush.bf16.msra.mxu0 %v2403
  %3858 = vmatpush.bf16.msra.mxu0 %v2391
  %3859 = vmatmul.bf16.gmra.mxu0 %v49
  %v3860 = vpop.f32.mrf.mxu0
  %v3861 = vadd.f32 %v639, %v3860
  %v3862 = vpop.f32.mrf.mxu0
  %3863 = vdwg.mxu0
  %3864 = vmatpush.bf16.msra.mxu0 %v2571
  %3865 = vmatpush.bf16.msra.mxu0 %v2559
  %3866 = vmatpush.bf16.msra.mxu0 %v2547
  %3867 = vmatpush.bf16.msra.mxu0 %v2535
  %3868 = vmatpush.bf16.msra.mxu0 %v2523
  %3869 = vmatpush.bf16.msra.mxu0 %v2511
  %3870 = vmatpush.bf16.msra.mxu0 %v2499
  %3871 = vmatpush.bf16.msra.mxu0 %v2487
  %3872 = vmatmul.bf16.gmra.mxu0 %v50
  %v3873 = vpop.f32.mrf.mxu0
  %v3874 = vadd.f32 %v3861, %v3873
  %v3875 = vpop.f32.mrf.mxu0
  %3876 = vdwg.mxu0
  %3877 = vmatpush.bf16.msra.mxu0 %v2667
  %3878 = vmatpush.bf16.msra.mxu0 %v2655
  %3879 = vmatpush.bf16.msra.mxu0 %v2643
  %3880 = vmatpush.bf16.msra.mxu0 %v2631
  %3881 = vmatpush.bf16.msra.mxu0 %v2619
  %3882 = vmatpush.bf16.msra.mxu0 %v2607
  %3883 = vmatpush.bf16.msra.mxu0 %v2595
  %3884 = vmatpush.bf16.msra.mxu0 %v2583
  %3885 = vmatmul.bf16.gmra.mxu0 %v51
  %v3886 = vpop.f32.mrf.mxu0
  %v3887 = vadd.f32 %v3874, %v3886
  %v3888 = vpop.f32.mrf.mxu0
  %3889 = vdwg.mxu0
  %3890 = vmatpush.bf16.msra.mxu0 %v2763
  %3891 = vmatpush.bf16.msra.mxu0 %v2751
  %3892 = vmatpush.bf16.msra.mxu0 %v2739
  %3893 = vmatpush.bf16.msra.mxu0 %v2727
  %3894 = vmatpush.bf16.msra.mxu0 %v2715
  %3895 = vmatpush.bf16.msra.mxu0 %v2703
  %3896 = vmatpush.bf16.msra.mxu0 %v2691
  %3897 = vmatpush.bf16.msra.mxu0 %v2679
  %3898 = vmatmul.bf16.gmra.mxu0 %v52
  %v3899 = vpop.f32.mrf.mxu0
  %v3900 = vadd.f32 %v3887, %v3899
  %v3901 = vpop.f32.mrf.mxu0
  %3902 = vdwg.mxu0
  %3903 = vmatpush.bf16.msra.mxu0 %v2859
  %3904 = vmatpush.bf16.msra.mxu0 %v2847
  %3905 = vmatpush.bf16.msra.mxu0 %v2835
  %3906 = vmatpush.bf16.msra.mxu0 %v2823
  %3907 = vmatpush.bf16.msra.mxu0 %v2811
  %3908 = vmatpush.bf16.msra.mxu0 %v2799
  %3909 = vmatpush.bf16.msra.mxu0 %v2787
  %3910 = vmatpush.bf16.msra.mxu0 %v2775
  %3911 = vmatmul.bf16.gmra.mxu0 %v53
  %v3912 = vpop.f32.mrf.mxu0
  %v3913 = vadd.f32 %v3900, %v3912
  %v3914 = vpop.f32.mrf.mxu0
  %3915 = vdwg.mxu0
  %3916 = vmatpush.bf16.msra.mxu0 %v2955
  %3917 = vmatpush.bf16.msra.mxu0 %v2943
  %3918 = vmatpush.bf16.msra.mxu0 %v2931
  %3919 = vmatpush.bf16.msra.mxu0 %v2919
  %3920 = vmatpush.bf16.msra.mxu0 %v2907
  %3921 = vmatpush.bf16.msra.mxu0 %v2895
  %3922 = vmatpush.bf16.msra.mxu0 %v2883
  %3923 = vmatpush.bf16.msra.mxu0 %v2871
  %3924 = vmatmul.bf16.gmra.mxu0 %v54
  %v3925 = vpop.f32.mrf.mxu0
  %v3926 = vadd.f32 %v3913, %v3925
  %v3927 = vpop.f32.mrf.mxu0
  %3928 = vdwg.mxu0
  %3929 = vmatpush.bf16.msra.mxu0 %v2476
  %3930 = vmatpush.bf16.msra.mxu0 %v2464
  %3931 = vmatpush.bf16.msra.mxu0 %v2452
  %3932 = vmatpush.bf16.msra.mxu0 %v2440
  %3933 = vmatpush.bf16.msra.mxu0 %v2428
  %3934 = vmatpush.bf16.msra.mxu0 %v2416
  %3935 = vmatpush.bf16.msra.mxu0 %v2404
  %3936 = vmatpush.bf16.msra.mxu0 %v2392
  %3937 = vmatmul.bf16.gmra.mxu0 %v49
  %v3938 = vpop.f32.mrf.mxu0
  %v3939 = vadd.f32 %v640, %v3938
  %v3940 = vpop.f32.mrf.mxu0
  %3941 = vdwg.mxu0
  %3942 = vmatpush.bf16.msra.mxu0 %v2572
  %3943 = vmatpush.bf16.msra.mxu0 %v2560
  %3944 = vmatpush.bf16.msra.mxu0 %v2548
  %3945 = vmatpush.bf16.msra.mxu0 %v2536
  %3946 = vmatpush.bf16.msra.mxu0 %v2524
  %3947 = vmatpush.bf16.msra.mxu0 %v2512
  %3948 = vmatpush.bf16.msra.mxu0 %v2500
  %3949 = vmatpush.bf16.msra.mxu0 %v2488
  %3950 = vmatmul.bf16.gmra.mxu0 %v50
  %v3951 = vpop.f32.mrf.mxu0
  %v3952 = vadd.f32 %v3939, %v3951
  %v3953 = vpop.f32.mrf.mxu0
  %3954 = vdwg.mxu0
  %3955 = vmatpush.bf16.msra.mxu0 %v2668
  %3956 = vmatpush.bf16.msra.mxu0 %v2656
  %3957 = vmatpush.bf16.msra.mxu0 %v2644
  %3958 = vmatpush.bf16.msra.mxu0 %v2632
  %3959 = vmatpush.bf16.msra.mxu0 %v2620
  %3960 = vmatpush.bf16.msra.mxu0 %v2608
  %3961 = vmatpush.bf16.msra.mxu0 %v2596
  %3962 = vmatpush.bf16.msra.mxu0 %v2584
  %3963 = vmatmul.bf16.gmra.mxu0 %v51
  %v3964 = vpop.f32.mrf.mxu0
  %v3965 = vadd.f32 %v3952, %v3964
  %v3966 = vpop.f32.mrf.mxu0
  %3967 = vdwg.mxu0
  %3968 = vmatpush.bf16.msra.mxu0 %v2764
  %3969 = vmatpush.bf16.msra.mxu0 %v2752
  %3970 = vmatpush.bf16.msra.mxu0 %v2740
  %3971 = vmatpush.bf16.msra.mxu0 %v2728
  %3972 = vmatpush.bf16.msra.mxu0 %v2716
  %3973 = vmatpush.bf16.msra.mxu0 %v2704
  %3974 = vmatpush.bf16.msra.mxu0 %v2692
  %3975 = vmatpush.bf16.msra.mxu0 %v2680
  %3976 = vmatmul.bf16.gmra.mxu0 %v52
  %v3977 = vpop.f32.mrf.mxu0
  %v3978 = vadd.f32 %v3965, %v3977
  %v3979 = vpop.f32.mrf.mxu0
  %3980 = vdwg.mxu0
  %3981 = vmatpush.bf16.msra.mxu0 %v2860
  %3982 = vmatpush.bf16.msra.mxu0 %v2848
  %3983 = vmatpush.bf16.msra.mxu0 %v2836
  %3984 = vmatpush.bf16.msra.mxu0 %v2824
  %3985 = vmatpush.bf16.msra.mxu0 %v2812
  %3986 = vmatpush.bf16.msra.mxu0 %v2800
  %3987 = vmatpush.bf16.msra.mxu0 %v2788
  %3988 = vmatpush.bf16.msra.mxu0 %v2776
  %3989 = vmatmul.bf16.gmra.mxu0 %v53
  %v3990 = vpop.f32.mrf.mxu0
  %v3991 = vadd.f32 %v3978, %v3990
  %v3992 = vpop.f32.mrf.mxu0
  %3993 = vdwg.mxu0
  %3994 = vmatpush.bf16.msra.mxu0 %v2956
  %3995 = vmatpush.bf16.msra.mxu0 %v2944
  %3996 = vmatpush.bf16.msra.mxu0 %v2932
  %3997 = vmatpush.bf16.msra.mxu0 %v2920
  %3998 = vmatpush.bf16.msra.mxu0 %v2908
  %3999 = vmatpush.bf16.msra.mxu0 %v2896
  %4000 = vmatpush.bf16.msra.mxu0 %v2884
  %4001 = vmatpush.bf16.msra.mxu0 %v2872
  %4002 = vmatmul.bf16.gmra.mxu0 %v54
  %v4003 = vpop.f32.mrf.mxu0
  %v4004 = vadd.f32 %v3991, %v4003
  %v4005 = vpop.f32.mrf.mxu0
  %4006 = vdwg.mxu0
  %4007 = vmatpush.bf16.msra.mxu0 %v2477
  %4008 = vmatpush.bf16.msra.mxu0 %v2465
  %4009 = vmatpush.bf16.msra.mxu0 %v2453
  %4010 = vmatpush.bf16.msra.mxu0 %v2441
  %4011 = vmatpush.bf16.msra.mxu0 %v2429
  %4012 = vmatpush.bf16.msra.mxu0 %v2417
  %4013 = vmatpush.bf16.msra.mxu0 %v2405
  %4014 = vmatpush.bf16.msra.mxu0 %v2393
  %4015 = vmatmul.bf16.gmra.mxu0 %v49
  %v4016 = vpop.f32.mrf.mxu0
  %v4017 = vadd.f32 %v641, %v4016
  %v4018 = vpop.f32.mrf.mxu0
  %4019 = vdwg.mxu0
  %4020 = vmatpush.bf16.msra.mxu0 %v2573
  %4021 = vmatpush.bf16.msra.mxu0 %v2561
  %4022 = vmatpush.bf16.msra.mxu0 %v2549
  %4023 = vmatpush.bf16.msra.mxu0 %v2537
  %4024 = vmatpush.bf16.msra.mxu0 %v2525
  %4025 = vmatpush.bf16.msra.mxu0 %v2513
  %4026 = vmatpush.bf16.msra.mxu0 %v2501
  %4027 = vmatpush.bf16.msra.mxu0 %v2489
  %4028 = vmatmul.bf16.gmra.mxu0 %v50
  %v4029 = vpop.f32.mrf.mxu0
  %v4030 = vadd.f32 %v4017, %v4029
  %v4031 = vpop.f32.mrf.mxu0
  %4032 = vdwg.mxu0
  %4033 = vmatpush.bf16.msra.mxu0 %v2669
  %4034 = vmatpush.bf16.msra.mxu0 %v2657
  %4035 = vmatpush.bf16.msra.mxu0 %v2645
  %4036 = vmatpush.bf16.msra.mxu0 %v2633
  %4037 = vmatpush.bf16.msra.mxu0 %v2621
  %4038 = vmatpush.bf16.msra.mxu0 %v2609
  %4039 = vmatpush.bf16.msra.mxu0 %v2597
  %4040 = vmatpush.bf16.msra.mxu0 %v2585
  %4041 = vmatmul.bf16.gmra.mxu0 %v51
  %v4042 = vpop.f32.mrf.mxu0
  %v4043 = vadd.f32 %v4030, %v4042
  %v4044 = vpop.f32.mrf.mxu0
  %4045 = vdwg.mxu0
  %4046 = vmatpush.bf16.msra.mxu0 %v2765
  %4047 = vmatpush.bf16.msra.mxu0 %v2753
  %4048 = vmatpush.bf16.msra.mxu0 %v2741
  %4049 = vmatpush.bf16.msra.mxu0 %v2729
  %4050 = vmatpush.bf16.msra.mxu0 %v2717
  %4051 = vmatpush.bf16.msra.mxu0 %v2705
  %4052 = vmatpush.bf16.msra.mxu0 %v2693
  %4053 = vmatpush.bf16.msra.mxu0 %v2681
  %4054 = vmatmul.bf16.gmra.mxu0 %v52
  %v4055 = vpop.f32.mrf.mxu0
  %v4056 = vadd.f32 %v4043, %v4055
  %v4057 = vpop.f32.mrf.mxu0
  %4058 = vdwg.mxu0
  %4059 = vmatpush.bf16.msra.mxu0 %v2861
  %4060 = vmatpush.bf16.msra.mxu0 %v2849
  %4061 = vmatpush.bf16.msra.mxu0 %v2837
  %4062 = vmatpush.bf16.msra.mxu0 %v2825
  %4063 = vmatpush.bf16.msra.mxu0 %v2813
  %4064 = vmatpush.bf16.msra.mxu0 %v2801
  %4065 = vmatpush.bf16.msra.mxu0 %v2789
  %4066 = vmatpush.bf16.msra.mxu0 %v2777
  %4067 = vmatmul.bf16.gmra.mxu0 %v53
  %v4068 = vpop.f32.mrf.mxu0
  %v4069 = vadd.f32 %v4056, %v4068
  %v4070 = vpop.f32.mrf.mxu0
  %4071 = vdwg.mxu0
  %4072 = vmatpush.bf16.msra.mxu0 %v2957
  %4073 = vmatpush.bf16.msra.mxu0 %v2945
  %4074 = vmatpush.bf16.msra.mxu0 %v2933
  %4075 = vmatpush.bf16.msra.mxu0 %v2921
  %4076 = vmatpush.bf16.msra.mxu0 %v2909
  %4077 = vmatpush.bf16.msra.mxu0 %v2897
  %4078 = vmatpush.bf16.msra.mxu0 %v2885
  %4079 = vmatpush.bf16.msra.mxu0 %v2873
  %4080 = vmatmul.bf16.gmra.mxu0 %v54
  %v4081 = vpop.f32.mrf.mxu0
  %v4082 = vadd.f32 %v4069, %v4081
  %v4083 = vpop.f32.mrf.mxu0
  %4084 = vdwg.mxu0
  %4085 = vmatpush.bf16.msra.mxu0 %v2478
  %4086 = vmatpush.bf16.msra.mxu0 %v2466
  %4087 = vmatpush.bf16.msra.mxu0 %v2454
  %4088 = vmatpush.bf16.msra.mxu0 %v2442
  %4089 = vmatpush.bf16.msra.mxu0 %v2430
  %4090 = vmatpush.bf16.msra.mxu0 %v2418
  %4091 = vmatpush.bf16.msra.mxu0 %v2406
  %4092 = vmatpush.bf16.msra.mxu0 %v2394
  %4093 = vmatmul.bf16.gmra.mxu0 %v49
  %v4094 = vpop.f32.mrf.mxu0
  %v4095 = vadd.f32 %v642, %v4094
  %v4096 = vpop.f32.mrf.mxu0
  %4097 = vdwg.mxu0
  %4098 = vmatpush.bf16.msra.mxu0 %v2574
  %4099 = vmatpush.bf16.msra.mxu0 %v2562
  %4100 = vmatpush.bf16.msra.mxu0 %v2550
  %4101 = vmatpush.bf16.msra.mxu0 %v2538
  %4102 = vmatpush.bf16.msra.mxu0 %v2526
  %4103 = vmatpush.bf16.msra.mxu0 %v2514
  %4104 = vmatpush.bf16.msra.mxu0 %v2502
  %4105 = vmatpush.bf16.msra.mxu0 %v2490
  %4106 = vmatmul.bf16.gmra.mxu0 %v50
  %v4107 = vpop.f32.mrf.mxu0
  %v4108 = vadd.f32 %v4095, %v4107
  %v4109 = vpop.f32.mrf.mxu0
  %4110 = vdwg.mxu0
  %4111 = vmatpush.bf16.msra.mxu0 %v2670
  %4112 = vmatpush.bf16.msra.mxu0 %v2658
  %4113 = vmatpush.bf16.msra.mxu0 %v2646
  %4114 = vmatpush.bf16.msra.mxu0 %v2634
  %4115 = vmatpush.bf16.msra.mxu0 %v2622
  %4116 = vmatpush.bf16.msra.mxu0 %v2610
  %4117 = vmatpush.bf16.msra.mxu0 %v2598
  %4118 = vmatpush.bf16.msra.mxu0 %v2586
  %4119 = vmatmul.bf16.gmra.mxu0 %v51
  %v4120 = vpop.f32.mrf.mxu0
  %v4121 = vadd.f32 %v4108, %v4120
  %v4122 = vpop.f32.mrf.mxu0
  %4123 = vdwg.mxu0
  %4124 = vmatpush.bf16.msra.mxu0 %v2766
  %4125 = vmatpush.bf16.msra.mxu0 %v2754
  %4126 = vmatpush.bf16.msra.mxu0 %v2742
  %4127 = vmatpush.bf16.msra.mxu0 %v2730
  %4128 = vmatpush.bf16.msra.mxu0 %v2718
  %4129 = vmatpush.bf16.msra.mxu0 %v2706
  %4130 = vmatpush.bf16.msra.mxu0 %v2694
  %4131 = vmatpush.bf16.msra.mxu0 %v2682
  %4132 = vmatmul.bf16.gmra.mxu0 %v52
  %v4133 = vpop.f32.mrf.mxu0
  %v4134 = vadd.f32 %v4121, %v4133
  %v4135 = vpop.f32.mrf.mxu0
  %4136 = vdwg.mxu0
  %4137 = vmatpush.bf16.msra.mxu0 %v2862
  %4138 = vmatpush.bf16.msra.mxu0 %v2850
  %4139 = vmatpush.bf16.msra.mxu0 %v2838
  %4140 = vmatpush.bf16.msra.mxu0 %v2826
  %4141 = vmatpush.bf16.msra.mxu0 %v2814
  %4142 = vmatpush.bf16.msra.mxu0 %v2802
  %4143 = vmatpush.bf16.msra.mxu0 %v2790
  %4144 = vmatpush.bf16.msra.mxu0 %v2778
  %4145 = vmatmul.bf16.gmra.mxu0 %v53
  %v4146 = vpop.f32.mrf.mxu0
  %v4147 = vadd.f32 %v4134, %v4146
  %v4148 = vpop.f32.mrf.mxu0
  %4149 = vdwg.mxu0
  %4150 = vmatpush.bf16.msra.mxu0 %v2958
  %4151 = vmatpush.bf16.msra.mxu0 %v2946
  %4152 = vmatpush.bf16.msra.mxu0 %v2934
  %4153 = vmatpush.bf16.msra.mxu0 %v2922
  %4154 = vmatpush.bf16.msra.mxu0 %v2910
  %4155 = vmatpush.bf16.msra.mxu0 %v2898
  %4156 = vmatpush.bf16.msra.mxu0 %v2886
  %4157 = vmatpush.bf16.msra.mxu0 %v2874
  %4158 = vmatmul.bf16.gmra.mxu0 %v54
  %v4159 = vpop.f32.mrf.mxu0
  %v4160 = vadd.f32 %v4147, %v4159
  %v4161 = vpop.f32.mrf.mxu0
  %4162 = vdwg.mxu0
  %4163 = vmatpush.bf16.msra.mxu0 %v2479
  %4164 = vmatpush.bf16.msra.mxu0 %v2467
  %4165 = vmatpush.bf16.msra.mxu0 %v2455
  %4166 = vmatpush.bf16.msra.mxu0 %v2443
  %4167 = vmatpush.bf16.msra.mxu0 %v2431
  %4168 = vmatpush.bf16.msra.mxu0 %v2419
  %4169 = vmatpush.bf16.msra.mxu0 %v2407
  %4170 = vmatpush.bf16.msra.mxu0 %v2395
  %4171 = vmatmul.bf16.gmra.mxu0 %v49
  %v4172 = vpop.f32.mrf.mxu0
  %v4173 = vadd.f32 %v643, %v4172
  %v4174 = vpop.f32.mrf.mxu0
  %4175 = vdwg.mxu0
  %4176 = vmatpush.bf16.msra.mxu0 %v2575
  %4177 = vmatpush.bf16.msra.mxu0 %v2563
  %4178 = vmatpush.bf16.msra.mxu0 %v2551
  %4179 = vmatpush.bf16.msra.mxu0 %v2539
  %4180 = vmatpush.bf16.msra.mxu0 %v2527
  %4181 = vmatpush.bf16.msra.mxu0 %v2515
  %4182 = vmatpush.bf16.msra.mxu0 %v2503
  %4183 = vmatpush.bf16.msra.mxu0 %v2491
  %4184 = vmatmul.bf16.gmra.mxu0 %v50
  %v4185 = vpop.f32.mrf.mxu0
  %v4186 = vadd.f32 %v4173, %v4185
  %v4187 = vpop.f32.mrf.mxu0
  %4188 = vdwg.mxu0
  %4189 = vmatpush.bf16.msra.mxu0 %v2671
  %4190 = vmatpush.bf16.msra.mxu0 %v2659
  %4191 = vmatpush.bf16.msra.mxu0 %v2647
  %4192 = vmatpush.bf16.msra.mxu0 %v2635
  %4193 = vmatpush.bf16.msra.mxu0 %v2623
  %4194 = vmatpush.bf16.msra.mxu0 %v2611
  %4195 = vmatpush.bf16.msra.mxu0 %v2599
  %4196 = vmatpush.bf16.msra.mxu0 %v2587
  %4197 = vmatmul.bf16.gmra.mxu0 %v51
  %v4198 = vpop.f32.mrf.mxu0
  %v4199 = vadd.f32 %v4186, %v4198
  %v4200 = vpop.f32.mrf.mxu0
  %4201 = vdwg.mxu0
  %4202 = vmatpush.bf16.msra.mxu0 %v2767
  %4203 = vmatpush.bf16.msra.mxu0 %v2755
  %4204 = vmatpush.bf16.msra.mxu0 %v2743
  %4205 = vmatpush.bf16.msra.mxu0 %v2731
  %4206 = vmatpush.bf16.msra.mxu0 %v2719
  %4207 = vmatpush.bf16.msra.mxu0 %v2707
  %4208 = vmatpush.bf16.msra.mxu0 %v2695
  %4209 = vmatpush.bf16.msra.mxu0 %v2683
  %4210 = vmatmul.bf16.gmra.mxu0 %v52
  %v4211 = vpop.f32.mrf.mxu0
  %v4212 = vadd.f32 %v4199, %v4211
  %v4213 = vpop.f32.mrf.mxu0
  %4214 = vdwg.mxu0
  %4215 = vmatpush.bf16.msra.mxu0 %v2863
  %4216 = vmatpush.bf16.msra.mxu0 %v2851
  %4217 = vmatpush.bf16.msra.mxu0 %v2839
  %4218 = vmatpush.bf16.msra.mxu0 %v2827
  %4219 = vmatpush.bf16.msra.mxu0 %v2815
  %4220 = vmatpush.bf16.msra.mxu0 %v2803
  %4221 = vmatpush.bf16.msra.mxu0 %v2791
  %4222 = vmatpush.bf16.msra.mxu0 %v2779
  %4223 = vmatmul.bf16.gmra.mxu0 %v53
  %v4224 = vpop.f32.mrf.mxu0
  %v4225 = vadd.f32 %v4212, %v4224
  %v4226 = vpop.f32.mrf.mxu0
  %4227 = vdwg.mxu0
  %4228 = vmatpush.bf16.msra.mxu0 %v2959
  %4229 = vmatpush.bf16.msra.mxu0 %v2947
  %4230 = vmatpush.bf16.msra.mxu0 %v2935
  %4231 = vmatpush.bf16.msra.mxu0 %v2923
  %4232 = vmatpush.bf16.msra.mxu0 %v2911
  %4233 = vmatpush.bf16.msra.mxu0 %v2899
  %4234 = vmatpush.bf16.msra.mxu0 %v2887
  %4235 = vmatpush.bf16.msra.mxu0 %v2875
  %4236 = vmatmul.bf16.gmra.mxu0 %v54
  %v4237 = vpop.f32.mrf.mxu0
  %v4238 = vadd.f32 %v4225, %v4237
  %v4239 = vpop.f32.mrf.mxu0
  %4240 = vdwg.mxu0
  %4241 = vmatpush.bf16.msra.mxu0 %v2480
  %4242 = vmatpush.bf16.msra.mxu0 %v2468
  %4243 = vmatpush.bf16.msra.mxu0 %v2456
  %4244 = vmatpush.bf16.msra.mxu0 %v2444
  %4245 = vmatpush.bf16.msra.mxu0 %v2432
  %4246 = vmatpush.bf16.msra.mxu0 %v2420
  %4247 = vmatpush.bf16.msra.mxu0 %v2408
  %4248 = vmatpush.bf16.msra.mxu0 %v2396
  %4249 = vmatmul.bf16.gmra.mxu0 %v49
  %v4250 = vpop.f32.mrf.mxu0
  %v4251 = vadd.f32 %v644, %v4250
  %v4252 = vpop.f32.mrf.mxu0
  %4253 = vdwg.mxu0
  %4254 = vmatpush.bf16.msra.mxu0 %v2576
  %4255 = vmatpush.bf16.msra.mxu0 %v2564
  %4256 = vmatpush.bf16.msra.mxu0 %v2552
  %4257 = vmatpush.bf16.msra.mxu0 %v2540
  %4258 = vmatpush.bf16.msra.mxu0 %v2528
  %4259 = vmatpush.bf16.msra.mxu0 %v2516
  %4260 = vmatpush.bf16.msra.mxu0 %v2504
  %4261 = vmatpush.bf16.msra.mxu0 %v2492
  %4262 = vmatmul.bf16.gmra.mxu0 %v50
  %v4263 = vpop.f32.mrf.mxu0
  %v4264 = vadd.f32 %v4251, %v4263
  %v4265 = vpop.f32.mrf.mxu0
  %4266 = vdwg.mxu0
  %4267 = vmatpush.bf16.msra.mxu0 %v2672
  %4268 = vmatpush.bf16.msra.mxu0 %v2660
  %4269 = vmatpush.bf16.msra.mxu0 %v2648
  %4270 = vmatpush.bf16.msra.mxu0 %v2636
  %4271 = vmatpush.bf16.msra.mxu0 %v2624
  %4272 = vmatpush.bf16.msra.mxu0 %v2612
  %4273 = vmatpush.bf16.msra.mxu0 %v2600
  %4274 = vmatpush.bf16.msra.mxu0 %v2588
  %4275 = vmatmul.bf16.gmra.mxu0 %v51
  %v4276 = vpop.f32.mrf.mxu0
  %v4277 = vadd.f32 %v4264, %v4276
  %v4278 = vpop.f32.mrf.mxu0
  %4279 = vdwg.mxu0
  %4280 = vmatpush.bf16.msra.mxu0 %v2768
  %4281 = vmatpush.bf16.msra.mxu0 %v2756
  %4282 = vmatpush.bf16.msra.mxu0 %v2744
  %4283 = vmatpush.bf16.msra.mxu0 %v2732
  %4284 = vmatpush.bf16.msra.mxu0 %v2720
  %4285 = vmatpush.bf16.msra.mxu0 %v2708
  %4286 = vmatpush.bf16.msra.mxu0 %v2696
  %4287 = vmatpush.bf16.msra.mxu0 %v2684
  %4288 = vmatmul.bf16.gmra.mxu0 %v52
  %v4289 = vpop.f32.mrf.mxu0
  %v4290 = vadd.f32 %v4277, %v4289
  %v4291 = vpop.f32.mrf.mxu0
  %4292 = vdwg.mxu0
  %4293 = vmatpush.bf16.msra.mxu0 %v2864
  %4294 = vmatpush.bf16.msra.mxu0 %v2852
  %4295 = vmatpush.bf16.msra.mxu0 %v2840
  %4296 = vmatpush.bf16.msra.mxu0 %v2828
  %4297 = vmatpush.bf16.msra.mxu0 %v2816
  %4298 = vmatpush.bf16.msra.mxu0 %v2804
  %4299 = vmatpush.bf16.msra.mxu0 %v2792
  %4300 = vmatpush.bf16.msra.mxu0 %v2780
  %4301 = vmatmul.bf16.gmra.mxu0 %v53
  %v4302 = vpop.f32.mrf.mxu0
  %v4303 = vadd.f32 %v4290, %v4302
  %v4304 = vpop.f32.mrf.mxu0
  %4305 = vdwg.mxu0
  %4306 = vmatpush.bf16.msra.mxu0 %v2960
  %4307 = vmatpush.bf16.msra.mxu0 %v2948
  %4308 = vmatpush.bf16.msra.mxu0 %v2936
  %4309 = vmatpush.bf16.msra.mxu0 %v2924
  %4310 = vmatpush.bf16.msra.mxu0 %v2912
  %4311 = vmatpush.bf16.msra.mxu0 %v2900
  %4312 = vmatpush.bf16.msra.mxu0 %v2888
  %4313 = vmatpush.bf16.msra.mxu0 %v2876
  %4314 = vmatmul.bf16.gmra.mxu0 %v54
  %v4315 = vpop.f32.mrf.mxu0
  %v4316 = vadd.f32 %v4303, %v4315
  %v4317 = vpop.f32.mrf.mxu0
  %4318 = vdwg.mxu0
  %4319 = vmatpush.bf16.msra.mxu0 %v2481
  %4320 = vmatpush.bf16.msra.mxu0 %v2469
  %4321 = vmatpush.bf16.msra.mxu0 %v2457
  %4322 = vmatpush.bf16.msra.mxu0 %v2445
  %4323 = vmatpush.bf16.msra.mxu0 %v2433
  %4324 = vmatpush.bf16.msra.mxu0 %v2421
  %4325 = vmatpush.bf16.msra.mxu0 %v2409
  %4326 = vmatpush.bf16.msra.mxu0 %v2397
  %4327 = vmatmul.bf16.gmra.mxu0 %v49
  %v4328 = vpop.f32.mrf.mxu0
  %v4329 = vadd.f32 %v645, %v4328
  %v4330 = vpop.f32.mrf.mxu0
  %4331 = vdwg.mxu0
  %4332 = vmatpush.bf16.msra.mxu0 %v2577
  %4333 = vmatpush.bf16.msra.mxu0 %v2565
  %4334 = vmatpush.bf16.msra.mxu0 %v2553
  %4335 = vmatpush.bf16.msra.mxu0 %v2541
  %4336 = vmatpush.bf16.msra.mxu0 %v2529
  %4337 = vmatpush.bf16.msra.mxu0 %v2517
  %4338 = vmatpush.bf16.msra.mxu0 %v2505
  %4339 = vmatpush.bf16.msra.mxu0 %v2493
  %4340 = vmatmul.bf16.gmra.mxu0 %v50
  %v4341 = vpop.f32.mrf.mxu0
  %v4342 = vadd.f32 %v4329, %v4341
  %v4343 = vpop.f32.mrf.mxu0
  %4344 = vdwg.mxu0
  %4345 = vmatpush.bf16.msra.mxu0 %v2673
  %4346 = vmatpush.bf16.msra.mxu0 %v2661
  %4347 = vmatpush.bf16.msra.mxu0 %v2649
  %4348 = vmatpush.bf16.msra.mxu0 %v2637
  %4349 = vmatpush.bf16.msra.mxu0 %v2625
  %4350 = vmatpush.bf16.msra.mxu0 %v2613
  %4351 = vmatpush.bf16.msra.mxu0 %v2601
  %4352 = vmatpush.bf16.msra.mxu0 %v2589
  %4353 = vmatmul.bf16.gmra.mxu0 %v51
  %v4354 = vpop.f32.mrf.mxu0
  %v4355 = vadd.f32 %v4342, %v4354
  %v4356 = vpop.f32.mrf.mxu0
  %4357 = vdwg.mxu0
  %4358 = vmatpush.bf16.msra.mxu0 %v2769
  %4359 = vmatpush.bf16.msra.mxu0 %v2757
  %4360 = vmatpush.bf16.msra.mxu0 %v2745
  %4361 = vmatpush.bf16.msra.mxu0 %v2733
  %4362 = vmatpush.bf16.msra.mxu0 %v2721
  %4363 = vmatpush.bf16.msra.mxu0 %v2709
  %4364 = vmatpush.bf16.msra.mxu0 %v2697
  %4365 = vmatpush.bf16.msra.mxu0 %v2685
  %4366 = vmatmul.bf16.gmra.mxu0 %v52
  %v4367 = vpop.f32.mrf.mxu0
  %v4368 = vadd.f32 %v4355, %v4367
  %v4369 = vpop.f32.mrf.mxu0
  %4370 = vdwg.mxu0
  %4371 = vmatpush.bf16.msra.mxu0 %v2865
  %4372 = vmatpush.bf16.msra.mxu0 %v2853
  %4373 = vmatpush.bf16.msra.mxu0 %v2841
  %4374 = vmatpush.bf16.msra.mxu0 %v2829
  %4375 = vmatpush.bf16.msra.mxu0 %v2817
  %4376 = vmatpush.bf16.msra.mxu0 %v2805
  %4377 = vmatpush.bf16.msra.mxu0 %v2793
  %4378 = vmatpush.bf16.msra.mxu0 %v2781
  %4379 = vmatmul.bf16.gmra.mxu0 %v53
  %v4380 = vpop.f32.mrf.mxu0
  %v4381 = vadd.f32 %v4368, %v4380
  %v4382 = vpop.f32.mrf.mxu0
  %4383 = vdwg.mxu0
  %4384 = vmatpush.bf16.msra.mxu0 %v2961
  %4385 = vmatpush.bf16.msra.mxu0 %v2949
  %4386 = vmatpush.bf16.msra.mxu0 %v2937
  %4387 = vmatpush.bf16.msra.mxu0 %v2925
  %4388 = vmatpush.bf16.msra.mxu0 %v2913
  %4389 = vmatpush.bf16.msra.mxu0 %v2901
  %4390 = vmatpush.bf16.msra.mxu0 %v2889
  %4391 = vmatpush.bf16.msra.mxu0 %v2877
  %4392 = vmatmul.bf16.gmra.mxu0 %v54
  %v4393 = vpop.f32.mrf.mxu0
  %v4394 = vadd.f32 %v4381, %v4393
  %v4395 = vpop.f32.mrf.mxu0
  %4396 = vdwg.mxu0
  %4397 = vmatpush.bf16.msra.mxu0 %v2482
  %4398 = vmatpush.bf16.msra.mxu0 %v2470
  %4399 = vmatpush.bf16.msra.mxu0 %v2458
  %4400 = vmatpush.bf16.msra.mxu0 %v2446
  %4401 = vmatpush.bf16.msra.mxu0 %v2434
  %4402 = vmatpush.bf16.msra.mxu0 %v2422
  %4403 = vmatpush.bf16.msra.mxu0 %v2410
  %4404 = vmatpush.bf16.msra.mxu0 %v2398
  %4405 = vmatmul.bf16.gmra.mxu0 %v49
  %v4406 = vpop.f32.mrf.mxu0
  %v4407 = vadd.f32 %v646, %v4406
  %v4408 = vpop.f32.mrf.mxu0
  %4409 = vdwg.mxu0
  %4410 = vmatpush.bf16.msra.mxu0 %v2578
  %4411 = vmatpush.bf16.msra.mxu0 %v2566
  %4412 = vmatpush.bf16.msra.mxu0 %v2554
  %4413 = vmatpush.bf16.msra.mxu0 %v2542
  %4414 = vmatpush.bf16.msra.mxu0 %v2530
  %4415 = vmatpush.bf16.msra.mxu0 %v2518
  %4416 = vmatpush.bf16.msra.mxu0 %v2506
  %4417 = vmatpush.bf16.msra.mxu0 %v2494
  %4418 = vmatmul.bf16.gmra.mxu0 %v50
  %v4419 = vpop.f32.mrf.mxu0
  %v4420 = vadd.f32 %v4407, %v4419
  %v4421 = vpop.f32.mrf.mxu0
  %4422 = vdwg.mxu0
  %4423 = vmatpush.bf16.msra.mxu0 %v2674
  %4424 = vmatpush.bf16.msra.mxu0 %v2662
  %4425 = vmatpush.bf16.msra.mxu0 %v2650
  %4426 = vmatpush.bf16.msra.mxu0 %v2638
  %4427 = vmatpush.bf16.msra.mxu0 %v2626
  %4428 = vmatpush.bf16.msra.mxu0 %v2614
  %4429 = vmatpush.bf16.msra.mxu0 %v2602
  %4430 = vmatpush.bf16.msra.mxu0 %v2590
  %4431 = vmatmul.bf16.gmra.mxu0 %v51
  %v4432 = vpop.f32.mrf.mxu0
  %v4433 = vadd.f32 %v4420, %v4432
  %v4434 = vpop.f32.mrf.mxu0
  %4435 = vdwg.mxu0
  %4436 = vmatpush.bf16.msra.mxu0 %v2770
  %4437 = vmatpush.bf16.msra.mxu0 %v2758
  %4438 = vmatpush.bf16.msra.mxu0 %v2746
  %4439 = vmatpush.bf16.msra.mxu0 %v2734
  %4440 = vmatpush.bf16.msra.mxu0 %v2722
  %4441 = vmatpush.bf16.msra.mxu0 %v2710
  %4442 = vmatpush.bf16.msra.mxu0 %v2698
  %4443 = vmatpush.bf16.msra.mxu0 %v2686
  %4444 = vmatmul.bf16.gmra.mxu0 %v52
  %v4445 = vpop.f32.mrf.mxu0
  %v4446 = vadd.f32 %v4433, %v4445
  %v4447 = vpop.f32.mrf.mxu0
  %4448 = vdwg.mxu0
  %4449 = vmatpush.bf16.msra.mxu0 %v2866
  %4450 = vmatpush.bf16.msra.mxu0 %v2854
  %4451 = vmatpush.bf16.msra.mxu0 %v2842
  %4452 = vmatpush.bf16.msra.mxu0 %v2830
  %4453 = vmatpush.bf16.msra.mxu0 %v2818
  %4454 = vmatpush.bf16.msra.mxu0 %v2806
  %4455 = vmatpush.bf16.msra.mxu0 %v2794
  %4456 = vmatpush.bf16.msra.mxu0 %v2782
  %4457 = vmatmul.bf16.gmra.mxu0 %v53
  %v4458 = vpop.f32.mrf.mxu0
  %v4459 = vadd.f32 %v4446, %v4458
  %v4460 = vpop.f32.mrf.mxu0
  %4461 = vdwg.mxu0
  %4462 = vmatpush.bf16.msra.mxu0 %v2962
  %4463 = vmatpush.bf16.msra.mxu0 %v2950
  %4464 = vmatpush.bf16.msra.mxu0 %v2938
  %4465 = vmatpush.bf16.msra.mxu0 %v2926
  %4466 = vmatpush.bf16.msra.mxu0 %v2914
  %4467 = vmatpush.bf16.msra.mxu0 %v2902
  %4468 = vmatpush.bf16.msra.mxu0 %v2890
  %4469 = vmatpush.bf16.msra.mxu0 %v2878
  %4470 = vmatmul.bf16.gmra.mxu0 %v54
  %v4471 = vpop.f32.mrf.mxu0
  %v4472 = vadd.f32 %v4459, %v4471
  %v4473 = vpop.f32.mrf.mxu0
  %4474 = vdwg.mxu0
  %v4475 = vmul.f32 %v3614, 0.5
  %v4476 = vmul.f32 %v3692, 0.5
  %v4477 = vmul.f32 %v3770, 0.5
  %v4478 = vmul.f32 %v3848, 0.5
  %v4479 = vmul.f32 %v3926, 0.5
  %v4480 = vmul.f32 %v4004, 0.5
  %v4481 = vmul.f32 %v4082, 0.5
  %v4482 = vmul.f32 %v4160, 0.5
  %v4483 = vmul.f32 %v4238, 0.5
  %v4484 = vmul.f32 %v4316, 0.5
  %v4485 = vmul.f32 %v4394, 0.5
  %v4486 = vmul.f32 %v4472, 0.5
  %v4487 = vmul.f32 %v3614, 0.70710677
  %v4488 = vmul.f32 %v3692, 0.70710677
  %v4489 = vmul.f32 %v3770, 0.70710677
  %v4490 = vmul.f32 %v3848, 0.70710677
  %v4491 = vmul.f32 %v3926, 0.70710677
  %v4492 = vmul.f32 %v4004, 0.70710677
  %v4493 = vmul.f32 %v4082, 0.70710677
  %v4494 = vmul.f32 %v4160, 0.70710677
  %v4495 = vmul.f32 %v4238, 0.70710677
  %v4496 = vmul.f32 %v4316, 0.70710677
  %v4497 = vmul.f32 %v4394, 0.70710677
  %v4498 = vmul.f32 %v4472, 0.70710677
  %v4499 = vmul.f32 %v4487, %v4487
  %v4500 = vmin.f32 16.0, %v4499
  %v4501 = vmul.f32 %v4500, 2.1237322e-06
  %v4502 = vadd.f32 %v4501, 0.00028619796
  %v4503 = vmul.f32 %v4500, %v4502
  %v4504 = vadd.f32 %v4503, 0.0036580483
  %v4505 = vmul.f32 %v4500, %v4504
  %v4506 = vadd.f32 %v4505, 0.05243302
  %v4507 = vmul.f32 %v4500, %v4506
  %v4508 = vadd.f32 %v4507, 0.18741608
  %v4509 = vmul.f32 %v4500, %v4508
  %v4510 = vadd.f32 %v4509, 1.1283791
  %v4511 = vmul.f32 %v4487, %v4510
  %v4512 = vmul.f32 %v4500, 3.8918573e-05
  %v4513 = vadd.f32 %v4512, 0.001143296
  %v4514 = vmul.f32 %v4500, %v4513
  %v4515 = vadd.f32 %v4514, 0.014752088
  %v4516 = vmul.f32 %v4500, %v4515
  %v4517 = vadd.f32 %v4516, 0.112945676
  %v4518 = vmul.f32 %v4500, %v4517
  %v4519 = vadd.f32 %v4518, 0.4994258
  %v4520 = vmul.f32 %v4500, %v4519
  %v4521 = vadd.f32 %v4520, 1.0
  %v4522 = vrcp.pop %v4521
  %v4523 = vmul.f32 %v4521, %v4522
  %v4524 = vsub.f32 1.0, %v4523
  %v4525 = vmul.f32 %v4522, %v4524
  %v4526 = vadd.f32 %v4522, %v4525
  %vm4527 = vweird.f32 %v4521
  %vm4528 = vweird.f32 %v4522
  %vm4529 = vmor %vm4527, %vm4528
  %v4530 = vsel %vm4529, %v4522, %v4526
  %v4531 = vand.u32 2147483647, %v4521
  %vm4532 = vcmp.eq.f32.partialorder %v4531, 8.507059e+37
  %v4533 = vand.u32 %v4521, 2147483648
  %v4534 = vor.u32 1.1754944e-38, %v4533
  %v4535 = vsel %vm4532, %v4534, %v4530
  %v4536 = vmul.f32 %v4511, %v4535
  %v4537 = vmin.f32 %v4536, 1.0
  %v4538 = vmax.f32 %v4537, -1.0
  %v4539 = vmul.f32 %v4488, %v4488
  %v4540 = vmin.f32 16.0, %v4539
  %v4541 = vmul.f32 %v4540, 2.1237322e-06
  %v4542 = vadd.f32 %v4541, 0.00028619796
  %v4543 = vmul.f32 %v4540, %v4542
  %v4544 = vadd.f32 %v4543, 0.0036580483
  %v4545 = vmul.f32 %v4540, %v4544
  %v4546 = vadd.f32 %v4545, 0.05243302
  %v4547 = vmul.f32 %v4540, %v4546
  %v4548 = vadd.f32 %v4547, 0.18741608
  %v4549 = vmul.f32 %v4540, %v4548
  %v4550 = vadd.f32 %v4549, 1.1283791
  %v4551 = vmul.f32 %v4488, %v4550
  %v4552 = vmul.f32 %v4540, 3.8918573e-05
  %v4553 = vadd.f32 %v4552, 0.001143296
  %v4554 = vmul.f32 %v4540, %v4553
  %v4555 = vadd.f32 %v4554, 0.014752088
  %v4556 = vmul.f32 %v4540, %v4555
  %v4557 = vadd.f32 %v4556, 0.112945676
  %v4558 = vmul.f32 %v4540, %v4557
  %v4559 = vadd.f32 %v4558, 0.4994258
  %v4560 = vmul.f32 %v4540, %v4559
  %v4561 = vadd.f32 %v4560, 1.0
  %v4562 = vrcp.pop %v4561
  %v4563 = vmul.f32 %v4561, %v4562
  %v4564 = vsub.f32 1.0, %v4563
  %v4565 = vmul.f32 %v4562, %v4564
  %v4566 = vadd.f32 %v4562, %v4565
  %vm4567 = vweird.f32 %v4561
  %vm4568 = vweird.f32 %v4562
  %vm4569 = vmor %vm4567, %vm4568
  %v4570 = vsel %vm4569, %v4562, %v4566
  %v4571 = vand.u32 2147483647, %v4561
  %vm4572 = vcmp.eq.f32.partialorder %v4571, 8.507059e+37
  %v4573 = vand.u32 %v4561, 2147483648
  %v4574 = vor.u32 1.1754944e-38, %v4573
  %v4575 = vsel %vm4572, %v4574, %v4570
  %v4576 = vmul.f32 %v4551, %v4575
  %v4577 = vmin.f32 %v4576, 1.0
  %v4578 = vmax.f32 %v4577, -1.0
  %v4579 = vmul.f32 %v4489, %v4489
  %v4580 = vmin.f32 16.0, %v4579
  %v4581 = vmul.f32 %v4580, 2.1237322e-06
  %v4582 = vadd.f32 %v4581, 0.00028619796
  %v4583 = vmul.f32 %v4580, %v4582
  %v4584 = vadd.f32 %v4583, 0.0036580483
  %v4585 = vmul.f32 %v4580, %v4584
  %v4586 = vadd.f32 %v4585, 0.05243302
  %v4587 = vmul.f32 %v4580, %v4586
  %v4588 = vadd.f32 %v4587, 0.18741608
  %v4589 = vmul.f32 %v4580, %v4588
  %v4590 = vadd.f32 %v4589, 1.1283791
  %v4591 = vmul.f32 %v4489, %v4590
  %v4592 = vmul.f32 %v4580, 3.8918573e-05
  %v4593 = vadd.f32 %v4592, 0.001143296
  %v4594 = vmul.f32 %v4580, %v4593
  %v4595 = vadd.f32 %v4594, 0.014752088
  %v4596 = vmul.f32 %v4580, %v4595
  %v4597 = vadd.f32 %v4596, 0.112945676
  %v4598 = vmul.f32 %v4580, %v4597
  %v4599 = vadd.f32 %v4598, 0.4994258
  %v4600 = vmul.f32 %v4580, %v4599
  %v4601 = vadd.f32 %v4600, 1.0
  %v4602 = vrcp.pop %v4601
  %v4603 = vmul.f32 %v4601, %v4602
  %v4604 = vsub.f32 1.0, %v4603
  %v4605 = vmul.f32 %v4602, %v4604
  %v4606 = vadd.f32 %v4602, %v4605
  %vm4607 = vweird.f32 %v4601
  %vm4608 = vweird.f32 %v4602
  %vm4609 = vmor %vm4607, %vm4608
  %v4610 = vsel %vm4609, %v4602, %v4606
  %v4611 = vand.u32 2147483647, %v4601
  %vm4612 = vcmp.eq.f32.partialorder %v4611, 8.507059e+37
  %v4613 = vand.u32 %v4601, 2147483648
  %v4614 = vor.u32 1.1754944e-38, %v4613
  %v4615 = vsel %vm4612, %v4614, %v4610
  %v4616 = vmul.f32 %v4591, %v4615
  %v4617 = vmin.f32 %v4616, 1.0
  %v4618 = vmax.f32 %v4617, -1.0
  %v4619 = vmul.f32 %v4490, %v4490
  %v4620 = vmin.f32 16.0, %v4619
  %v4621 = vmul.f32 %v4620, 2.1237322e-06
  %v4622 = vadd.f32 %v4621, 0.00028619796
  %v4623 = vmul.f32 %v4620, %v4622
  %v4624 = vadd.f32 %v4623, 0.0036580483
  %v4625 = vmul.f32 %v4620, %v4624
  %v4626 = vadd.f32 %v4625, 0.05243302
  %v4627 = vmul.f32 %v4620, %v4626
  %v4628 = vadd.f32 %v4627, 0.18741608
  %v4629 = vmul.f32 %v4620, %v4628
  %v4630 = vadd.f32 %v4629, 1.1283791
  %v4631 = vmul.f32 %v4490, %v4630
  %v4632 = vmul.f32 %v4620, 3.8918573e-05
  %v4633 = vadd.f32 %v4632, 0.001143296
  %v4634 = vmul.f32 %v4620, %v4633
  %v4635 = vadd.f32 %v4634, 0.014752088
  %v4636 = vmul.f32 %v4620, %v4635
  %v4637 = vadd.f32 %v4636, 0.112945676
  %v4638 = vmul.f32 %v4620, %v4637
  %v4639 = vadd.f32 %v4638, 0.4994258
  %v4640 = vmul.f32 %v4620, %v4639
  %v4641 = vadd.f32 %v4640, 1.0
  %v4642 = vrcp.pop %v4641
  %v4643 = vmul.f32 %v4641, %v4642
  %v4644 = vsub.f32 1.0, %v4643
  %v4645 = vmul.f32 %v4642, %v4644
  %v4646 = vadd.f32 %v4642, %v4645
  %vm4647 = vweird.f32 %v4641
  %vm4648 = vweird.f32 %v4642
  %vm4649 = vmor %vm4647, %vm4648
  %v4650 = vsel %vm4649, %v4642, %v4646
  %v4651 = vand.u32 2147483647, %v4641
  %vm4652 = vcmp.eq.f32.partialorder %v4651, 8.507059e+37
  %v4653 = vand.u32 %v4641, 2147483648
  %v4654 = vor.u32 1.1754944e-38, %v4653
  %v4655 = vsel %vm4652, %v4654, %v4650
  %v4656 = vmul.f32 %v4631, %v4655
  %v4657 = vmin.f32 %v4656, 1.0
  %v4658 = vmax.f32 %v4657, -1.0
  %v4659 = vmul.f32 %v4491, %v4491
  %v4660 = vmin.f32 16.0, %v4659
  %v4661 = vmul.f32 %v4660, 2.1237322e-06
  %v4662 = vadd.f32 %v4661, 0.00028619796
  %v4663 = vmul.f32 %v4660, %v4662
  %v4664 = vadd.f32 %v4663, 0.0036580483
  %v4665 = vmul.f32 %v4660, %v4664
  %v4666 = vadd.f32 %v4665, 0.05243302
  %v4667 = vmul.f32 %v4660, %v4666
  %v4668 = vadd.f32 %v4667, 0.18741608
  %v4669 = vmul.f32 %v4660, %v4668
  %v4670 = vadd.f32 %v4669, 1.1283791
  %v4671 = vmul.f32 %v4491, %v4670
  %v4672 = vmul.f32 %v4660, 3.8918573e-05
  %v4673 = vadd.f32 %v4672, 0.001143296
  %v4674 = vmul.f32 %v4660, %v4673
  %v4675 = vadd.f32 %v4674, 0.014752088
  %v4676 = vmul.f32 %v4660, %v4675
  %v4677 = vadd.f32 %v4676, 0.112945676
  %v4678 = vmul.f32 %v4660, %v4677
  %v4679 = vadd.f32 %v4678, 0.4994258
  %v4680 = vmul.f32 %v4660, %v4679
  %v4681 = vadd.f32 %v4680, 1.0
  %v4682 = vrcp.pop %v4681
  %v4683 = vmul.f32 %v4681, %v4682
  %v4684 = vsub.f32 1.0, %v4683
  %v4685 = vmul.f32 %v4682, %v4684
  %v4686 = vadd.f32 %v4682, %v4685
  %vm4687 = vweird.f32 %v4681
  %vm4688 = vweird.f32 %v4682
  %vm4689 = vmor %vm4687, %vm4688
  %v4690 = vsel %vm4689, %v4682, %v4686
  %v4691 = vand.u32 2147483647, %v4681
  %vm4692 = vcmp.eq.f32.partialorder %v4691, 8.507059e+37
  %v4693 = vand.u32 %v4681, 2147483648
  %v4694 = vor.u32 1.1754944e-38, %v4693
  %v4695 = vsel %vm4692, %v4694, %v4690
  %v4696 = vmul.f32 %v4671, %v4695
  %v4697 = vmin.f32 %v4696, 1.0
  %v4698 = vmax.f32 %v4697, -1.0
  %v4699 = vmul.f32 %v4492, %v4492
  %v4700 = vmin.f32 16.0, %v4699
  %v4701 = vmul.f32 %v4700, 2.1237322e-06
  %v4702 = vadd.f32 %v4701, 0.00028619796
  %v4703 = vmul.f32 %v4700, %v4702
  %v4704 = vadd.f32 %v4703, 0.0036580483
  %v4705 = vmul.f32 %v4700, %v4704
  %v4706 = vadd.f32 %v4705, 0.05243302
  %v4707 = vmul.f32 %v4700, %v4706
  %v4708 = vadd.f32 %v4707, 0.18741608
  %v4709 = vmul.f32 %v4700, %v4708
  %v4710 = vadd.f32 %v4709, 1.1283791
  %v4711 = vmul.f32 %v4492, %v4710
  %v4712 = vmul.f32 %v4700, 3.8918573e-05
  %v4713 = vadd.f32 %v4712, 0.001143296
  %v4714 = vmul.f32 %v4700, %v4713
  %v4715 = vadd.f32 %v4714, 0.014752088
  %v4716 = vmul.f32 %v4700, %v4715
  %v4717 = vadd.f32 %v4716, 0.112945676
  %v4718 = vmul.f32 %v4700, %v4717
  %v4719 = vadd.f32 %v4718, 0.4994258
  %v4720 = vmul.f32 %v4700, %v4719
  %v4721 = vadd.f32 %v4720, 1.0
  %v4722 = vrcp.pop %v4721
  %v4723 = vmul.f32 %v4721, %v4722
  %v4724 = vsub.f32 1.0, %v4723
  %v4725 = vmul.f32 %v4722, %v4724
  %v4726 = vadd.f32 %v4722, %v4725
  %vm4727 = vweird.f32 %v4721
  %vm4728 = vweird.f32 %v4722
  %vm4729 = vmor %vm4727, %vm4728
  %v4730 = vsel %vm4729, %v4722, %v4726
  %v4731 = vand.u32 2147483647, %v4721
  %vm4732 = vcmp.eq.f32.partialorder %v4731, 8.507059e+37
  %v4733 = vand.u32 %v4721, 2147483648
  %v4734 = vor.u32 1.1754944e-38, %v4733
  %v4735 = vsel %vm4732, %v4734, %v4730
  %v4736 = vmul.f32 %v4711, %v4735
  %v4737 = vmin.f32 %v4736, 1.0
  %v4738 = vmax.f32 %v4737, -1.0
  %v4739 = vmul.f32 %v4493, %v4493
  %v4740 = vmin.f32 16.0, %v4739
  %v4741 = vmul.f32 %v4740, 2.1237322e-06
  %v4742 = vadd.f32 %v4741, 0.00028619796
  %v4743 = vmul.f32 %v4740, %v4742
  %v4744 = vadd.f32 %v4743, 0.0036580483
  %v4745 = vmul.f32 %v4740, %v4744
  %v4746 = vadd.f32 %v4745, 0.05243302
  %v4747 = vmul.f32 %v4740, %v4746
  %v4748 = vadd.f32 %v4747, 0.18741608
  %v4749 = vmul.f32 %v4740, %v4748
  %v4750 = vadd.f32 %v4749, 1.1283791
  %v4751 = vmul.f32 %v4493, %v4750
  %v4752 = vmul.f32 %v4740, 3.8918573e-05
  %v4753 = vadd.f32 %v4752, 0.001143296
  %v4754 = vmul.f32 %v4740, %v4753
  %v4755 = vadd.f32 %v4754, 0.014752088
  %v4756 = vmul.f32 %v4740, %v4755
  %v4757 = vadd.f32 %v4756, 0.112945676
  %v4758 = vmul.f32 %v4740, %v4757
  %v4759 = vadd.f32 %v4758, 0.4994258
  %v4760 = vmul.f32 %v4740, %v4759
  %v4761 = vadd.f32 %v4760, 1.0
  %v4762 = vrcp.pop %v4761
  %v4763 = vmul.f32 %v4761, %v4762
  %v4764 = vsub.f32 1.0, %v4763
  %v4765 = vmul.f32 %v4762, %v4764
  %v4766 = vadd.f32 %v4762, %v4765
  %vm4767 = vweird.f32 %v4761
  %vm4768 = vweird.f32 %v4762
  %vm4769 = vmor %vm4767, %vm4768
  %v4770 = vsel %vm4769, %v4762, %v4766
  %v4771 = vand.u32 2147483647, %v4761
  %vm4772 = vcmp.eq.f32.partialorder %v4771, 8.507059e+37
  %v4773 = vand.u32 %v4761, 2147483648
  %v4774 = vor.u32 1.1754944e-38, %v4773
  %v4775 = vsel %vm4772, %v4774, %v4770
  %v4776 = vmul.f32 %v4751, %v4775
  %v4777 = vmin.f32 %v4776, 1.0
  %v4778 = vmax.f32 %v4777, -1.0
  %v4779 = vmul.f32 %v4494, %v4494
  %v4780 = vmin.f32 16.0, %v4779
  %v4781 = vmul.f32 %v4780, 2.1237322e-06
  %v4782 = vadd.f32 %v4781, 0.00028619796
  %v4783 = vmul.f32 %v4780, %v4782
  %v4784 = vadd.f32 %v4783, 0.0036580483
  %v4785 = vmul.f32 %v4780, %v4784
  %v4786 = vadd.f32 %v4785, 0.05243302
  %v4787 = vmul.f32 %v4780, %v4786
  %v4788 = vadd.f32 %v4787, 0.18741608
  %v4789 = vmul.f32 %v4780, %v4788
  %v4790 = vadd.f32 %v4789, 1.1283791
  %v4791 = vmul.f32 %v4494, %v4790
  %v4792 = vmul.f32 %v4780, 3.8918573e-05
  %v4793 = vadd.f32 %v4792, 0.001143296
  %v4794 = vmul.f32 %v4780, %v4793
  %v4795 = vadd.f32 %v4794, 0.014752088
  %v4796 = vmul.f32 %v4780, %v4795
  %v4797 = vadd.f32 %v4796, 0.112945676
  %v4798 = vmul.f32 %v4780, %v4797
  %v4799 = vadd.f32 %v4798, 0.4994258
  %v4800 = vmul.f32 %v4780, %v4799
  %v4801 = vadd.f32 %v4800, 1.0
  %v4802 = vrcp.pop %v4801
  %v4803 = vmul.f32 %v4801, %v4802
  %v4804 = vsub.f32 1.0, %v4803
  %v4805 = vmul.f32 %v4802, %v4804
  %v4806 = vadd.f32 %v4802, %v4805
  %vm4807 = vweird.f32 %v4801
  %vm4808 = vweird.f32 %v4802
  %vm4809 = vmor %vm4807, %vm4808
  %v4810 = vsel %vm4809, %v4802, %v4806
  %v4811 = vand.u32 2147483647, %v4801
  %vm4812 = vcmp.eq.f32.partialorder %v4811, 8.507059e+37
  %v4813 = vand.u32 %v4801, 2147483648
  %v4814 = vor.u32 1.1754944e-38, %v4813
  %v4815 = vsel %vm4812, %v4814, %v4810
  %v4816 = vmul.f32 %v4791, %v4815
  %v4817 = vmin.f32 %v4816, 1.0
  %v4818 = vmax.f32 %v4817, -1.0
  %v4819 = vmul.f32 %v4495, %v4495
  %v4820 = vmin.f32 16.0, %v4819
  %v4821 = vmul.f32 %v4820, 2.1237322e-06
  %v4822 = vadd.f32 %v4821, 0.00028619796
  %v4823 = vmul.f32 %v4820, %v4822
  %v4824 = vadd.f32 %v4823, 0.0036580483
  %v4825 = vmul.f32 %v4820, %v4824
  %v4826 = vadd.f32 %v4825, 0.05243302
  %v4827 = vmul.f32 %v4820, %v4826
  %v4828 = vadd.f32 %v4827, 0.18741608
  %v4829 = vmul.f32 %v4820, %v4828
  %v4830 = vadd.f32 %v4829, 1.1283791
  %v4831 = vmul.f32 %v4495, %v4830
  %v4832 = vmul.f32 %v4820, 3.8918573e-05
  %v4833 = vadd.f32 %v4832, 0.001143296
  %v4834 = vmul.f32 %v4820, %v4833
  %v4835 = vadd.f32 %v4834, 0.014752088
  %v4836 = vmul.f32 %v4820, %v4835
  %v4837 = vadd.f32 %v4836, 0.112945676
  %v4838 = vmul.f32 %v4820, %v4837
  %v4839 = vadd.f32 %v4838, 0.4994258
  %v4840 = vmul.f32 %v4820, %v4839
  %v4841 = vadd.f32 %v4840, 1.0
  %v4842 = vrcp.pop %v4841
  %v4843 = vmul.f32 %v4841, %v4842
  %v4844 = vsub.f32 1.0, %v4843
  %v4845 = vmul.f32 %v4842, %v4844
  %v4846 = vadd.f32 %v4842, %v4845
  %vm4847 = vweird.f32 %v4841
  %vm4848 = vweird.f32 %v4842
  %vm4849 = vmor %vm4847, %vm4848
  %v4850 = vsel %vm4849, %v4842, %v4846
  %v4851 = vand.u32 2147483647, %v4841
  %vm4852 = vcmp.eq.f32.partialorder %v4851, 8.507059e+37
  %v4853 = vand.u32 %v4841, 2147483648
  %v4854 = vor.u32 1.1754944e-38, %v4853
  %v4855 = vsel %vm4852, %v4854, %v4850
  %v4856 = vmul.f32 %v4831, %v4855
  %v4857 = vmin.f32 %v4856, 1.0
  %v4858 = vmax.f32 %v4857, -1.0
  %v4859 = vmul.f32 %v4496, %v4496
  %v4860 = vmin.f32 16.0, %v4859
  %v4861 = vmul.f32 %v4860, 2.1237322e-06
  %v4862 = vadd.f32 %v4861, 0.00028619796
  %v4863 = vmul.f32 %v4860, %v4862
  %v4864 = vadd.f32 %v4863, 0.0036580483
  %v4865 = vmul.f32 %v4860, %v4864
  %v4866 = vadd.f32 %v4865, 0.05243302
  %v4867 = vmul.f32 %v4860, %v4866
  %v4868 = vadd.f32 %v4867, 0.18741608
  %v4869 = vmul.f32 %v4860, %v4868
  %v4870 = vadd.f32 %v4869, 1.1283791
  %v4871 = vmul.f32 %v4496, %v4870
  %v4872 = vmul.f32 %v4860, 3.8918573e-05
  %v4873 = vadd.f32 %v4872, 0.001143296
  %v4874 = vmul.f32 %v4860, %v4873
  %v4875 = vadd.f32 %v4874, 0.014752088
  %v4876 = vmul.f32 %v4860, %v4875
  %v4877 = vadd.f32 %v4876, 0.112945676
  %v4878 = vmul.f32 %v4860, %v4877
  %v4879 = vadd.f32 %v4878, 0.4994258
  %v4880 = vmul.f32 %v4860, %v4879
  %v4881 = vadd.f32 %v4880, 1.0
  %v4882 = vrcp.pop %v4881
  %v4883 = vmul.f32 %v4881, %v4882
  %v4884 = vsub.f32 1.0, %v4883
  %v4885 = vmul.f32 %v4882, %v4884
  %v4886 = vadd.f32 %v4882, %v4885
  %vm4887 = vweird.f32 %v4881
  %vm4888 = vweird.f32 %v4882
  %vm4889 = vmor %vm4887, %vm4888
  %v4890 = vsel %vm4889, %v4882, %v4886
  %v4891 = vand.u32 2147483647, %v4881
  %vm4892 = vcmp.eq.f32.partialorder %v4891, 8.507059e+37
  %v4893 = vand.u32 %v4881, 2147483648
  %v4894 = vor.u32 1.1754944e-38, %v4893
  %v4895 = vsel %vm4892, %v4894, %v4890
  %v4896 = vmul.f32 %v4871, %v4895
  %v4897 = vmin.f32 %v4896, 1.0
  %v4898 = vmax.f32 %v4897, -1.0
  %v4899 = vmul.f32 %v4497, %v4497
  %v4900 = vmin.f32 16.0, %v4899
  %v4901 = vmul.f32 %v4900, 2.1237322e-06
  %v4902 = vadd.f32 %v4901, 0.00028619796
  %v4903 = vmul.f32 %v4900, %v4902
  %v4904 = vadd.f32 %v4903, 0.0036580483
  %v4905 = vmul.f32 %v4900, %v4904
  %v4906 = vadd.f32 %v4905, 0.05243302
  %v4907 = vmul.f32 %v4900, %v4906
  %v4908 = vadd.f32 %v4907, 0.18741608
  %v4909 = vmul.f32 %v4900, %v4908
  %v4910 = vadd.f32 %v4909, 1.1283791
  %v4911 = vmul.f32 %v4497, %v4910
  %v4912 = vmul.f32 %v4900, 3.8918573e-05
  %v4913 = vadd.f32 %v4912, 0.001143296
  %v4914 = vmul.f32 %v4900, %v4913
  %v4915 = vadd.f32 %v4914, 0.014752088
  %v4916 = vmul.f32 %v4900, %v4915
  %v4917 = vadd.f32 %v4916, 0.112945676
  %v4918 = vmul.f32 %v4900, %v4917
  %v4919 = vadd.f32 %v4918, 0.4994258
  %v4920 = vmul.f32 %v4900, %v4919
  %v4921 = vadd.f32 %v4920, 1.0
  %v4922 = vrcp.pop %v4921
  %v4923 = vmul.f32 %v4921, %v4922
  %v4924 = vsub.f32 1.0, %v4923
  %v4925 = vmul.f32 %v4922, %v4924
  %v4926 = vadd.f32 %v4922, %v4925
  %vm4927 = vweird.f32 %v4921
  %vm4928 = vweird.f32 %v4922
  %vm4929 = vmor %vm4927, %vm4928
  %v4930 = vsel %vm4929, %v4922, %v4926
  %v4931 = vand.u32 2147483647, %v4921
  %vm4932 = vcmp.eq.f32.partialorder %v4931, 8.507059e+37
  %v4933 = vand.u32 %v4921, 2147483648
  %v4934 = vor.u32 1.1754944e-38, %v4933
  %v4935 = vsel %vm4932, %v4934, %v4930
  %v4936 = vmul.f32 %v4911, %v4935
  %v4937 = vmin.f32 %v4936, 1.0
  %v4938 = vmax.f32 %v4937, -1.0
  %v4939 = vmul.f32 %v4498, %v4498
  %v4940 = vmin.f32 16.0, %v4939
  %v4941 = vmul.f32 %v4940, 2.1237322e-06
  %v4942 = vadd.f32 %v4941, 0.00028619796
  %v4943 = vmul.f32 %v4940, %v4942
  %v4944 = vadd.f32 %v4943, 0.0036580483
  %v4945 = vmul.f32 %v4940, %v4944
  %v4946 = vadd.f32 %v4945, 0.05243302
  %v4947 = vmul.f32 %v4940, %v4946
  %v4948 = vadd.f32 %v4947, 0.18741608
  %v4949 = vmul.f32 %v4940, %v4948
  %v4950 = vadd.f32 %v4949, 1.1283791
  %v4951 = vmul.f32 %v4498, %v4950
  %v4952 = vmul.f32 %v4940, 3.8918573e-05
  %v4953 = vadd.f32 %v4952, 0.001143296
  %v4954 = vmul.f32 %v4940, %v4953
  %v4955 = vadd.f32 %v4954, 0.014752088
  %v4956 = vmul.f32 %v4940, %v4955
  %v4957 = vadd.f32 %v4956, 0.112945676
  %v4958 = vmul.f32 %v4940, %v4957
  %v4959 = vadd.f32 %v4958, 0.4994258
  %v4960 = vmul.f32 %v4940, %v4959
  %v4961 = vadd.f32 %v4960, 1.0
  %v4962 = vrcp.pop %v4961
  %v4963 = vmul.f32 %v4961, %v4962
  %v4964 = vsub.f32 1.0, %v4963
  %v4965 = vmul.f32 %v4962, %v4964
  %v4966 = vadd.f32 %v4962, %v4965
  %vm4967 = vweird.f32 %v4961
  %vm4968 = vweird.f32 %v4962
  %vm4969 = vmor %vm4967, %vm4968
  %v4970 = vsel %vm4969, %v4962, %v4966
  %v4971 = vand.u32 2147483647, %v4961
  %vm4972 = vcmp.eq.f32.partialorder %v4971, 8.507059e+37
  %v4973 = vand.u32 %v4961, 2147483648
  %v4974 = vor.u32 1.1754944e-38, %v4973
  %v4975 = vsel %vm4972, %v4974, %v4970
  %v4976 = vmul.f32 %v4951, %v4975
  %v4977 = vmin.f32 %v4976, 1.0
  %v4978 = vmax.f32 %v4977, -1.0
  %v4979 = vadd.f32 %v4538, 1.0
  %v4980 = vadd.f32 %v4578, 1.0
  %v4981 = vadd.f32 %v4618, 1.0
  %v4982 = vadd.f32 %v4658, 1.0
  %v4983 = vadd.f32 %v4698, 1.0
  %v4984 = vadd.f32 %v4738, 1.0
  %v4985 = vadd.f32 %v4778, 1.0
  %v4986 = vadd.f32 %v4818, 1.0
  %v4987 = vadd.f32 %v4858, 1.0
  %v4988 = vadd.f32 %v4898, 1.0
  %v4989 = vadd.f32 %v4938, 1.0
  %v4990 = vadd.f32 %v4978, 1.0
  %v4991 = vmul.f32 %v4475, %v4979
  %v4992 = vmul.f32 %v4476, %v4980
  %v4993 = vmul.f32 %v4477, %v4981
  %v4994 = vmul.f32 %v4478, %v4982
  %v4995 = vmul.f32 %v4479, %v4983
  %v4996 = vmul.f32 %v4480, %v4984
  %v4997 = vmul.f32 %v4481, %v4985
  %v4998 = vmul.f32 %v4482, %v4986
  %v4999 = vmul.f32 %v4483, %v4987
  %v5000 = vmul.f32 %v4484, %v4988
  %v5001 = vmul.f32 %v4485, %v4989
  %v5002 = vmul.f32 %v4486, %v4990
  %v5003 = vadd.f32 %v4991, %v4992
  %v5004 = vadd.f32 %v5003, %v4993
  %v5005 = vadd.f32 %v5004, %v4994
  %v5006 = vadd.f32 %v5005, %v4995
  %v5007 = vadd.f32 %v5006, %v4996
  %v5008 = vadd.f32 %v5007, %v4997
  %v5009 = vadd.f32 %v5008, %v4998
  %v5010 = vadd.f32 %v5009, %v4999
  %v5011 = vadd.f32 %v5010, %v5000
  %v5012 = vadd.f32 %v5011, %v5001
  %v5013 = vadd.f32 %v5012, %v5002
  %5014 = vadd.xlane.f32.xlu0 %v5013
  %v5015 = vpop.xlane.xlu0 %5014
  %v5016 = vrcp.pop 1536.0
  %v5017 = vmul.f32 1536.0, %v5016
  %v5018 = vsub.f32 1.0, %v5017
  %v5019 = vmul.f32 %v5016, %v5018
  %v5020 = vadd.f32 %v5016, %v5019
  %vm5021 = vweird.f32 %v5016
  %v5022 = vsel %vm5021, %v5016, %v5020
  %v5023 = vmul.f32 %v5015, %v5022
  %v5024 = vsub.f32 %v4991, %v5023
  %v5025 = vsub.f32 %v4992, %v5023
  %v5026 = vsub.f32 %v4993, %v5023
  %v5027 = vsub.f32 %v4994, %v5023
  %v5028 = vsub.f32 %v4995, %v5023
  %v5029 = vsub.f32 %v4996, %v5023
  %v5030 = vsub.f32 %v4997, %v5023
  %v5031 = vsub.f32 %v4998, %v5023
  %v5032 = vsub.f32 %v4999, %v5023
  %v5033 = vsub.f32 %v5000, %v5023
  %v5034 = vsub.f32 %v5001, %v5023
  %v5035 = vsub.f32 %v5002, %v5023
  %v5036 = vmul.f32 %v5024, %v5024
  %v5037 = vmul.f32 %v5025, %v5025
  %v5038 = vmul.f32 %v5026, %v5026
  %v5039 = vmul.f32 %v5027, %v5027
  %v5040 = vmul.f32 %v5028, %v5028
  %v5041 = vmul.f32 %v5029, %v5029
  %v5042 = vmul.f32 %v5030, %v5030
  %v5043 = vmul.f32 %v5031, %v5031
  %v5044 = vmul.f32 %v5032, %v5032
  %v5045 = vmul.f32 %v5033, %v5033
  %v5046 = vmul.f32 %v5034, %v5034
  %v5047 = vmul.f32 %v5035, %v5035
  %v5048 = vadd.f32 %v5036, %v5037
  %v5049 = vadd.f32 %v5048, %v5038
  %v5050 = vadd.f32 %v5049, %v5039
  %v5051 = vadd.f32 %v5050, %v5040
  %v5052 = vadd.f32 %v5051, %v5041
  %v5053 = vadd.f32 %v5052, %v5042
  %v5054 = vadd.f32 %v5053, %v5043
  %v5055 = vadd.f32 %v5054, %v5044
  %v5056 = vadd.f32 %v5055, %v5045
  %v5057 = vadd.f32 %v5056, %v5046
  %v5058 = vadd.f32 %v5057, %v5047
  %5059 = vadd.xlane.f32.xlu0 %v5058
  %v5060 = vpop.xlane.xlu0 %5059
  %v5061 = vmul.f32 %v5060, %v5022
  %v5062 = vadd.f32 %v5061, 1e-12
  %v5063 = vrsqrt.pop %v5062
  %v5064 = vmul.f32 %v5063, %v5062
  %v5065 = vmul.f32 %v5064, %v5063
  %v5066 = vmul.f32 0.5, %v5065
  %v5067 = vsub.f32 1.5, %v5066
  %v5068 = vmul.f32 %v5063, %v5067
  %vm5069 = vweird.f32 %v5062
  %vm5070 = vweird.f32 %v5063
  %vm5071 = vmor %vm5069, %vm5070
  %v5072 = vsel %vm5071, %v5063, %v5068
  %v5073 = vmul.f32 %v5024, %v5072
  %v5074 = vmul.f32 %v5025, %v5072
  %v5075 = vmul.f32 %v5026, %v5072
  %v5076 = vmul.f32 %v5027, %v5072
  %v5077 = vmul.f32 %v5028, %v5072
  %v5078 = vmul.f32 %v5029, %v5072
  %v5079 = vmul.f32 %v5030, %v5072
  %v5080 = vmul.f32 %v5031, %v5072
  %v5081 = vmul.f32 %v5032, %v5072
  %v5082 = vmul.f32 %v5033, %v5072
  %v5083 = vmul.f32 %v5034, %v5072
  %v5084 = vmul.f32 %v5035, %v5072
  %v5085 = vpack.c.bf16 %v5073, %v5073
  %v5086 = vpack.c.bf16 %v5074, %v5074
  %v5087 = vpack.c.bf16 %v5075, %v5075
  %v5088 = vpack.c.bf16 %v5076, %v5076
  %v5089 = vpack.c.bf16 %v5077, %v5077
  %v5090 = vpack.c.bf16 %v5078, %v5078
  %v5091 = vpack.c.bf16 %v5079, %v5079
  %v5092 = vpack.c.bf16 %v5080, %v5080
  %v5093 = vpack.c.bf16 %v5081, %v5081
  %v5094 = vpack.c.bf16 %v5082, %v5082
  %v5095 = vpack.c.bf16 %v5083, %v5083
  %v5096 = vpack.c.bf16 %v5084, %v5084
  %v5097 = vld [vmem:[%s4] sm:$0xf]
  %v5098 = vld [vmem:[%s4 + $0x4] sm:$0xf]
  %v5099 = vld [vmem:[%s4 + $0x8] sm:$0xf]
  %v5100 = vld [vmem:[%s4 + $0xc] sm:$0xf]
  %v5101 = vld [vmem:[%s4 + $0x10] sm:$0xf]
  %v5102 = vld [vmem:[%s4 + $0x14] sm:$0xf]
  %v5103 = vld [vmem:[%s4 + $0x18] sm:$0xf]
  %v5104 = vld [vmem:[%s4 + $0x1c] sm:$0xf]
  %v5105 = vld [vmem:[%s4 + $0x20] sm:$0xf]
  %v5106 = vld [vmem:[%s4 + $0x24] sm:$0xf]
  %v5107 = vld [vmem:[%s4 + $0x28] sm:$0xf]
  %v5108 = vld [vmem:[%s4 + $0x2c] sm:$0xf]
  %v5109 = vld [vmem:[%s4 + $0x30] sm:$0xf]
  %v5110 = vld [vmem:[%s4 + $0x34] sm:$0xf]
  %v5111 = vld [vmem:[%s4 + $0x38] sm:$0xf]
  %v5112 = vld [vmem:[%s4 + $0x3c] sm:$0xf]
  %v5113 = vld [vmem:[%s4 + $0x40] sm:$0xf]
  %v5114 = vld [vmem:[%s4 + $0x44] sm:$0xf]
  %v5115 = vld [vmem:[%s4 + $0x48] sm:$0xf]
  %v5116 = vld [vmem:[%s4 + $0x4c] sm:$0xf]
  %v5117 = vld [vmem:[%s4 + $0x50] sm:$0xf]
  %v5118 = vld [vmem:[%s4 + $0x54] sm:$0xf]
  %v5119 = vld [vmem:[%s4 + $0x58] sm:$0xf]
  %v5120 = vld [vmem:[%s4 + $0x5c] sm:$0xf]
  %v5121 = vld [vmem:[%s4 + $0x60] sm:$0xf]
  %v5122 = vld [vmem:[%s4 + $0x64] sm:$0xf]
  %v5123 = vld [vmem:[%s4 + $0x68] sm:$0xf]
  %v5124 = vld [vmem:[%s4 + $0x6c] sm:$0xf]
  %v5125 = vld [vmem:[%s4 + $0x70] sm:$0xf]
  %v5126 = vld [vmem:[%s4 + $0x74] sm:$0xf]
  %v5127 = vld [vmem:[%s4 + $0x78] sm:$0xf]
  %v5128 = vld [vmem:[%s4 + $0x7c] sm:$0xf]
  %v5129 = vld [vmem:[%s4 + $0x80] sm:$0xf]
  %v5130 = vld [vmem:[%s4 + $0x84] sm:$0xf]
  %v5131 = vld [vmem:[%s4 + $0x88] sm:$0xf]
  %v5132 = vld [vmem:[%s4 + $0x8c] sm:$0xf]
  %v5133 = vld [vmem:[%s4 + $0x90] sm:$0xf]
  %v5134 = vld [vmem:[%s4 + $0x94] sm:$0xf]
  %v5135 = vld [vmem:[%s4 + $0x98] sm:$0xf]
  %v5136 = vld [vmem:[%s4 + $0x9c] sm:$0xf]
  %v5137 = vld [vmem:[%s4 + $0xa0] sm:$0xf]
  %v5138 = vld [vmem:[%s4 + $0xa4] sm:$0xf]
  %v5139 = vld [vmem:[%s4 + $0xa8] sm:$0xf]
  %v5140 = vld [vmem:[%s4 + $0xac] sm:$0xf]
  %v5141 = vld [vmem:[%s4 + $0xb0] sm:$0xf]
  %v5142 = vld [vmem:[%s4 + $0xb4] sm:$0xf]
  %v5143 = vld [vmem:[%s4 + $0xb8] sm:$0xf]
  %v5144 = vld [vmem:[%s4 + $0xbc] sm:$0xf]
  %v5145 = vld [vmem:[%s4 + $0xc0] sm:$0xf]
  %v5146 = vld [vmem:[%s4 + $0xc4] sm:$0xf]
  %v5147 = vld [vmem:[%s4 + $0xc8] sm:$0xf]
  %v5148 = vld [vmem:[%s4 + $0xcc] sm:$0xf]
  %v5149 = vld [vmem:[%s4 + $0xd0] sm:$0xf]
  %v5150 = vld [vmem:[%s4 + $0xd4] sm:$0xf]
  %v5151 = vld [vmem:[%s4 + $0xd8] sm:$0xf]
  %v5152 = vld [vmem:[%s4 + $0xdc] sm:$0xf]
  %v5153 = vld [vmem:[%s4 + $0xe0] sm:$0xf]
  %v5154 = vld [vmem:[%s4 + $0xe4] sm:$0xf]
  %v5155 = vld [vmem:[%s4 + $0xe8] sm:$0xf]
  %v5156 = vld [vmem:[%s4 + $0xec] sm:$0xf]
  %v5157 = vld [vmem:[%s4 + $0xf0] sm:$0xf]
  %v5158 = vld [vmem:[%s4 + $0xf4] sm:$0xf]
  %v5159 = vld [vmem:[%s4 + $0xf8] sm:$0xf]
  %v5160 = vld [vmem:[%s4 + $0xfc] sm:$0xf]
  %v5161 = vld [vmem:[%s4 + $0x100] sm:$0xf]
  %v5162 = vld [vmem:[%s4 + $0x104] sm:$0xf]
  %v5163 = vld [vmem:[%s4 + $0x108] sm:$0xf]
  %v5164 = vld [vmem:[%s4 + $0x10c] sm:$0xf]
  %v5165 = vld [vmem:[%s4 + $0x110] sm:$0xf]
  %v5166 = vld [vmem:[%s4 + $0x114] sm:$0xf]
  %v5167 = vld [vmem:[%s4 + $0x118] sm:$0xf]
  %v5168 = vld [vmem:[%s4 + $0x11c] sm:$0xf]
  %v5169 = vld [vmem:[%s4 + $0x120] sm:$0xf]
  %v5170 = vld [vmem:[%s4 + $0x124] sm:$0xf]
  %v5171 = vld [vmem:[%s4 + $0x128] sm:$0xf]
  %v5172 = vld [vmem:[%s4 + $0x12c] sm:$0xf]
  %v5173 = vld [vmem:[%s4 + $0x130] sm:$0xf]
  %v5174 = vld [vmem:[%s4 + $0x134] sm:$0xf]
  %v5175 = vld [vmem:[%s4 + $0x138] sm:$0xf]
  %v5176 = vld [vmem:[%s4 + $0x13c] sm:$0xf]
  %v5177 = vld [vmem:[%s4 + $0x140] sm:$0xf]
  %v5178 = vld [vmem:[%s4 + $0x144] sm:$0xf]
  %v5179 = vld [vmem:[%s4 + $0x148] sm:$0xf]
  %v5180 = vld [vmem:[%s4 + $0x14c] sm:$0xf]
  %v5181 = vld [vmem:[%s4 + $0x150] sm:$0xf]
  %v5182 = vld [vmem:[%s4 + $0x154] sm:$0xf]
  %v5183 = vld [vmem:[%s4 + $0x158] sm:$0xf]
  %v5184 = vld [vmem:[%s4 + $0x15c] sm:$0xf]
  %v5185 = vld [vmem:[%s4 + $0x160] sm:$0xf]
  %v5186 = vld [vmem:[%s4 + $0x164] sm:$0xf]
  %v5187 = vld [vmem:[%s4 + $0x168] sm:$0xf]
  %v5188 = vld [vmem:[%s4 + $0x16c] sm:$0xf]
  %v5189 = vld [vmem:[%s4 + $0x170] sm:$0xf]
  %v5190 = vld [vmem:[%s4 + $0x174] sm:$0xf]
  %v5191 = vld [vmem:[%s4 + $0x178] sm:$0xf]
  %v5192 = vld [vmem:[%s4 + $0x17c] sm:$0xf]
  %v5193 = vld [vmem:[%s4 + $0x180] sm:$0xf]
  %v5194 = vld [vmem:[%s4 + $0x184] sm:$0xf]
  %v5195 = vld [vmem:[%s4 + $0x188] sm:$0xf]
  %v5196 = vld [vmem:[%s4 + $0x18c] sm:$0xf]
  %v5197 = vld [vmem:[%s4 + $0x190] sm:$0xf]
  %v5198 = vld [vmem:[%s4 + $0x194] sm:$0xf]
  %v5199 = vld [vmem:[%s4 + $0x198] sm:$0xf]
  %v5200 = vld [vmem:[%s4 + $0x19c] sm:$0xf]
  %v5201 = vld [vmem:[%s4 + $0x1a0] sm:$0xf]
  %v5202 = vld [vmem:[%s4 + $0x1a4] sm:$0xf]
  %v5203 = vld [vmem:[%s4 + $0x1a8] sm:$0xf]
  %v5204 = vld [vmem:[%s4 + $0x1ac] sm:$0xf]
  %v5205 = vld [vmem:[%s4 + $0x1b0] sm:$0xf]
  %v5206 = vld [vmem:[%s4 + $0x1b4] sm:$0xf]
  %v5207 = vld [vmem:[%s4 + $0x1b8] sm:$0xf]
  %v5208 = vld [vmem:[%s4 + $0x1bc] sm:$0xf]
  %v5209 = vld [vmem:[%s4 + $0x1c0] sm:$0xf]
  %v5210 = vld [vmem:[%s4 + $0x1c4] sm:$0xf]
  %v5211 = vld [vmem:[%s4 + $0x1c8] sm:$0xf]
  %v5212 = vld [vmem:[%s4 + $0x1cc] sm:$0xf]
  %v5213 = vld [vmem:[%s4 + $0x1d0] sm:$0xf]
  %v5214 = vld [vmem:[%s4 + $0x1d4] sm:$0xf]
  %v5215 = vld [vmem:[%s4 + $0x1d8] sm:$0xf]
  %v5216 = vld [vmem:[%s4 + $0x1dc] sm:$0xf]
  %v5217 = vld [vmem:[%s4 + $0x1e0] sm:$0xf]
  %v5218 = vld [vmem:[%s4 + $0x1e4] sm:$0xf]
  %v5219 = vld [vmem:[%s4 + $0x1e8] sm:$0xf]
  %v5220 = vld [vmem:[%s4 + $0x1ec] sm:$0xf]
  %v5221 = vld [vmem:[%s4 + $0x1f0] sm:$0xf]
  %v5222 = vld [vmem:[%s4 + $0x1f4] sm:$0xf]
  %v5223 = vld [vmem:[%s4 + $0x1f8] sm:$0xf]
  %v5224 = vld [vmem:[%s4 + $0x1fc] sm:$0xf]
  %v5225 = vld [vmem:[%s4 + $0x200] sm:$0xf]
  %v5226 = vld [vmem:[%s4 + $0x204] sm:$0xf]
  %v5227 = vld [vmem:[%s4 + $0x208] sm:$0xf]
  %v5228 = vld [vmem:[%s4 + $0x20c] sm:$0xf]
  %v5229 = vld [vmem:[%s4 + $0x210] sm:$0xf]
  %v5230 = vld [vmem:[%s4 + $0x214] sm:$0xf]
  %v5231 = vld [vmem:[%s4 + $0x218] sm:$0xf]
  %v5232 = vld [vmem:[%s4 + $0x21c] sm:$0xf]
  %v5233 = vld [vmem:[%s4 + $0x220] sm:$0xf]
  %v5234 = vld [vmem:[%s4 + $0x224] sm:$0xf]
  %v5235 = vld [vmem:[%s4 + $0x228] sm:$0xf]
  %v5236 = vld [vmem:[%s4 + $0x22c] sm:$0xf]
  %v5237 = vld [vmem:[%s4 + $0x230] sm:$0xf]
  %v5238 = vld [vmem:[%s4 + $0x234] sm:$0xf]
  %v5239 = vld [vmem:[%s4 + $0x238] sm:$0xf]
  %v5240 = vld [vmem:[%s4 + $0x23c] sm:$0xf]
  %v5241 = vld [vmem:[%s4 + $0x240] sm:$0xf]
  %v5242 = vld [vmem:[%s4 + $0x244] sm:$0xf]
  %v5243 = vld [vmem:[%s4 + $0x248] sm:$0xf]
  %v5244 = vld [vmem:[%s4 + $0x24c] sm:$0xf]
  %v5245 = vld [vmem:[%s4 + $0x250] sm:$0xf]
  %v5246 = vld [vmem:[%s4 + $0x254] sm:$0xf]
  %v5247 = vld [vmem:[%s4 + $0x258] sm:$0xf]
  %v5248 = vld [vmem:[%s4 + $0x25c] sm:$0xf]
  %v5249 = vld [vmem:[%s4 + $0x260] sm:$0xf]
  %v5250 = vld [vmem:[%s4 + $0x264] sm:$0xf]
  %v5251 = vld [vmem:[%s4 + $0x268] sm:$0xf]
  %v5252 = vld [vmem:[%s4 + $0x26c] sm:$0xf]
  %v5253 = vld [vmem:[%s4 + $0x270] sm:$0xf]
  %v5254 = vld [vmem:[%s4 + $0x274] sm:$0xf]
  %v5255 = vld [vmem:[%s4 + $0x278] sm:$0xf]
  %v5256 = vld [vmem:[%s4 + $0x27c] sm:$0xf]
  %v5257 = vld [vmem:[%s4 + $0x280] sm:$0xf]
  %v5258 = vld [vmem:[%s4 + $0x284] sm:$0xf]
  %v5259 = vld [vmem:[%s4 + $0x288] sm:$0xf]
  %v5260 = vld [vmem:[%s4 + $0x28c] sm:$0xf]
  %v5261 = vld [vmem:[%s4 + $0x290] sm:$0xf]
  %v5262 = vld [vmem:[%s4 + $0x294] sm:$0xf]
  %v5263 = vld [vmem:[%s4 + $0x298] sm:$0xf]
  %v5264 = vld [vmem:[%s4 + $0x29c] sm:$0xf]
  %v5265 = vld [vmem:[%s4 + $0x2a0] sm:$0xf]
  %v5266 = vld [vmem:[%s4 + $0x2a4] sm:$0xf]
  %v5267 = vld [vmem:[%s4 + $0x2a8] sm:$0xf]
  %v5268 = vld [vmem:[%s4 + $0x2ac] sm:$0xf]
  %v5269 = vld [vmem:[%s4 + $0x2b0] sm:$0xf]
  %v5270 = vld [vmem:[%s4 + $0x2b4] sm:$0xf]
  %v5271 = vld [vmem:[%s4 + $0x2b8] sm:$0xf]
  %v5272 = vld [vmem:[%s4 + $0x2bc] sm:$0xf]
  %v5273 = vld [vmem:[%s4 + $0x2c0] sm:$0xf]
  %v5274 = vld [vmem:[%s4 + $0x2c4] sm:$0xf]
  %v5275 = vld [vmem:[%s4 + $0x2c8] sm:$0xf]
  %v5276 = vld [vmem:[%s4 + $0x2cc] sm:$0xf]
  %v5277 = vld [vmem:[%s4 + $0x2d0] sm:$0xf]
  %v5278 = vld [vmem:[%s4 + $0x2d4] sm:$0xf]
  %v5279 = vld [vmem:[%s4 + $0x2d8] sm:$0xf]
  %v5280 = vld [vmem:[%s4 + $0x2dc] sm:$0xf]
  %v5281 = vld [vmem:[%s4 + $0x2e0] sm:$0xf]
  %v5282 = vld [vmem:[%s4 + $0x2e4] sm:$0xf]
  %v5283 = vld [vmem:[%s4 + $0x2e8] sm:$0xf]
  %v5284 = vld [vmem:[%s4 + $0x2ec] sm:$0xf]
  %v5285 = vld [vmem:[%s4 + $0x2f0] sm:$0xf]
  %v5286 = vld [vmem:[%s4 + $0x2f4] sm:$0xf]
  %v5287 = vld [vmem:[%s4 + $0x2f8] sm:$0xf]
  %v5288 = vld [vmem:[%s4 + $0x2fc] sm:$0xf]
  %v5289 = vld [vmem:[%s5] sm:$0x1]
  %v5291 = vperm.slane %v5289, 0
  %v5485 = vunpack.c.l.b16 %v5097
  %v5486 = vunpack.c.l.b16 %v5098
  %v5487 = vunpack.c.l.b16 %v5099
  %v5488 = vunpack.c.l.b16 %v5100
  %v5489 = vunpack.c.l.b16 %v5101
  %v5490 = vunpack.c.l.b16 %v5102
  %v5491 = vunpack.c.l.b16 %v5103
  %v5492 = vunpack.c.l.b16 %v5104
  %v5493 = vunpack.c.l.b16 %v5105
  %v5494 = vunpack.c.l.b16 %v5106
  %v5495 = vunpack.c.l.b16 %v5107
  %v5496 = vunpack.c.l.b16 %v5108
  %v5497 = vunpack.c.l.b16 %v5109
  %v5498 = vunpack.c.l.b16 %v5110
  %v5499 = vunpack.c.l.b16 %v5111
  %v5500 = vunpack.c.l.b16 %v5112
  %v5501 = vunpack.c.l.b16 %v5113
  %v5502 = vunpack.c.l.b16 %v5114
  %v5503 = vunpack.c.l.b16 %v5115
  %v5504 = vunpack.c.l.b16 %v5116
  %v5505 = vunpack.c.l.b16 %v5117
  %v5506 = vunpack.c.l.b16 %v5118
  %v5507 = vunpack.c.l.b16 %v5119
  %v5508 = vunpack.c.l.b16 %v5120
  %v5509 = vunpack.c.l.b16 %v5121
  %v5510 = vunpack.c.l.b16 %v5122
  %v5511 = vunpack.c.l.b16 %v5123
  %v5512 = vunpack.c.l.b16 %v5124
  %v5513 = vunpack.c.l.b16 %v5125
  %v5514 = vunpack.c.l.b16 %v5126
  %v5515 = vunpack.c.l.b16 %v5127
  %v5516 = vunpack.c.l.b16 %v5128
  %v5517 = vunpack.c.l.b16 %v5129
  %v5518 = vunpack.c.l.b16 %v5130
  %v5519 = vunpack.c.l.b16 %v5131
  %v5520 = vunpack.c.l.b16 %v5132
  %v5521 = vunpack.c.l.b16 %v5133
  %v5522 = vunpack.c.l.b16 %v5134
  %v5523 = vunpack.c.l.b16 %v5135
  %v5524 = vunpack.c.l.b16 %v5136
  %v5525 = vunpack.c.l.b16 %v5137
  %v5526 = vunpack.c.l.b16 %v5138
  %v5527 = vunpack.c.l.b16 %v5139
  %v5528 = vunpack.c.l.b16 %v5140
  %v5529 = vunpack.c.l.b16 %v5141
  %v5530 = vunpack.c.l.b16 %v5142
  %v5531 = vunpack.c.l.b16 %v5143
  %v5532 = vunpack.c.l.b16 %v5144
  %v5533 = vunpack.c.l.b16 %v5145
  %v5534 = vunpack.c.l.b16 %v5146
  %v5535 = vunpack.c.l.b16 %v5147
  %v5536 = vunpack.c.l.b16 %v5148
  %v5537 = vunpack.c.l.b16 %v5149
  %v5538 = vunpack.c.l.b16 %v5150
  %v5539 = vunpack.c.l.b16 %v5151
  %v5540 = vunpack.c.l.b16 %v5152
  %v5541 = vunpack.c.l.b16 %v5153
  %v5542 = vunpack.c.l.b16 %v5154
  %v5543 = vunpack.c.l.b16 %v5155
  %v5544 = vunpack.c.l.b16 %v5156
  %v5545 = vunpack.c.l.b16 %v5157
  %v5546 = vunpack.c.l.b16 %v5158
  %v5547 = vunpack.c.l.b16 %v5159
  %v5548 = vunpack.c.l.b16 %v5160
  %v5549 = vunpack.c.l.b16 %v5161
  %v5550 = vunpack.c.l.b16 %v5162
  %v5551 = vunpack.c.l.b16 %v5163
  %v5552 = vunpack.c.l.b16 %v5164
  %v5553 = vunpack.c.l.b16 %v5165
  %v5554 = vunpack.c.l.b16 %v5166
  %v5555 = vunpack.c.l.b16 %v5167
  %v5556 = vunpack.c.l.b16 %v5168
  %v5557 = vunpack.c.l.b16 %v5169
  %v5558 = vunpack.c.l.b16 %v5170
  %v5559 = vunpack.c.l.b16 %v5171
  %v5560 = vunpack.c.l.b16 %v5172
  %v5561 = vunpack.c.l.b16 %v5173
  %v5562 = vunpack.c.l.b16 %v5174
  %v5563 = vunpack.c.l.b16 %v5175
  %v5564 = vunpack.c.l.b16 %v5176
  %v5565 = vunpack.c.l.b16 %v5177
  %v5566 = vunpack.c.l.b16 %v5178
  %v5567 = vunpack.c.l.b16 %v5179
  %v5568 = vunpack.c.l.b16 %v5180
  %v5569 = vunpack.c.l.b16 %v5181
  %v5570 = vunpack.c.l.b16 %v5182
  %v5571 = vunpack.c.l.b16 %v5183
  %v5572 = vunpack.c.l.b16 %v5184
  %v5573 = vunpack.c.l.b16 %v5185
  %v5574 = vunpack.c.l.b16 %v5186
  %v5575 = vunpack.c.l.b16 %v5187
  %v5576 = vunpack.c.l.b16 %v5188
  %v5577 = vunpack.c.l.b16 %v5189
  %v5578 = vunpack.c.l.b16 %v5190
  %v5579 = vunpack.c.l.b16 %v5191
  %v5580 = vunpack.c.l.b16 %v5192
  %v5581 = vunpack.c.l.b16 %v5193
  %v5582 = vunpack.c.l.b16 %v5194
  %v5583 = vunpack.c.l.b16 %v5195
  %v5584 = vunpack.c.l.b16 %v5196
  %v5585 = vunpack.c.l.b16 %v5197
  %v5586 = vunpack.c.l.b16 %v5198
  %v5587 = vunpack.c.l.b16 %v5199
  %v5588 = vunpack.c.l.b16 %v5200
  %v5589 = vunpack.c.l.b16 %v5201
  %v5590 = vunpack.c.l.b16 %v5202
  %v5591 = vunpack.c.l.b16 %v5203
  %v5592 = vunpack.c.l.b16 %v5204
  %v5593 = vunpack.c.l.b16 %v5205
  %v5594 = vunpack.c.l.b16 %v5206
  %v5595 = vunpack.c.l.b16 %v5207
  %v5596 = vunpack.c.l.b16 %v5208
  %v5597 = vunpack.c.l.b16 %v5209
  %v5598 = vunpack.c.l.b16 %v5210
  %v5599 = vunpack.c.l.b16 %v5211
  %v5600 = vunpack.c.l.b16 %v5212
  %v5601 = vunpack.c.l.b16 %v5213
  %v5602 = vunpack.c.l.b16 %v5214
  %v5603 = vunpack.c.l.b16 %v5215
  %v5604 = vunpack.c.l.b16 %v5216
  %v5605 = vunpack.c.l.b16 %v5217
  %v5606 = vunpack.c.l.b16 %v5218
  %v5607 = vunpack.c.l.b16 %v5219
  %v5608 = vunpack.c.l.b16 %v5220
  %v5609 = vunpack.c.l.b16 %v5221
  %v5610 = vunpack.c.l.b16 %v5222
  %v5611 = vunpack.c.l.b16 %v5223
  %v5612 = vunpack.c.l.b16 %v5224
  %v5613 = vunpack.c.l.b16 %v5225
  %v5614 = vunpack.c.l.b16 %v5226
  %v5615 = vunpack.c.l.b16 %v5227
  %v5616 = vunpack.c.l.b16 %v5228
  %v5617 = vunpack.c.l.b16 %v5229
  %v5618 = vunpack.c.l.b16 %v5230
  %v5619 = vunpack.c.l.b16 %v5231
  %v5620 = vunpack.c.l.b16 %v5232
  %v5621 = vunpack.c.l.b16 %v5233
  %v5622 = vunpack.c.l.b16 %v5234
  %v5623 = vunpack.c.l.b16 %v5235
  %v5624 = vunpack.c.l.b16 %v5236
  %v5625 = vunpack.c.l.b16 %v5237
  %v5626 = vunpack.c.l.b16 %v5238
  %v5627 = vunpack.c.l.b16 %v5239
  %v5628 = vunpack.c.l.b16 %v5240
  %v5629 = vunpack.c.l.b16 %v5241
  %v5630 = vunpack.c.l.b16 %v5242
  %v5631 = vunpack.c.l.b16 %v5243
  %v5632 = vunpack.c.l.b16 %v5244
  %v5633 = vunpack.c.l.b16 %v5245
  %v5634 = vunpack.c.l.b16 %v5246
  %v5635 = vunpack.c.l.b16 %v5247
  %v5636 = vunpack.c.l.b16 %v5248
  %v5637 = vunpack.c.l.b16 %v5249
  %v5638 = vunpack.c.l.b16 %v5250
  %v5639 = vunpack.c.l.b16 %v5251
  %v5640 = vunpack.c.l.b16 %v5252
  %v5641 = vunpack.c.l.b16 %v5253
  %v5642 = vunpack.c.l.b16 %v5254
  %v5643 = vunpack.c.l.b16 %v5255
  %v5644 = vunpack.c.l.b16 %v5256
  %v5645 = vunpack.c.l.b16 %v5257
  %v5646 = vunpack.c.l.b16 %v5258
  %v5647 = vunpack.c.l.b16 %v5259
  %v5648 = vunpack.c.l.b16 %v5260
  %v5649 = vunpack.c.l.b16 %v5261
  %v5650 = vunpack.c.l.b16 %v5262
  %v5651 = vunpack.c.l.b16 %v5263
  %v5652 = vunpack.c.l.b16 %v5264
  %v5653 = vunpack.c.l.b16 %v5265
  %v5654 = vunpack.c.l.b16 %v5266
  %v5655 = vunpack.c.l.b16 %v5267
  %v5656 = vunpack.c.l.b16 %v5268
  %v5657 = vunpack.c.l.b16 %v5269
  %v5658 = vunpack.c.l.b16 %v5270
  %v5659 = vunpack.c.l.b16 %v5271
  %v5660 = vunpack.c.l.b16 %v5272
  %v5661 = vunpack.c.l.b16 %v5273
  %v5662 = vunpack.c.l.b16 %v5274
  %v5663 = vunpack.c.l.b16 %v5275
  %v5664 = vunpack.c.l.b16 %v5276
  %v5665 = vunpack.c.l.b16 %v5277
  %v5666 = vunpack.c.l.b16 %v5278
  %v5667 = vunpack.c.l.b16 %v5279
  %v5668 = vunpack.c.l.b16 %v5280
  %v5669 = vunpack.c.l.b16 %v5281
  %v5670 = vunpack.c.l.b16 %v5282
  %v5671 = vunpack.c.l.b16 %v5283
  %v5672 = vunpack.c.l.b16 %v5284
  %v5673 = vunpack.c.l.b16 %v5285
  %v5674 = vunpack.c.l.b16 %v5286
  %v5675 = vunpack.c.l.b16 %v5287
  %v5676 = vunpack.c.l.b16 %v5288
  %v5677 = vpack.c.b16 %v5486, %v5485
  %v5678 = vpack.c.b16 %v5488, %v5487
  %v5679 = vpack.c.b16 %v5490, %v5489
  %v5680 = vpack.c.b16 %v5492, %v5491
  %v5681 = vpack.c.b16 %v5494, %v5493
  %v5682 = vpack.c.b16 %v5496, %v5495
  %v5683 = vpack.c.b16 %v5498, %v5497
  %v5684 = vpack.c.b16 %v5500, %v5499
  %v5685 = vpack.c.b16 %v5502, %v5501
  %v5686 = vpack.c.b16 %v5504, %v5503
  %v5687 = vpack.c.b16 %v5506, %v5505
  %v5688 = vpack.c.b16 %v5508, %v5507
  %v5689 = vpack.c.b16 %v5510, %v5509
  %v5690 = vpack.c.b16 %v5512, %v5511
  %v5691 = vpack.c.b16 %v5514, %v5513
  %v5692 = vpack.c.b16 %v5516, %v5515
  %v5693 = vpack.c.b16 %v5518, %v5517
  %v5694 = vpack.c.b16 %v5520, %v5519
  %v5695 = vpack.c.b16 %v5522, %v5521
  %v5696 = vpack.c.b16 %v5524, %v5523
  %v5697 = vpack.c.b16 %v5526, %v5525
  %v5698 = vpack.c.b16 %v5528, %v5527
  %v5699 = vpack.c.b16 %v5530, %v5529
  %v5700 = vpack.c.b16 %v5532, %v5531
  %v5701 = vpack.c.b16 %v5534, %v5533
  %v5702 = vpack.c.b16 %v5536, %v5535
  %v5703 = vpack.c.b16 %v5538, %v5537
  %v5704 = vpack.c.b16 %v5540, %v5539
  %v5705 = vpack.c.b16 %v5542, %v5541
  %v5706 = vpack.c.b16 %v5544, %v5543
  %v5707 = vpack.c.b16 %v5546, %v5545
  %v5708 = vpack.c.b16 %v5548, %v5547
  %v5709 = vpack.c.b16 %v5550, %v5549
  %v5710 = vpack.c.b16 %v5552, %v5551
  %v5711 = vpack.c.b16 %v5554, %v5553
  %v5712 = vpack.c.b16 %v5556, %v5555
  %v5713 = vpack.c.b16 %v5558, %v5557
  %v5714 = vpack.c.b16 %v5560, %v5559
  %v5715 = vpack.c.b16 %v5562, %v5561
  %v5716 = vpack.c.b16 %v5564, %v5563
  %v5717 = vpack.c.b16 %v5566, %v5565
  %v5718 = vpack.c.b16 %v5568, %v5567
  %v5719 = vpack.c.b16 %v5570, %v5569
  %v5720 = vpack.c.b16 %v5572, %v5571
  %v5721 = vpack.c.b16 %v5574, %v5573
  %v5722 = vpack.c.b16 %v5576, %v5575
  %v5723 = vpack.c.b16 %v5578, %v5577
  %v5724 = vpack.c.b16 %v5580, %v5579
  %v5725 = vpack.c.b16 %v5582, %v5581
  %v5726 = vpack.c.b16 %v5584, %v5583
  %v5727 = vpack.c.b16 %v5586, %v5585
  %v5728 = vpack.c.b16 %v5588, %v5587
  %v5729 = vpack.c.b16 %v5590, %v5589
  %v5730 = vpack.c.b16 %v5592, %v5591
  %v5731 = vpack.c.b16 %v5594, %v5593
  %v5732 = vpack.c.b16 %v5596, %v5595
  %v5733 = vpack.c.b16 %v5598, %v5597
  %v5734 = vpack.c.b16 %v5600, %v5599
  %v5735 = vpack.c.b16 %v5602, %v5601
  %v5736 = vpack.c.b16 %v5604, %v5603
  %v5737 = vpack.c.b16 %v5606, %v5605
  %v5738 = vpack.c.b16 %v5608, %v5607
  %v5739 = vpack.c.b16 %v5610, %v5609
  %v5740 = vpack.c.b16 %v5612, %v5611
  %v5741 = vpack.c.b16 %v5614, %v5613
  %v5742 = vpack.c.b16 %v5616, %v5615
  %v5743 = vpack.c.b16 %v5618, %v5617
  %v5744 = vpack.c.b16 %v5620, %v5619
  %v5745 = vpack.c.b16 %v5622, %v5621
  %v5746 = vpack.c.b16 %v5624, %v5623
  %v5747 = vpack.c.b16 %v5626, %v5625
  %v5748 = vpack.c.b16 %v5628, %v5627
  %v5749 = vpack.c.b16 %v5630, %v5629
  %v5750 = vpack.c.b16 %v5632, %v5631
  %v5751 = vpack.c.b16 %v5634, %v5633
  %v5752 = vpack.c.b16 %v5636, %v5635
  %v5753 = vpack.c.b16 %v5638, %v5637
  %v5754 = vpack.c.b16 %v5640, %v5639
  %v5755 = vpack.c.b16 %v5642, %v5641
  %v5756 = vpack.c.b16 %v5644, %v5643
  %v5757 = vpack.c.b16 %v5646, %v5645
  %v5758 = vpack.c.b16 %v5648, %v5647
  %v5759 = vpack.c.b16 %v5650, %v5649
  %v5760 = vpack.c.b16 %v5652, %v5651
  %v5761 = vpack.c.b16 %v5654, %v5653
  %v5762 = vpack.c.b16 %v5656, %v5655
  %v5763 = vpack.c.b16 %v5658, %v5657
  %v5764 = vpack.c.b16 %v5660, %v5659
  %v5765 = vpack.c.b16 %v5662, %v5661
  %v5766 = vpack.c.b16 %v5664, %v5663
  %v5767 = vpack.c.b16 %v5666, %v5665
  %v5768 = vpack.c.b16 %v5668, %v5667
  %v5769 = vpack.c.b16 %v5670, %v5669
  %v5770 = vpack.c.b16 %v5672, %v5671
  %v5771 = vpack.c.b16 %v5674, %v5673
  %v5772 = vpack.c.b16 %v5676, %v5675
  %5869 = vmatpush.bf16.msra.mxu0 %v5684
  %5870 = vmatpush.bf16.msra.mxu0 %v5683
  %5871 = vmatpush.bf16.msra.mxu0 %v5682
  %5872 = vmatpush.bf16.msra.mxu0 %v5681
  %5873 = vmatpush.bf16.msra.mxu0 %v5680
  %5874 = vmatpush.bf16.msra.mxu0 %v5679
  %5875 = vmatpush.bf16.msra.mxu0 %v5678
  %5876 = vmatpush.bf16.msra.mxu0 %v5677
  %5877 = vmatmul.bf16.gmra.mxu0 %v5085
  %v5878 = vpop.f32.mrf.mxu0
  %v5879 = vadd.f32 %v5291, %v5878
  %v5880 = vpop.f32.mrf.mxu0
  %5881 = vdwg.mxu0
  %5882 = vmatpush.bf16.msra.mxu0 %v5692
  %5883 = vmatpush.bf16.msra.mxu0 %v5691
  %5884 = vmatpush.bf16.msra.mxu0 %v5690
  %5885 = vmatpush.bf16.msra.mxu0 %v5689
  %5886 = vmatpush.bf16.msra.mxu0 %v5688
  %5887 = vmatpush.bf16.msra.mxu0 %v5687
  %5888 = vmatpush.bf16.msra.mxu0 %v5686
  %5889 = vmatpush.bf16.msra.mxu0 %v5685
  %5890 = vmatmul.bf16.gmra.mxu0 %v5086
  %v5891 = vpop.f32.mrf.mxu0
  %v5892 = vadd.f32 %v5879, %v5891
  %v5893 = vpop.f32.mrf.mxu0
  %5894 = vdwg.mxu0
  %5895 = vmatpush.bf16.msra.mxu0 %v5700
  %5896 = vmatpush.bf16.msra.mxu0 %v5699
  %5897 = vmatpush.bf16.msra.mxu0 %v5698
  %5898 = vmatpush.bf16.msra.mxu0 %v5697
  %5899 = vmatpush.bf16.msra.mxu0 %v5696
  %5900 = vmatpush.bf16.msra.mxu0 %v5695
  %5901 = vmatpush.bf16.msra.mxu0 %v5694
  %5902 = vmatpush.bf16.msra.mxu0 %v5693
  %5903 = vmatmul.bf16.gmra.mxu0 %v5087
  %v5904 = vpop.f32.mrf.mxu0
  %v5905 = vadd.f32 %v5892, %v5904
  %v5906 = vpop.f32.mrf.mxu0
  %5907 = vdwg.mxu0
  %5908 = vmatpush.bf16.msra.mxu0 %v5708
  %5909 = vmatpush.bf16.msra.mxu0 %v5707
  %5910 = vmatpush.bf16.msra.mxu0 %v5706
  %5911 = vmatpush.bf16.msra.mxu0 %v5705
  %5912 = vmatpush.bf16.msra.mxu0 %v5704
  %5913 = vmatpush.bf16.msra.mxu0 %v5703
  %5914 = vmatpush.bf16.msra.mxu0 %v5702
  %5915 = vmatpush.bf16.msra.mxu0 %v5701
  %5916 = vmatmul.bf16.gmra.mxu0 %v5088
  %v5917 = vpop.f32.mrf.mxu0
  %v5918 = vadd.f32 %v5905, %v5917
  %v5919 = vpop.f32.mrf.mxu0
  %5920 = vdwg.mxu0
  %5921 = vmatpush.bf16.msra.mxu0 %v5716
  %5922 = vmatpush.bf16.msra.mxu0 %v5715
  %5923 = vmatpush.bf16.msra.mxu0 %v5714
  %5924 = vmatpush.bf16.msra.mxu0 %v5713
  %5925 = vmatpush.bf16.msra.mxu0 %v5712
  %5926 = vmatpush.bf16.msra.mxu0 %v5711
  %5927 = vmatpush.bf16.msra.mxu0 %v5710
  %5928 = vmatpush.bf16.msra.mxu0 %v5709
  %5929 = vmatmul.bf16.gmra.mxu0 %v5089
  %v5930 = vpop.f32.mrf.mxu0
  %v5931 = vadd.f32 %v5918, %v5930
  %v5932 = vpop.f32.mrf.mxu0
  %5933 = vdwg.mxu0
  %5934 = vmatpush.bf16.msra.mxu0 %v5724
  %5935 = vmatpush.bf16.msra.mxu0 %v5723
  %5936 = vmatpush.bf16.msra.mxu0 %v5722
  %5937 = vmatpush.bf16.msra.mxu0 %v5721
  %5938 = vmatpush.bf16.msra.mxu0 %v5720
  %5939 = vmatpush.bf16.msra.mxu0 %v5719
  %5940 = vmatpush.bf16.msra.mxu0 %v5718
  %5941 = vmatpush.bf16.msra.mxu0 %v5717
  %5942 = vmatmul.bf16.gmra.mxu0 %v5090
  %v5943 = vpop.f32.mrf.mxu0
  %v5944 = vadd.f32 %v5931, %v5943
  %v5945 = vpop.f32.mrf.mxu0
  %5946 = vdwg.mxu0
  %5947 = vmatpush.bf16.msra.mxu0 %v5732
  %5948 = vmatpush.bf16.msra.mxu0 %v5731
  %5949 = vmatpush.bf16.msra.mxu0 %v5730
  %5950 = vmatpush.bf16.msra.mxu0 %v5729
  %5951 = vmatpush.bf16.msra.mxu0 %v5728
  %5952 = vmatpush.bf16.msra.mxu0 %v5727
  %5953 = vmatpush.bf16.msra.mxu0 %v5726
  %5954 = vmatpush.bf16.msra.mxu0 %v5725
  %5955 = vmatmul.bf16.gmra.mxu0 %v5091
  %v5956 = vpop.f32.mrf.mxu0
  %v5957 = vadd.f32 %v5944, %v5956
  %v5958 = vpop.f32.mrf.mxu0
  %5959 = vdwg.mxu0
  %5960 = vmatpush.bf16.msra.mxu0 %v5740
  %5961 = vmatpush.bf16.msra.mxu0 %v5739
  %5962 = vmatpush.bf16.msra.mxu0 %v5738
  %5963 = vmatpush.bf16.msra.mxu0 %v5737
  %5964 = vmatpush.bf16.msra.mxu0 %v5736
  %5965 = vmatpush.bf16.msra.mxu0 %v5735
  %5966 = vmatpush.bf16.msra.mxu0 %v5734
  %5967 = vmatpush.bf16.msra.mxu0 %v5733
  %5968 = vmatmul.bf16.gmra.mxu0 %v5092
  %v5969 = vpop.f32.mrf.mxu0
  %v5970 = vadd.f32 %v5957, %v5969
  %v5971 = vpop.f32.mrf.mxu0
  %5972 = vdwg.mxu0
  %5973 = vmatpush.bf16.msra.mxu0 %v5748
  %5974 = vmatpush.bf16.msra.mxu0 %v5747
  %5975 = vmatpush.bf16.msra.mxu0 %v5746
  %5976 = vmatpush.bf16.msra.mxu0 %v5745
  %5977 = vmatpush.bf16.msra.mxu0 %v5744
  %5978 = vmatpush.bf16.msra.mxu0 %v5743
  %5979 = vmatpush.bf16.msra.mxu0 %v5742
  %5980 = vmatpush.bf16.msra.mxu0 %v5741
  %5981 = vmatmul.bf16.gmra.mxu0 %v5093
  %v5982 = vpop.f32.mrf.mxu0
  %v5983 = vadd.f32 %v5970, %v5982
  %v5984 = vpop.f32.mrf.mxu0
  %5985 = vdwg.mxu0
  %5986 = vmatpush.bf16.msra.mxu0 %v5756
  %5987 = vmatpush.bf16.msra.mxu0 %v5755
  %5988 = vmatpush.bf16.msra.mxu0 %v5754
  %5989 = vmatpush.bf16.msra.mxu0 %v5753
  %5990 = vmatpush.bf16.msra.mxu0 %v5752
  %5991 = vmatpush.bf16.msra.mxu0 %v5751
  %5992 = vmatpush.bf16.msra.mxu0 %v5750
  %5993 = vmatpush.bf16.msra.mxu0 %v5749
  %5994 = vmatmul.bf16.gmra.mxu0 %v5094
  %v5995 = vpop.f32.mrf.mxu0
  %v5996 = vadd.f32 %v5983, %v5995
  %v5997 = vpop.f32.mrf.mxu0
  %5998 = vdwg.mxu0
  %5999 = vmatpush.bf16.msra.mxu0 %v5764
  %6000 = vmatpush.bf16.msra.mxu0 %v5763
  %6001 = vmatpush.bf16.msra.mxu0 %v5762
  %6002 = vmatpush.bf16.msra.mxu0 %v5761
  %6003 = vmatpush.bf16.msra.mxu0 %v5760
  %6004 = vmatpush.bf16.msra.mxu0 %v5759
  %6005 = vmatpush.bf16.msra.mxu0 %v5758
  %6006 = vmatpush.bf16.msra.mxu0 %v5757
  %6007 = vmatmul.bf16.gmra.mxu0 %v5095
  %v6008 = vpop.f32.mrf.mxu0
  %v6009 = vadd.f32 %v5996, %v6008
  %v6010 = vpop.f32.mrf.mxu0
  %6011 = vdwg.mxu0
  %6012 = vmatpush.bf16.msra.mxu0 %v5772
  %6013 = vmatpush.bf16.msra.mxu0 %v5771
  %6014 = vmatpush.bf16.msra.mxu0 %v5770
  %6015 = vmatpush.bf16.msra.mxu0 %v5769
  %6016 = vmatpush.bf16.msra.mxu0 %v5768
  %6017 = vmatpush.bf16.msra.mxu0 %v5767
  %6018 = vmatpush.bf16.msra.mxu0 %v5766
  %6019 = vmatpush.bf16.msra.mxu0 %v5765
  %6020 = vmatmul.bf16.gmra.mxu0 %v5096
  %v6021 = vpop.f32.mrf.mxu0
  %v6022 = vadd.f32 %v6009, %v6021
  %v6023 = vpop.f32.mrf.mxu0
  %6024 = vdwg.mxu0
  %6025 = vst [vmem:[%s8] sm:$0xff] %v6022
  %v6026 = vmax.f32 %v37, 0.0
  %v6027 = vmax.f32 %v38, 0.0
  %v6028 = vmax.f32 %v39, 0.0
  %v6029 = vmax.f32 %v40, 0.0
  %v6030 = vmax.f32 %v41, 0.0
  %v6031 = vmax.f32 %v42, 0.0
  %v6032 = vld [vmem:[%s6] sm:$0xff]
  %v6033 = vld [vmem:[%s6 + $0x8] sm:$0xff]
  %v6034 = vld [vmem:[%s6 + $0x10] sm:$0xff]
  %v6035 = vld [vmem:[%s6 + $0x18] sm:$0xff]
  %v6036 = vld [vmem:[%s6 + $0x20] sm:$0xff]
  %v6037 = vld [vmem:[%s6 + $0x28] sm:$0xff]
  %v6038 = vld [vmem:[%s6 + $0x30] sm:$0xff]
  %v6039 = vld [vmem:[%s6 + $0x38] sm:$0xff]
  %v6040 = vld [vmem:[%s6 + $0x40] sm:$0xff]
  %v6041 = vld [vmem:[%s6 + $0x48] sm:$0xff]
  %v6042 = vld [vmem:[%s6 + $0x50] sm:$0xff]
  %v6043 = vld [vmem:[%s6 + $0x58] sm:$0xff]
  %v6044 = vld [vmem:[%s6 + $0x60] sm:$0xff]
  %v6045 = vld [vmem:[%s6 + $0x68] sm:$0xff]
  %v6046 = vld [vmem:[%s6 + $0x70] sm:$0xff]
  %v6047 = vld [vmem:[%s6 + $0x78] sm:$0xff]
  %v6048 = vld [vmem:[%s6 + $0x80] sm:$0xff]
  %v6049 = vld [vmem:[%s6 + $0x88] sm:$0xff]
  %v6050 = vld [vmem:[%s6 + $0x90] sm:$0xff]
  %v6051 = vld [vmem:[%s6 + $0x98] sm:$0xff]
  %v6052 = vld [vmem:[%s6 + $0xa0] sm:$0xff]
  %v6053 = vld [vmem:[%s6 + $0xa8] sm:$0xff]
  %v6054 = vld [vmem:[%s6 + $0xb0] sm:$0xff]
  %v6055 = vld [vmem:[%s6 + $0xb8] sm:$0xff]
  %v6056 = vld [vmem:[%s6 + $0xc0] sm:$0xff]
  %v6057 = vld [vmem:[%s6 + $0xc8] sm:$0xff]
  %v6058 = vld [vmem:[%s6 + $0xd0] sm:$0xff]
  %v6059 = vld [vmem:[%s6 + $0xd8] sm:$0xff]
  %v6060 = vld [vmem:[%s6 + $0xe0] sm:$0xff]
  %v6061 = vld [vmem:[%s6 + $0xe8] sm:$0xff]
  %v6062 = vld [vmem:[%s6 + $0xf0] sm:$0xff]
  %v6063 = vld [vmem:[%s6 + $0xf8] sm:$0xff]
  %v6064 = vld [vmem:[%s6 + $0x100] sm:$0xff]
  %v6065 = vld [vmem:[%s6 + $0x108] sm:$0xff]
  %v6066 = vld [vmem:[%s6 + $0x110] sm:$0xff]
  %v6067 = vld [vmem:[%s6 + $0x118] sm:$0xff]
  %v6068 = vld [vmem:[%s6 + $0x120] sm:$0xff]
  %v6069 = vld [vmem:[%s6 + $0x128] sm:$0xff]
  %v6070 = vld [vmem:[%s6 + $0x130] sm:$0xff]
  %v6071 = vld [vmem:[%s6 + $0x138] sm:$0xff]
  %v6072 = vld [vmem:[%s6 + $0x140] sm:$0xff]
  %v6073 = vld [vmem:[%s6 + $0x148] sm:$0xff]
  %v6074 = vld [vmem:[%s6 + $0x150] sm:$0xff]
  %v6075 = vld [vmem:[%s6 + $0x158] sm:$0xff]
  %v6076 = vld [vmem:[%s6 + $0x160] sm:$0xff]
  %v6077 = vld [vmem:[%s6 + $0x168] sm:$0xff]
  %v6078 = vld [vmem:[%s6 + $0x170] sm:$0xff]
  %v6079 = vld [vmem:[%s6 + $0x178] sm:$0xff]
  %v6080 = vld [vmem:[%s6 + $0x180] sm:$0xff]
  %v6081 = vld [vmem:[%s6 + $0x188] sm:$0xff]
  %v6082 = vld [vmem:[%s6 + $0x190] sm:$0xff]
  %v6083 = vld [vmem:[%s6 + $0x198] sm:$0xff]
  %v6084 = vld [vmem:[%s6 + $0x1a0] sm:$0xff]
  %v6085 = vld [vmem:[%s6 + $0x1a8] sm:$0xff]
  %v6086 = vld [vmem:[%s6 + $0x1b0] sm:$0xff]
  %v6087 = vld [vmem:[%s6 + $0x1b8] sm:$0xff]
  %v6088 = vld [vmem:[%s6 + $0x1c0] sm:$0xff]
  %v6089 = vld [vmem:[%s6 + $0x1c8] sm:$0xff]
  %v6090 = vld [vmem:[%s6 + $0x1d0] sm:$0xff]
  %v6091 = vld [vmem:[%s6 + $0x1d8] sm:$0xff]
  %v6092 = vld [vmem:[%s6 + $0x1e0] sm:$0xff]
  %v6093 = vld [vmem:[%s6 + $0x1e8] sm:$0xff]
  %v6094 = vld [vmem:[%s6 + $0x1f0] sm:$0xff]
  %v6095 = vld [vmem:[%s6 + $0x1f8] sm:$0xff]
  %v6096 = vld [vmem:[%s6 + $0x200] sm:$0xff]
  %v6097 = vld [vmem:[%s6 + $0x208] sm:$0xff]
  %v6098 = vld [vmem:[%s6 + $0x210] sm:$0xff]
  %v6099 = vld [vmem:[%s6 + $0x218] sm:$0xff]
  %v6100 = vld [vmem:[%s6 + $0x220] sm:$0xff]
  %v6101 = vld [vmem:[%s6 + $0x228] sm:$0xff]
  %v6102 = vld [vmem:[%s6 + $0x230] sm:$0xff]
  %v6103 = vld [vmem:[%s6 + $0x238] sm:$0xff]
  %v6104 = vld [vmem:[%s6 + $0x240] sm:$0xff]
  %v6105 = vld [vmem:[%s6 + $0x248] sm:$0xff]
  %v6106 = vld [vmem:[%s6 + $0x250] sm:$0xff]
  %v6107 = vld [vmem:[%s6 + $0x258] sm:$0xff]
  %v6108 = vld [vmem:[%s6 + $0x260] sm:$0xff]
  %v6109 = vld [vmem:[%s6 + $0x268] sm:$0xff]
  %v6110 = vld [vmem:[%s6 + $0x270] sm:$0xff]
  %v6111 = vld [vmem:[%s6 + $0x278] sm:$0xff]
  %v6112 = vld [vmem:[%s6 + $0x280] sm:$0xff]
  %v6113 = vld [vmem:[%s6 + $0x288] sm:$0xff]
  %v6114 = vld [vmem:[%s6 + $0x290] sm:$0xff]
  %v6115 = vld [vmem:[%s6 + $0x298] sm:$0xff]
  %v6116 = vld [vmem:[%s6 + $0x2a0] sm:$0xff]
  %v6117 = vld [vmem:[%s6 + $0x2a8] sm:$0xff]
  %v6118 = vld [vmem:[%s6 + $0x2b0] sm:$0xff]
  %v6119 = vld [vmem:[%s6 + $0x2b8] sm:$0xff]
  %v6120 = vld [vmem:[%s6 + $0x2c0] sm:$0xff]
  %v6121 = vld [vmem:[%s6 + $0x2c8] sm:$0xff]
  %v6122 = vld [vmem:[%s6 + $0x2d0] sm:$0xff]
  %v6123 = vld [vmem:[%s6 + $0x2d8] sm:$0xff]
  %v6124 = vld [vmem:[%s6 + $0x2e0] sm:$0xff]
  %v6125 = vld [vmem:[%s6 + $0x2e8] sm:$0xff]
  %v6126 = vld [vmem:[%s6 + $0x2f0] sm:$0xff]
  %v6127 = vld [vmem:[%s6 + $0x2f8] sm:$0xff]
  %v6128 = vld [vmem:[%s7] sm:$0x1]
  %v6130 = vperm.slane %v6128, 0
  %6132 = vmatpush.msra.mxu0 %v6047
  %6133 = vmatpush.msra.mxu0 %v6046
  %6134 = vmatpush.msra.mxu0 %v6045
  %6135 = vmatpush.msra.mxu0 %v6044
  %6136 = vmatpush.msra.mxu0 %v6043
  %6137 = vmatpush.msra.mxu0 %v6042
  %6138 = vmatpush.msra.mxu0 %v6041
  %6139 = vmatpush.msra.mxu0 %v6040
  %6140 = vmatpush.msra.mxu0 %v6039
  %6141 = vmatpush.msra.mxu0 %v6038
  %6142 = vmatpush.msra.mxu0 %v6037
  %6143 = vmatpush.msra.mxu0 %v6036
  %6144 = vmatpush.msra.mxu0 %v6035
  %6145 = vmatpush.msra.mxu0 %v6034
  %6146 = vmatpush.msra.mxu0 %v6033
  %6147 = vmatpush.msra.mxu0 %v6032
  %6148 = vmatmul.f32.gmra.mxu0 %v6026
  %v6149 = vpop.f32.mrf.mxu0
  %v6150 = vadd.f32 %v6130, %v6149
  %6151 = vdwg.mxu0
  %6152 = vmatpush.msra.mxu0 %v6063
  %6153 = vmatpush.msra.mxu0 %v6062
  %6154 = vmatpush.msra.mxu0 %v6061
  %6155 = vmatpush.msra.mxu0 %v6060
  %6156 = vmatpush.msra.mxu0 %v6059
  %6157 = vmatpush.msra.mxu0 %v6058
  %6158 = vmatpush.msra.mxu0 %v6057
  %6159 = vmatpush.msra.mxu0 %v6056
  %6160 = vmatpush.msra.mxu0 %v6055
  %6161 = vmatpush.msra.mxu0 %v6054
  %6162 = vmatpush.msra.mxu0 %v6053
  %6163 = vmatpush.msra.mxu0 %v6052
  %6164 = vmatpush.msra.mxu0 %v6051
  %6165 = vmatpush.msra.mxu0 %v6050
  %6166 = vmatpush.msra.mxu0 %v6049
  %6167 = vmatpush.msra.mxu0 %v6048
  %6168 = vmatmul.f32.gmra.mxu0 %v6027
  %v6169 = vpop.f32.mrf.mxu0
  %v6170 = vadd.f32 %v6150, %v6169
  %6171 = vdwg.mxu0
  %6172 = vmatpush.msra.mxu0 %v6079
  %6173 = vmatpush.msra.mxu0 %v6078
  %6174 = vmatpush.msra.mxu0 %v6077
  %6175 = vmatpush.msra.mxu0 %v6076
  %6176 = vmatpush.msra.mxu0 %v6075
  %6177 = vmatpush.msra.mxu0 %v6074
  %6178 = vmatpush.msra.mxu0 %v6073
  %6179 = vmatpush.msra.mxu0 %v6072
  %6180 = vmatpush.msra.mxu0 %v6071
  %6181 = vmatpush.msra.mxu0 %v6070
  %6182 = vmatpush.msra.mxu0 %v6069
  %6183 = vmatpush.msra.mxu0 %v6068
  %6184 = vmatpush.msra.mxu0 %v6067
  %6185 = vmatpush.msra.mxu0 %v6066
  %6186 = vmatpush.msra.mxu0 %v6065
  %6187 = vmatpush.msra.mxu0 %v6064
  %6188 = vmatmul.f32.gmra.mxu0 %v6028
  %v6189 = vpop.f32.mrf.mxu0
  %v6190 = vadd.f32 %v6170, %v6189
  %6191 = vdwg.mxu0
  %6192 = vmatpush.msra.mxu0 %v6095
  %6193 = vmatpush.msra.mxu0 %v6094
  %6194 = vmatpush.msra.mxu0 %v6093
  %6195 = vmatpush.msra.mxu0 %v6092
  %6196 = vmatpush.msra.mxu0 %v6091
  %6197 = vmatpush.msra.mxu0 %v6090
  %6198 = vmatpush.msra.mxu0 %v6089
  %6199 = vmatpush.msra.mxu0 %v6088
  %6200 = vmatpush.msra.mxu0 %v6087
  %6201 = vmatpush.msra.mxu0 %v6086
  %6202 = vmatpush.msra.mxu0 %v6085
  %6203 = vmatpush.msra.mxu0 %v6084
  %6204 = vmatpush.msra.mxu0 %v6083
  %6205 = vmatpush.msra.mxu0 %v6082
  %6206 = vmatpush.msra.mxu0 %v6081
  %6207 = vmatpush.msra.mxu0 %v6080
  %6208 = vmatmul.f32.gmra.mxu0 %v6029
  %v6209 = vpop.f32.mrf.mxu0
  %v6210 = vadd.f32 %v6190, %v6209
  %6211 = vdwg.mxu0
  %6212 = vmatpush.msra.mxu0 %v6111
  %6213 = vmatpush.msra.mxu0 %v6110
  %6214 = vmatpush.msra.mxu0 %v6109
  %6215 = vmatpush.msra.mxu0 %v6108
  %6216 = vmatpush.msra.mxu0 %v6107
  %6217 = vmatpush.msra.mxu0 %v6106
  %6218 = vmatpush.msra.mxu0 %v6105
  %6219 = vmatpush.msra.mxu0 %v6104
  %6220 = vmatpush.msra.mxu0 %v6103
  %6221 = vmatpush.msra.mxu0 %v6102
  %6222 = vmatpush.msra.mxu0 %v6101
  %6223 = vmatpush.msra.mxu0 %v6100
  %6224 = vmatpush.msra.mxu0 %v6099
  %6225 = vmatpush.msra.mxu0 %v6098
  %6226 = vmatpush.msra.mxu0 %v6097
  %6227 = vmatpush.msra.mxu0 %v6096
  %6228 = vmatmul.f32.gmra.mxu0 %v6030
  %v6229 = vpop.f32.mrf.mxu0
  %v6230 = vadd.f32 %v6210, %v6229
  %6231 = vdwg.mxu0
  %6232 = vmatpush.msra.mxu0 %v6127
  %6233 = vmatpush.msra.mxu0 %v6126
  %6234 = vmatpush.msra.mxu0 %v6125
  %6235 = vmatpush.msra.mxu0 %v6124
  %6236 = vmatpush.msra.mxu0 %v6123
  %6237 = vmatpush.msra.mxu0 %v6122
  %6238 = vmatpush.msra.mxu0 %v6121
  %6239 = vmatpush.msra.mxu0 %v6120
  %6240 = vmatpush.msra.mxu0 %v6119
  %6241 = vmatpush.msra.mxu0 %v6118
  %6242 = vmatpush.msra.mxu0 %v6117
  %6243 = vmatpush.msra.mxu0 %v6116
  %6244 = vmatpush.msra.mxu0 %v6115
  %6245 = vmatpush.msra.mxu0 %v6114
  %6246 = vmatpush.msra.mxu0 %v6113
  %6247 = vmatpush.msra.mxu0 %v6112
  %6248 = vmatmul.f32.gmra.mxu0 %v6031
  %v6249 = vpop.f32.mrf.mxu0
  %v6250 = vadd.f32 %v6230, %v6249
  %6251 = vdwg.mxu0
  %6252 = vst [vmem:[%s9] sm:$0xff] %v6250
  // Predicated region
  $region34: #{forward.1} parent=0 // pred_check
    _
  $region35: #{forward.1} parent=0 // pred_check_branch
    %6254 = sbr.rel (0) target = $region37
  $region36: #{forward.1} parent=0 // pred_region
    _
  $region37: #{forward.1} parent=0 // pred_fallthru
    _
  // Predicated region
  $region38: #{forward.1} parent=0 // pred_check
    _
  $region39: #{forward.1} parent=0 // pred_check_branch
    %6256 = sbr.rel (0) target = $region41
  $region40: #{forward.1} parent=0 // pred_region
    _
  $region41: #{forward.1} parent=0 // pred_fallthru
    _
  // Predicated region
  $region42: #{forward.1} parent=0 // pred_check
    _
  $region43: #{forward.1} parent=0 // pred_check_branch
    %6258 = sbr.rel (0) target = $region45
  $region44: #{forward.1} parent=0 // pred_region
    _
  $region45: #{forward.1} parent=0 // pred_fallthru
    _
  // Predicated region
  $region46: #{forward.1} parent=0 // pred_check
    _
  $region47: #{forward.1} parent=0 // pred_check_branch
    %6260 = sbr.rel (0) target = $region49
  $region48: #{forward.1} parent=0 // pred_region
    _
  $region49: #{forward.1} parent=0 // pred_fallthru
    _

</llo_original>
